<compile_context>
chip_gen: v6e
topology: v6e:2x2x1
jax: 0.10.0
libtpu: 0.0.40
codegen_flags: <defaults>
</compile_context>

<pallas_src>
import functools
import math

import jax
import jax.numpy as jnp
from jax import lax
from jax.experimental import pallas as pl
from jax.experimental.pallas import tpu as pltpu

# ---------------- config (small, consistent with the module) ----------------
SEQ_LEN = 128          # T
HIDDEN = 64            # config.hidden_size
NUM_HEADS = 2          # config.num_attention_heads
HEAD_DIM = HIDDEN // NUM_HEADS
EXPANSION_RATIO = 4.0
RMS_EPS = 1.1920929e-07  # torch F.rms_norm default eps (= float32 finfo eps)
NEG_BIG = -1e30          # additive causal-mask bias
NUM_ROW_BLOCKS = 2       # query-row split -> "parallel" grid axis (fills both v7x TCs)


def correction_fn(expansion_ratio: float, d_model: int) -> int:
    return int((expansion_ratio * d_model + 255) // 256 * 256)


MLP_HIDDEN = correction_fn(EXPANSION_RATIO, HIDDEN)  # 256


# ------------------------------- kernel -------------------------------------
def _block_kernel(num_heads,
                  lam_blk_ref, lam_attn_ref,                 # SMEM scalars (2,) each
                  xf_ref, x0f_ref, vi_ref,                   # full (T, D)
                  xr_ref, x0r_ref,                           # row block (tq, D)
                  cosf_ref, sinf_ref,                        # full (T, hd)
                  cosr_ref, sinr_ref,                        # row block (tq, hd)
                  bias_ref,                                  # (tq, T) additive causal bias
                  wq_ref, wkv_ref, wo_ref, wup_ref, wdn_ref, # bf16 weights
                  out_ref,                                   # (tq, D)
                  kv_ref, q_ref, o_ref):                     # VMEM scratch
    T, D = xf_ref.shape
    hd = D // num_heads
    scale = 1.0 / math.sqrt(hd)

    lb0 = lam_blk_ref[0]
    lb1 = lam_blk_ref[1]
    la0 = lam_attn_ref[0]
    la1 = lam_attn_ref[1]

    def rms_inv(v, extra=None):
        inv = lax.rsqrt(jnp.mean(v * v, axis=-1, keepdims=True) + RMS_EPS)
        return inv * extra if extra is not None else inv

    # --- K/V path: full sequence (x = lambdas[0]*x + lambdas[1]*x0, then norm) ---
    xf = lb0 * xf_ref[...] + lb1 * x0f_ref[...]
    xnf = xf * rms_inv(xf)
    # fused [k | k@rot | v] projection: bf16 in / f32 acc, lands in VMEM scratch
    kv_ref[...] = jnp.dot(xnf.astype(jnp.bfloat16), wkv_ref[...],
                          preferred_element_type=jnp.float32)

    # --- Q path: this program's query-row block ---
    xr = lb0 * xr_ref[...] + lb1 * x0r_ref[...]
    xnr = xr * rms_inv(xr)
    # fused [q | q@rot] projection (RoPE half-swap folded into weights in the wrapper)
    q_ref[...] = jnp.dot(xnr.astype(jnp.bfloat16), wq_ref[...],
                         preferred_element_type=jnp.float32)

    # TODO(synk): torch flex_attention takes an arbitrary block_mask (mask_mod); we
    # implement the standard causal mask here (precomputed additive bias).
    for h in range(num_heads):  # static unroll over heads
        lo = h * hd
        # RoPE as pure VPU math:  rope(rms(z)) == inv_rms * (z*cos + z_rot*sin)
        qh = q_ref[:, lo:lo + hd]
        q_rope = (qh * cosr_ref[...] +
                  q_ref[:, D + lo:D + lo + hd] * sinr_ref[...]) * rms_inv(qh, scale)
        kh = kv_ref[:, lo:lo + hd]
        k_rope = (kh * cosf_ref[...] +
                  kv_ref[:, D + lo:D + lo + hd] * sinf_ref[...]) * rms_inv(kh)
        vh = la0 * kv_ref[:, 2 * D + lo:2 * D + lo + hd] + la1 * vi_ref[:, lo:lo + hd]

        # scores: contract over head_dim of both operands (no explicit transpose)
        s = lax.dot_general(q_rope.astype(jnp.bfloat16), k_rope.astype(jnp.bfloat16),
                            (((1,), (1,)), ((), ())),
                            preferred_element_type=jnp.float32)
        s = s + bias_ref[...]
        m = jnp.max(s, axis=-1, keepdims=True)
        p = jnp.exp(s - m)
        denom = jnp.sum(p, axis=-1, keepdims=True)
        o = jnp.dot(p.astype(jnp.bfloat16), vh.astype(jnp.bfloat16),
                    preferred_element_type=jnp.float32)
        # per-head output stored into one (tq, D) buffer -> single fused o_proj below
        o_ref[:, lo:lo + hd] = o * pl.reciprocal(denom, approx=True)

    # single o_proj over all heads: (tq, D) @ (D, D)
    y = jnp.dot(o_ref[...].astype(jnp.bfloat16), wo_ref[...],
                preferred_element_type=jnp.float32)
    xa = (lb0 * xr_ref[...] + lb1 * x0r_ref[...]) + y   # recompute blend (cheap) + residual

    # --- MLP branch: down(relu(up(norm(x)))^2) ---
    xn2 = xa * rms_inv(xa)
    hmid = jnp.dot(xn2.astype(jnp.bfloat16), wup_ref[...],
                   preferred_element_type=jnp.float32)
    hb = jnp.maximum(hmid, 0.0).astype(jnp.bfloat16)   # relu + square in bf16 (pre-dot cast folded in)
    mlp_out = jnp.dot(hb * hb, wdn_ref[...],
                      preferred_element_type=jnp.float32)
    out_ref[...] = xa + mlp_out


# --------------------------- one-time preparation -----------------------------
def prepare_block(params, T):
    """Hoisted per-call glue: RoPE tables, causal bias, fused/bf16 weights."""
    D = HIDDEN
    hd = D // NUM_HEADS
    half = hd // 2

    # Rotary tables — full head-width, sin sign baked in.
    inv_freq = (1.0 / 10000.0) ** (jnp.arange(0, hd, 2, dtype=jnp.float32) / hd)
    t = jnp.arange(T, dtype=jnp.float32)
    freqs = jnp.outer(t, inv_freq)                       # (T, hd//2)
    cos = jnp.cos(freqs)
    sin = jnp.sin(freqs)
    cos_full = jnp.concatenate([cos, cos], axis=-1)      # (T, hd)  = [cos | cos]
    sin_signed = jnp.concatenate([sin, -sin], axis=-1)   # (T, hd)  = [sin | -sin]

    # Half-swap permutation per head, block-diagonal over heads (D, D):
    # (z @ rot_full)[:, h*hd + i] = z[:, h*hd + (i + half) % hd]
    rot = jnp.roll(jnp.eye(hd, dtype=jnp.float32), half, axis=0)
    rot_full = jnp.kron(jnp.eye(NUM_HEADS, dtype=jnp.float32), rot)

    # Additive causal bias (0 on/below diagonal, -1e30 above).
    row = jnp.arange(T, dtype=jnp.int32)[:, None]
    col = jnp.arange(T, dtype=jnp.int32)[None, :]
    bias = jnp.where(row >= col, 0.0, NEG_BIG).astype(jnp.float32)

    # Fused, pre-rotated, bf16 weights (bf16 of W@rot == permuted bf16(W): exact).
    wq = params["wq"]
    wk = params["wk"]
    w_q = jnp.concatenate([wq, wq @ rot_full], axis=1).astype(jnp.bfloat16)               # (D, 2D)
    w_kv = jnp.concatenate([wk, wk @ rot_full, params["wv"]], axis=1).astype(jnp.bfloat16)  # (D, 3D)

    return {
        "lam_block": params["lam_block"].astype(jnp.float32),
        "lam_attn": params["lam_attn"].astype(jnp.float32),
        "cos": cos_full, "sin": sin_signed, "bias": bias,
        "w_q": w_q, "w_kv": w_kv,
        "wo": params["wo"].astype(jnp.bfloat16),
        "w_up": params["w_up"].astype(jnp.bfloat16),
        "w_dn": params["w_down"].astype(jnp.bfloat16),
    }


# ------------------------------- wrapper -------------------------------------
@jax.jit
def block_forward(x, vi, x0, prep):
    """x, vi, x0: (1, T, D) float32.  prep: output of prepare_block.  Returns (1, T, D)."""
    B, T, D = x.shape
    assert B == 1, "Must use batch size = 1 (matches torch module)"
    hd = D // NUM_HEADS
    F = prep["w_up"].shape[1]
    assert T % NUM_ROW_BLOCKS == 0
    tq = T // NUM_ROW_BLOCKS

    smem = lambda: pl.BlockSpec((2,), lambda i: (0,),
                                memory_space=pltpu.MemorySpace.SMEM)
    full = lambda r, c: pl.BlockSpec((r, c), lambda i: (0, 0))
    rows = lambda r, c: pl.BlockSpec((r, c), lambda i: (i, 0))

    out = pl.pallas_call(
        functools.partial(_block_kernel, NUM_HEADS),
        out_shape=jax.ShapeDtypeStruct((T, D), jnp.float32),
        grid=(NUM_ROW_BLOCKS,),
        in_specs=[
            smem(), smem(),                       # lambdas (block / attn)
            full(T, D), full(T, D), full(T, D),   # x, x0, vi  (full seq, K/V path)
            rows(tq, D), rows(tq, D),             # x, x0      (row block, Q/residual path)
            full(T, hd), full(T, hd),             # cos, sin   (full, K rope)
            rows(tq, hd), rows(tq, hd),           # cos, sin   (row block, Q rope)
            rows(tq, T),                          # causal bias tile
            full(D, 2 * D), full(D, 3 * D),       # w_q|q_rot, w_k|k_rot|v  (bf16)
            full(D, D), full(D, F), full(F, D),   # wo, w_up, w_down        (bf16)
        ],
        out_specs=rows(tq, D),
        scratch_shapes=[
            pltpu.VMEM((T, 3 * D), jnp.float32),  # fused k|k_rot|v projection
            pltpu.VMEM((tq, 2 * D), jnp.float32), # fused q|q_rot projection
            pltpu.VMEM((tq, D), jnp.float32),     # packed per-head attention outputs
        ],
        compiler_params=pltpu.CompilerParams(dimension_semantics=("parallel",)),
    )(
        prep["lam_block"], prep["lam_attn"],
        x[0], x0[0], vi[0],
        x[0], x0[0],
        prep["cos"], prep["sin"],
        prep["cos"], prep["sin"],
        prep["bias"],
        prep["w_q"], prep["w_kv"],
        prep["wo"], prep["w_up"], prep["w_dn"],
    )
    return out[None]


# --------------------------- pure-JAX reference -------------------------------
def block_reference(x, vi, x0, params):
    T, D = x.shape[1], x.shape[2]
    hd = D // NUM_HEADS

    def rms(v):
        return v * lax.rsqrt(jnp.mean(v * v, axis=-1, keepdims=True) + RMS_EPS)

    lb = params["lam_block"]
    la = params["lam_attn"]
    xx = lb[0] * x[0] + lb[1] * x0[0]

    xn = rms(xx)
    q = xn @ params["wq"]
    k = xn @ params["wk"]
    v = xn @ params["wv"]
    v = la[0] * v + la[1] * vi[0]

    q = q.reshape(T, NUM_HEADS, hd)
    k = k.reshape(T, NUM_HEADS, hd)
    v = v.reshape(T, NUM_HEADS, hd)
    q, k = rms(q), rms(k)

    inv_freq = (1.0 / 10000.0) ** (jnp.arange(0, hd, 2, dtype=jnp.float32) / hd)
    freqs = jnp.outer(jnp.arange(T, dtype=jnp.float32), inv_freq)
    cos, sin = jnp.cos(freqs)[:, None, :], jnp.sin(freqs)[:, None, :]

    def rope(z):
        z1, z2 = z[..., : hd // 2], z[..., hd // 2:]
        return jnp.concatenate([z1 * cos + z2 * sin, -z1 * sin + z2 * cos], axis=-1)

    q, k = rope(q), rope(k)
    s = jnp.einsum("thd,shd->hts", q, k) / math.sqrt(hd)
    mask = jnp.tril(jnp.ones((T, T), bool))
    s = jnp.where(mask[None], s, -jnp.inf)
    p = jax.nn.softmax(s, axis=-1)
    y = jnp.einsum("hts,shd->thd", p, v).reshape(T, D)
    xx = xx + y @ params["wo"]

    xn2 = rms(xx)
    mlp = (jnp.maximum(xn2 @ params["w_up"], 0.0) ** 2) @ params["w_down"]
    return (xx + mlp)[None]


# --------------------------------- main ---------------------------------------
if __name__ == "__main__":
    key = jax.random.PRNGKey(0)
    ks = jax.random.split(key, 10)

    T, D, F = SEQ_LEN, HIDDEN, MLP_HIDDEN

    x = jax.random.normal(ks[0], (1, T, D), jnp.float32)
    vi = jax.random.normal(ks[1], (1, T, D), jnp.float32)
    x0 = jax.random.normal(ks[2], (1, T, D), jnp.float32)

    # Weights stored as [in, out] (pre-transposed relative to torch nn.Linear).
    # NOTE: the original module zero-initializes o_proj and mlp.down; we use small
    # random values so the full compute path is exercised (deterministic via PRNGKey).
    scale = 0.02
    params = {
        "wq": scale * jax.random.normal(ks[3], (D, D), jnp.float32),
        "wk": scale * jax.random.normal(ks[4], (D, D), jnp.float32),
        "wv": scale * jax.random.normal(ks[5], (D, D), jnp.float32),
        "wo": scale * jax.random.normal(ks[6], (D, D), jnp.float32),
        "w_up": scale * jax.random.normal(ks[7], (D, F), jnp.float32),
        "w_down": scale * jax.random.normal(ks[8], (F, D), jnp.float32),
        "lam_attn": jnp.array([0.5, 0.5], jnp.float32),   # SelfAttention.lambdas
        "lam_block": jnp.array([1.0, 0.0], jnp.float32),  # Block.lambdas
    }

    prep = prepare_block(params, T)         # one-time: tables, bias, fused bf16 weights
    out = block_forward(x, vi, x0, prep)
    out = jax.block_until_ready(out)

    ref = block_reference(x, vi, x0, params)
    assert out.shape == (1, T, D)
    assert bool(jnp.all(jnp.isfinite(out)))
    assert bool(jnp.allclose(out, ref, rtol=5e-2, atol=5e-2))

    print("KERNEL_OK")
</pallas_src>

<mosaic_0001>
module attributes {stable_mosaic.version = 11 : i64} {
  func.func @_block_kernel(%arg0: i32, %arg1: memref<2xf32, #tpu.memory_space<smem>>, %arg2: memref<2xf32, #tpu.memory_space<smem>>, %arg3: memref<128x64xf32, #tpu.memory_space<vmem>>, %arg4: memref<128x64xf32, #tpu.memory_space<vmem>>, %arg5: memref<128x64xf32, #tpu.memory_space<vmem>>, %arg6: memref<64x64xf32, #tpu.memory_space<vmem>>, %arg7: memref<64x64xf32, #tpu.memory_space<vmem>>, %arg8: memref<128x32xf32, #tpu.memory_space<vmem>>, %arg9: memref<128x32xf32, #tpu.memory_space<vmem>>, %arg10: memref<64x32xf32, #tpu.memory_space<vmem>>, %arg11: memref<64x32xf32, #tpu.memory_space<vmem>>, %arg12: memref<64x128xf32, #tpu.memory_space<vmem>>, %arg13: memref<64x128xbf16, #tpu.memory_space<vmem>>, %arg14: memref<64x192xbf16, #tpu.memory_space<vmem>>, %arg15: memref<64x64xbf16, #tpu.memory_space<vmem>>, %arg16: memref<64x256xbf16, #tpu.memory_space<vmem>>, %arg17: memref<256x64xbf16, #tpu.memory_space<vmem>>, %arg18: memref<64x64xf32, #tpu.memory_space<vmem>>, %arg19: memref<128x192xf32, #tpu.memory_space<vmem>>, %arg20: memref<64x128xf32, #tpu.memory_space<vmem>>, %arg21: memref<64x64xf32, #tpu.memory_space<vmem>>) attributes {dimension_semantics = [#tpu.dimension_semantics<parallel>], iteration_bounds = array<i64: 2>, scalar_prefetch = 0 : i64, scratch_operands = 3 : i64, tpu.core_type = #tpu.core_type<tc>, window_params = [{transform_indices = @transform_0, window_bounds = array<i64: 2>}, {transform_indices = @transform_1, window_bounds = array<i64: 2>}, {pipeline_mode = #tpu.pipeline_mode<synchronous>, transform_indices = @transform_2, window_bounds = array<i64: 128, 64>}, {pipeline_mode = #tpu.pipeline_mode<synchronous>, transform_indices = @transform_3, window_bounds = array<i64: 128, 64>}, {pipeline_mode = #tpu.pipeline_mode<synchronous>, transform_indices = @transform_4, window_bounds = array<i64: 128, 64>}, {transform_indices = @transform_5, window_bounds = array<i64: 64, 64>}, {transform_indices = @transform_6, window_bounds = array<i64: 64, 64>}, {pipeline_mode = #tpu.pipeline_mode<synchronous>, transform_indices = @transform_7, window_bounds = array<i64: 128, 32>}, {pipeline_mode = #tpu.pipeline_mode<synchronous>, transform_indices = @transform_8, window_bounds = array<i64: 128, 32>}, {transform_indices = @transform_9, window_bounds = array<i64: 64, 32>}, {transform_indices = @transform_10, window_bounds = array<i64: 64, 32>}, {transform_indices = @transform_11, window_bounds = array<i64: 64, 128>}, {pipeline_mode = #tpu.pipeline_mode<synchronous>, transform_indices = @transform_12, window_bounds = array<i64: 64, 128>}, {pipeline_mode = #tpu.pipeline_mode<synchronous>, transform_indices = @transform_13, window_bounds = array<i64: 64, 192>}, {pipeline_mode = #tpu.pipeline_mode<synchronous>, transform_indices = @transform_14, window_bounds = array<i64: 64, 64>}, {pipeline_mode = #tpu.pipeline_mode<synchronous>, transform_indices = @transform_15, window_bounds = array<i64: 64, 256>}, {pipeline_mode = #tpu.pipeline_mode<synchronous>, transform_indices = @transform_16, window_bounds = array<i64: 256, 64>}, {transform_indices = @transform_17, window_bounds = array<i64: 64, 64>}]} {
    %c0 = arith.constant 0 : index
    %0 = memref.load %arg1[%c0] : memref<2xf32, #tpu.memory_space<smem>>
    %c1 = arith.constant 1 : index
    %1 = memref.load %arg1[%c1] : memref<2xf32, #tpu.memory_space<smem>>
    %c0_0 = arith.constant 0 : index
    %2 = memref.load %arg2[%c0_0] : memref<2xf32, #tpu.memory_space<smem>>
    %c1_1 = arith.constant 1 : index
    %3 = memref.load %arg2[%c1_1] : memref<2xf32, #tpu.memory_space<smem>>
    %c0_2 = arith.constant 0 : index
    %c0_3 = arith.constant 0 : index
    %4 = vector.load %arg3[%c0_2, %c0_3] : memref<128x64xf32, #tpu.memory_space<vmem>>, vector<128x64xf32>
    %5 = vector.broadcast %0 : f32 to vector<128x64xf32>
    %6 = arith.mulf %5, %4 : vector<128x64xf32>
    %c0_4 = arith.constant 0 : index
    %c0_5 = arith.constant 0 : index
    %7 = vector.load %arg4[%c0_4, %c0_5] : memref<128x64xf32, #tpu.memory_space<vmem>>, vector<128x64xf32>
    %8 = vector.broadcast %1 : f32 to vector<128x64xf32>
    %9 = arith.mulf %8, %7 : vector<128x64xf32>
    %10 = arith.addf %6, %9 : vector<128x64xf32>
    %11 = arith.mulf %10, %10 : vector<128x64xf32>
    %cst = arith.constant dense<0.000000e+00> : vector<128xf32>
    %12 = vector.multi_reduction <add>, %11, %cst [1] : vector<128x64xf32> to vector<128xf32>
    %13 = vector.shape_cast %12 : vector<128xf32> to vector<128x1xf32>
    %cst_6 = arith.constant 6.400000e+01 : f32
    %14 = vector.broadcast %cst_6 : f32 to vector<128x1xf32>
    %15 = arith.divf %13, %14 : vector<128x1xf32>
    %cst_7 = arith.constant 1.1920929E-7 : f32
    %16 = vector.broadcast %cst_7 : f32 to vector<128x1xf32>
    %17 = arith.addf %15, %16 : vector<128x1xf32>
    %18 = math.rsqrt %17 : vector<128x1xf32>
    %19 = vector.broadcast %18 : vector<128x1xf32> to vector<128x64xf32>
    %20 = arith.mulf %10, %19 : vector<128x64xf32>
    %21 = arith.truncf %20 : vector<128x64xf32> to vector<128x64xbf16>
    %c0_8 = arith.constant 0 : index
    %c0_9 = arith.constant 0 : index
    %22 = vector.load %arg14[%c0_8, %c0_9] : memref<64x192xbf16, #tpu.memory_space<vmem>>, vector<64x192xbf16>
    %cst_10 = arith.constant dense<0.000000e+00> : vector<128x192xf32>
    %23 = tpu.matmul %21, %22, %cst_10 {dimension_numbers = #tpu.dot_dimension_numbers<[1], [0], [0], [1], [0, 0, 1, 1], [], []>} : vector<128x64xbf16>, vector<64x192xbf16>, vector<128x192xf32> -> vector<128x192xf32>
    %c0_11 = arith.constant 0 : index
    %c0_12 = arith.constant 0 : index
    %24 = vector.load %arg19[%c0_11, %c0_12] : memref<128x192xf32, #tpu.memory_space<vmem>>, vector<128x192xf32>
    tpu.vector_store %arg19[%c0_11, %c0_12], %23 {strides = array<i32>} : memref<128x192xf32, #tpu.memory_space<vmem>>, vector<128x192xf32>,
    %c0_13 = arith.constant 0 : index
    %c0_14 = arith.constant 0 : index
    %25 = vector.load %arg6[%c0_13, %c0_14] : memref<64x64xf32, #tpu.memory_space<vmem>>, vector<64x64xf32>
    %26 = vector.broadcast %0 : f32 to vector<64x64xf32>
    %27 = arith.mulf %26, %25 : vector<64x64xf32>
    %c0_15 = arith.constant 0 : index
    %c0_16 = arith.constant 0 : index
    %28 = vector.load %arg7[%c0_15, %c0_16] : memref<64x64xf32, #tpu.memory_space<vmem>>, vector<64x64xf32>
    %29 = vector.broadcast %1 : f32 to vector<64x64xf32>
    %30 = arith.mulf %29, %28 : vector<64x64xf32>
    %31 = arith.addf %27, %30 : vector<64x64xf32>
    %32 = arith.mulf %31, %31 : vector<64x64xf32>
    %cst_17 = arith.constant dense<0.000000e+00> : vector<64xf32>
    %33 = vector.multi_reduction <add>, %32, %cst_17 [1] : vector<64x64xf32> to vector<64xf32>
    %34 = vector.shape_cast %33 : vector<64xf32> to vector<64x1xf32>
    %cst_18 = arith.constant 6.400000e+01 : f32
    %35 = vector.broadcast %cst_18 : f32 to vector<64x1xf32>
    %36 = arith.divf %34, %35 : vector<64x1xf32>
    %cst_19 = arith.constant 1.1920929E-7 : f32
    %37 = vector.broadcast %cst_19 : f32 to vector<64x1xf32>
    %38 = arith.addf %36, %37 : vector<64x1xf32>
    %39 = math.rsqrt %38 : vector<64x1xf32>
    %40 = vector.broadcast %39 : vector<64x1xf32> to vector<64x64xf32>
    %41 = arith.mulf %31, %40 : vector<64x64xf32>
    %42 = arith.truncf %41 : vector<64x64xf32> to vector<64x64xbf16>
    %c0_20 = arith.constant 0 : index
    %c0_21 = arith.constant 0 : index
    %43 = vector.load %arg13[%c0_20, %c0_21] : memref<64x128xbf16, #tpu.memory_space<vmem>>, vector<64x128xbf16>
    %cst_22 = arith.constant dense<0.000000e+00> : vector<64x128xf32>
    %44 = tpu.matmul %42, %43, %cst_22 {dimension_numbers = #tpu.dot_dimension_numbers<[1], [0], [0], [1], [0, 0, 1, 1], [], []>} : vector<64x64xbf16>, vector<64x128xbf16>, vector<64x128xf32> -> vector<64x128xf32>
    %c0_23 = arith.constant 0 : index
    %c0_24 = arith.constant 0 : index
    %45 = vector.load %arg20[%c0_23, %c0_24] : memref<64x128xf32, #tpu.memory_space<vmem>>, vector<64x128xf32>
    tpu.vector_store %arg20[%c0_23, %c0_24], %44 {strides = array<i32>} : memref<64x128xf32, #tpu.memory_space<vmem>>, vector<64x128xf32>,
    %c0_25 = arith.constant 0 : index
    %c0_26 = arith.constant 0 : index
    %46 = vector.load %arg20[%c0_25, %c0_26] : memref<64x128xf32, #tpu.memory_space<vmem>>, vector<64x32xf32>
    %c0_27 = arith.constant 0 : index
    %c0_28 = arith.constant 0 : index
    %47 = vector.load %arg10[%c0_27, %c0_28] : memref<64x32xf32, #tpu.memory_space<vmem>>, vector<64x32xf32>
    %48 = arith.mulf %46, %47 : vector<64x32xf32>
    %c0_29 = arith.constant 0 : index
    %c64 = arith.constant 64 : index
    %49 = vector.load %arg20[%c0_29, %c64] : memref<64x128xf32, #tpu.memory_space<vmem>>, vector<64x32xf32>
    %c0_30 = arith.constant 0 : index
    %c0_31 = arith.constant 0 : index
    %50 = vector.load %arg11[%c0_30, %c0_31] : memref<64x32xf32, #tpu.memory_space<vmem>>, vector<64x32xf32>
    %51 = arith.mulf %49, %50 : vector<64x32xf32>
    %52 = arith.addf %48, %51 : vector<64x32xf32>
    %53 = arith.mulf %46, %46 : vector<64x32xf32>
    %cst_32 = arith.constant dense<0.000000e+00> : vector<64xf32>
    %54 = vector.multi_reduction <add>, %53, %cst_32 [1] : vector<64x32xf32> to vector<64xf32>
    %55 = vector.shape_cast %54 : vector<64xf32> to vector<64x1xf32>
    %cst_33 = arith.constant 3.200000e+01 : f32
    %56 = vector.broadcast %cst_33 : f32 to vector<64x1xf32>
    %57 = arith.divf %55, %56 : vector<64x1xf32>
    %cst_34 = arith.constant 1.1920929E-7 : f32
    %58 = vector.broadcast %cst_34 : f32 to vector<64x1xf32>
    %59 = arith.addf %57, %58 : vector<64x1xf32>
    %60 = math.rsqrt %59 : vector<64x1xf32>
    %cst_35 = arith.constant 0.176776692 : f32
    %61 = vector.broadcast %cst_35 : f32 to vector<64x1xf32>
    %62 = arith.mulf %60, %61 : vector<64x1xf32>
    %63 = vector.broadcast %62 : vector<64x1xf32> to vector<64x32xf32>
    %64 = arith.mulf %52, %63 : vector<64x32xf32>
    %c0_36 = arith.constant 0 : index
    %c0_37 = arith.constant 0 : index
    %65 = vector.load %arg19[%c0_36, %c0_37] : memref<128x192xf32, #tpu.memory_space<vmem>>, vector<128x32xf32>
    %c0_38 = arith.constant 0 : index
    %c0_39 = arith.constant 0 : index
    %66 = vector.load %arg8[%c0_38, %c0_39] : memref<128x32xf32, #tpu.memory_space<vmem>>, vector<128x32xf32>
    %67 = arith.mulf %65, %66 : vector<128x32xf32>
    %c0_40 = arith.constant 0 : index
    %c64_41 = arith.constant 64 : index
    %68 = vector.load %arg19[%c0_40, %c64_41] : memref<128x192xf32, #tpu.memory_space<vmem>>, vector<128x32xf32>
    %c0_42 = arith.constant 0 : index
    %c0_43 = arith.constant 0 : index
    %69 = vector.load %arg9[%c0_42, %c0_43] : memref<128x32xf32, #tpu.memory_space<vmem>>, vector<128x32xf32>
    %70 = arith.mulf %68, %69 : vector<128x32xf32>
    %71 = arith.addf %67, %70 : vector<128x32xf32>
    %72 = arith.mulf %65, %65 : vector<128x32xf32>
    %cst_44 = arith.constant dense<0.000000e+00> : vector<128xf32>
    %73 = vector.multi_reduction <add>, %72, %cst_44 [1] : vector<128x32xf32> to vector<128xf32>
    %74 = vector.shape_cast %73 : vector<128xf32> to vector<128x1xf32>
    %cst_45 = arith.constant 3.200000e+01 : f32
    %75 = vector.broadcast %cst_45 : f32 to vector<128x1xf32>
    %76 = arith.divf %74, %75 : vector<128x1xf32>
    %cst_46 = arith.constant 1.1920929E-7 : f32
    %77 = vector.broadcast %cst_46 : f32 to vector<128x1xf32>
    %78 = arith.addf %76, %77 : vector<128x1xf32>
    %79 = math.rsqrt %78 : vector<128x1xf32>
    %80 = vector.broadcast %79 : vector<128x1xf32> to vector<128x32xf32>
    %81 = arith.mulf %71, %80 : vector<128x32xf32>
    %c0_47 = arith.constant 0 : index
    %c128 = arith.constant 128 : index
    %82 = vector.load %arg19[%c0_47, %c128] : memref<128x192xf32, #tpu.memory_space<vmem>>, vector<128x32xf32>
    %83 = vector.broadcast %2 : f32 to vector<128x32xf32>
    %84 = arith.mulf %83, %82 : vector<128x32xf32>
    %c0_48 = arith.constant 0 : index
    %c0_49 = arith.constant 0 : index
    %85 = vector.load %arg5[%c0_48, %c0_49] : memref<128x64xf32, #tpu.memory_space<vmem>>, vector<128x32xf32>
    %86 = vector.broadcast %3 : f32 to vector<128x32xf32>
    %87 = arith.mulf %86, %85 : vector<128x32xf32>
    %88 = arith.addf %84, %87 : vector<128x32xf32>
    %89 = arith.truncf %64 : vector<64x32xf32> to vector<64x32xbf16>
    %90 = arith.truncf %81 : vector<128x32xf32> to vector<128x32xbf16>
    %cst_50 = arith.constant dense<0.000000e+00> : vector<64x128xf32>
    %91 = tpu.matmul %89, %90, %cst_50 {dimension_numbers = #tpu.dot_dimension_numbers<[1], [1], [0], [0], [0, 0, 1, 0], [], []>} : vector<64x32xbf16>, vector<128x32xbf16>, vector<64x128xf32> -> vector<64x128xf32>
    %c0_51 = arith.constant 0 : index
    %c0_52 = arith.constant 0 : index
    %92 = vector.load %arg12[%c0_51, %c0_52] : memref<64x128xf32, #tpu.memory_space<vmem>>, vector<64x128xf32>
    %93 = arith.addf %91, %92 : vector<64x128xf32>
    %cst_53 = arith.constant dense<0xFF800000> : vector<64xf32>
    %94 = vector.multi_reduction <maximumf>, %93, %cst_53 [1] : vector<64x128xf32> to vector<64xf32>
    %95 = vector.shape_cast %94 : vector<64xf32> to vector<64x1xf32>
    %96 = vector.broadcast %95 : vector<64x1xf32> to vector<64x128xf32>
    %97 = arith.subf %93, %96 : vector<64x128xf32>
    %98 = math.exp %97 : vector<64x128xf32>
    %cst_54 = arith.constant dense<0.000000e+00> : vector<64xf32>
    %99 = vector.multi_reduction <add>, %98, %cst_54 [1] : vector<64x128xf32> to vector<64xf32>
    %100 = vector.shape_cast %99 : vector<64xf32> to vector<64x1xf32>
    %101 = arith.truncf %98 : vector<64x128xf32> to vector<64x128xbf16>
    %102 = arith.truncf %88 : vector<128x32xf32> to vector<128x32xbf16>
    %cst_55 = arith.constant dense<0.000000e+00> : vector<64x32xf32>
    %103 = tpu.matmul %101, %102, %cst_55 {dimension_numbers = #tpu.dot_dimension_numbers<[1], [0], [0], [1], [0, 0, 1, 1], [], []>} : vector<64x128xbf16>, vector<128x32xbf16>, vector<64x32xf32> -> vector<64x32xf32>
    %104 = tpu.reciprocal %100 {approx = true} : vector<64x1xf32> -> vector<64x1xf32>
    %105 = vector.broadcast %104 : vector<64x1xf32> to vector<64x32xf32>
    %106 = arith.mulf %103, %105 : vector<64x32xf32>
    %c0_56 = arith.constant 0 : index
    %c0_57 = arith.constant 0 : index
    %107 = vector.load %arg21[%c0_56, %c0_57] : memref<64x64xf32, #tpu.memory_space<vmem>>, vector<64x32xf32>
    tpu.vector_store %arg21[%c0_56, %c0_57], %106 {strides = array<i32>} : memref<64x64xf32, #tpu.memory_space<vmem>>, vector<64x32xf32>,
    %c0_58 = arith.constant 0 : index
    %c32 = arith.constant 32 : index
    %108 = vector.load %arg20[%c0_58, %c32] : memref<64x128xf32, #tpu.memory_space<vmem>>, vector<64x32xf32>
    %c0_59 = arith.constant 0 : index
    %c0_60 = arith.constant 0 : index
    %109 = vector.load %arg10[%c0_59, %c0_60] : memref<64x32xf32, #tpu.memory_space<vmem>>, vector<64x32xf32>
    %110 = arith.mulf %108, %109 : vector<64x32xf32>
    %c0_61 = arith.constant 0 : index
    %c96 = arith.constant 96 : index
    %111 = vector.load %arg20[%c0_61, %c96] : memref<64x128xf32, #tpu.memory_space<vmem>>, vector<64x32xf32>
    %c0_62 = arith.constant 0 : index
    %c0_63 = arith.constant 0 : index
    %112 = vector.load %arg11[%c0_62, %c0_63] : memref<64x32xf32, #tpu.memory_space<vmem>>, vector<64x32xf32>
    %113 = arith.mulf %111, %112 : vector<64x32xf32>
    %114 = arith.addf %110, %113 : vector<64x32xf32>
    %115 = arith.mulf %108, %108 : vector<64x32xf32>
    %cst_64 = arith.constant dense<0.000000e+00> : vector<64xf32>
    %116 = vector.multi_reduction <add>, %115, %cst_64 [1] : vector<64x32xf32> to vector<64xf32>
    %117 = vector.shape_cast %116 : vector<64xf32> to vector<64x1xf32>
    %cst_65 = arith.constant 3.200000e+01 : f32
    %118 = vector.broadcast %cst_65 : f32 to vector<64x1xf32>
    %119 = arith.divf %117, %118 : vector<64x1xf32>
    %cst_66 = arith.constant 1.1920929E-7 : f32
    %120 = vector.broadcast %cst_66 : f32 to vector<64x1xf32>
    %121 = arith.addf %119, %120 : vector<64x1xf32>
    %122 = math.rsqrt %121 : vector<64x1xf32>
    %cst_67 = arith.constant 0.176776692 : f32
    %123 = vector.broadcast %cst_67 : f32 to vector<64x1xf32>
    %124 = arith.mulf %122, %123 : vector<64x1xf32>
    %125 = vector.broadcast %124 : vector<64x1xf32> to vector<64x32xf32>
    %126 = arith.mulf %114, %125 : vector<64x32xf32>
    %c0_68 = arith.constant 0 : index
    %c32_69 = arith.constant 32 : index
    %127 = vector.load %arg19[%c0_68, %c32_69] : memref<128x192xf32, #tpu.memory_space<vmem>>, vector<128x32xf32>
    %c0_70 = arith.constant 0 : index
    %c0_71 = arith.constant 0 : index
    %128 = vector.load %arg8[%c0_70, %c0_71] : memref<128x32xf32, #tpu.memory_space<vmem>>, vector<128x32xf32>
    %129 = arith.mulf %127, %128 : vector<128x32xf32>
    %c0_72 = arith.constant 0 : index
    %c96_73 = arith.constant 96 : index
    %130 = vector.load %arg19[%c0_72, %c96_73] : memref<128x192xf32, #tpu.memory_space<vmem>>, vector<128x32xf32>
    %c0_74 = arith.constant 0 : index
    %c0_75 = arith.constant 0 : index
    %131 = vector.load %arg9[%c0_74, %c0_75] : memref<128x32xf32, #tpu.memory_space<vmem>>, vector<128x32xf32>
    %132 = arith.mulf %130, %131 : vector<128x32xf32>
    %133 = arith.addf %129, %132 : vector<128x32xf32>
    %134 = arith.mulf %127, %127 : vector<128x32xf32>
    %cst_76 = arith.constant dense<0.000000e+00> : vector<128xf32>
    %135 = vector.multi_reduction <add>, %134, %cst_76 [1] : vector<128x32xf32> to vector<128xf32>
    %136 = vector.shape_cast %135 : vector<128xf32> to vector<128x1xf32>
    %cst_77 = arith.constant 3.200000e+01 : f32
    %137 = vector.broadcast %cst_77 : f32 to vector<128x1xf32>
    %138 = arith.divf %136, %137 : vector<128x1xf32>
    %cst_78 = arith.constant 1.1920929E-7 : f32
    %139 = vector.broadcast %cst_78 : f32 to vector<128x1xf32>
    %140 = arith.addf %138, %139 : vector<128x1xf32>
    %141 = math.rsqrt %140 : vector<128x1xf32>
    %142 = vector.broadcast %141 : vector<128x1xf32> to vector<128x32xf32>
    %143 = arith.mulf %133, %142 : vector<128x32xf32>
    %c0_79 = arith.constant 0 : index
    %c160 = arith.constant 160 : index
    %144 = vector.load %arg19[%c0_79, %c160] : memref<128x192xf32, #tpu.memory_space<vmem>>, vector<128x32xf32>
    %145 = vector.broadcast %2 : f32 to vector<128x32xf32>
    %146 = arith.mulf %145, %144 : vector<128x32xf32>
    %c0_80 = arith.constant 0 : index
    %c32_81 = arith.constant 32 : index
    %147 = vector.load %arg5[%c0_80, %c32_81] : memref<128x64xf32, #tpu.memory_space<vmem>>, vector<128x32xf32>
    %148 = vector.broadcast %3 : f32 to vector<128x32xf32>
    %149 = arith.mulf %148, %147 : vector<128x32xf32>
    %150 = arith.addf %146, %149 : vector<128x32xf32>
    %151 = arith.truncf %126 : vector<64x32xf32> to vector<64x32xbf16>
    %152 = arith.truncf %143 : vector<128x32xf32> to vector<128x32xbf16>
    %cst_82 = arith.constant dense<0.000000e+00> : vector<64x128xf32>
    %153 = tpu.matmul %151, %152, %cst_82 {dimension_numbers = #tpu.dot_dimension_numbers<[1], [1], [0], [0], [0, 0, 1, 0], [], []>} : vector<64x32xbf16>, vector<128x32xbf16>, vector<64x128xf32> -> vector<64x128xf32>
    %c0_83 = arith.constant 0 : index
    %c0_84 = arith.constant 0 : index
    %154 = vector.load %arg12[%c0_83, %c0_84] : memref<64x128xf32, #tpu.memory_space<vmem>>, vector<64x128xf32>
    %155 = arith.addf %153, %154 : vector<64x128xf32>
    %cst_85 = arith.constant dense<0xFF800000> : vector<64xf32>
    %156 = vector.multi_reduction <maximumf>, %155, %cst_85 [1] : vector<64x128xf32> to vector<64xf32>
    %157 = vector.shape_cast %156 : vector<64xf32> to vector<64x1xf32>
    %158 = vector.broadcast %157 : vector<64x1xf32> to vector<64x128xf32>
    %159 = arith.subf %155, %158 : vector<64x128xf32>
    %160 = math.exp %159 : vector<64x128xf32>
    %cst_86 = arith.constant dense<0.000000e+00> : vector<64xf32>
    %161 = vector.multi_reduction <add>, %160, %cst_86 [1] : vector<64x128xf32> to vector<64xf32>
    %162 = vector.shape_cast %161 : vector<64xf32> to vector<64x1xf32>
    %163 = arith.truncf %160 : vector<64x128xf32> to vector<64x128xbf16>
    %164 = arith.truncf %150 : vector<128x32xf32> to vector<128x32xbf16>
    %cst_87 = arith.constant dense<0.000000e+00> : vector<64x32xf32>
    %165 = tpu.matmul %163, %164, %cst_87 {dimension_numbers = #tpu.dot_dimension_numbers<[1], [0], [0], [1], [0, 0, 1, 1], [], []>} : vector<64x128xbf16>, vector<128x32xbf16>, vector<64x32xf32> -> vector<64x32xf32>
    %166 = tpu.reciprocal %162 {approx = true} : vector<64x1xf32> -> vector<64x1xf32>
    %167 = vector.broadcast %166 : vector<64x1xf32> to vector<64x32xf32>
    %168 = arith.mulf %165, %167 : vector<64x32xf32>
    %c0_88 = arith.constant 0 : index
    %c32_89 = arith.constant 32 : index
    %169 = vector.load %arg21[%c0_88, %c32_89] : memref<64x64xf32, #tpu.memory_space<vmem>>, vector<64x32xf32>
    tpu.vector_store %arg21[%c0_88, %c32_89], %168 {strides = array<i32>} : memref<64x64xf32, #tpu.memory_space<vmem>>, vector<64x32xf32>,
    %c0_90 = arith.constant 0 : index
    %c0_91 = arith.constant 0 : index
    %170 = vector.load %arg21[%c0_90, %c0_91] : memref<64x64xf32, #tpu.memory_space<vmem>>, vector<64x64xf32>
    %171 = arith.truncf %170 : vector<64x64xf32> to vector<64x64xbf16>
    %c0_92 = arith.constant 0 : index
    %c0_93 = arith.constant 0 : index
    %172 = vector.load %arg15[%c0_92, %c0_93] : memref<64x64xbf16, #tpu.memory_space<vmem>>, vector<64x64xbf16>
    %cst_94 = arith.constant dense<0.000000e+00> : vector<64x64xf32>
    %173 = tpu.matmul %171, %172, %cst_94 {dimension_numbers = #tpu.dot_dimension_numbers<[1], [0], [0], [1], [0, 0, 1, 1], [], []>} : vector<64x64xbf16>, vector<64x64xbf16>, vector<64x64xf32> -> vector<64x64xf32>
    %c0_95 = arith.constant 0 : index
    %c0_96 = arith.constant 0 : index
    %174 = vector.load %arg6[%c0_95, %c0_96] : memref<64x64xf32, #tpu.memory_space<vmem>>, vector<64x64xf32>
    %175 = vector.broadcast %0 : f32 to vector<64x64xf32>
    %176 = arith.mulf %175, %174 : vector<64x64xf32>
    %c0_97 = arith.constant 0 : index
    %c0_98 = arith.constant 0 : index
    %177 = vector.load %arg7[%c0_97, %c0_98] : memref<64x64xf32, #tpu.memory_space<vmem>>, vector<64x64xf32>
    %178 = vector.broadcast %1 : f32 to vector<64x64xf32>
    %179 = arith.mulf %178, %177 : vector<64x64xf32>
    %180 = arith.addf %176, %179 : vector<64x64xf32>
    %181 = arith.addf %180, %173 : vector<64x64xf32>
    %182 = arith.mulf %181, %181 : vector<64x64xf32>
    %cst_99 = arith.constant dense<0.000000e+00> : vector<64xf32>
    %183 = vector.multi_reduction <add>, %182, %cst_99 [1] : vector<64x64xf32> to vector<64xf32>
    %184 = vector.shape_cast %183 : vector<64xf32> to vector<64x1xf32>
    %cst_100 = arith.constant 6.400000e+01 : f32
    %185 = vector.broadcast %cst_100 : f32 to vector<64x1xf32>
    %186 = arith.divf %184, %185 : vector<64x1xf32>
    %cst_101 = arith.constant 1.1920929E-7 : f32
    %187 = vector.broadcast %cst_101 : f32 to vector<64x1xf32>
    %188 = arith.addf %186, %187 : vector<64x1xf32>
    %189 = math.rsqrt %188 : vector<64x1xf32>
    %190 = vector.broadcast %189 : vector<64x1xf32> to vector<64x64xf32>
    %191 = arith.mulf %181, %190 : vector<64x64xf32>
    %192 = arith.truncf %191 : vector<64x64xf32> to vector<64x64xbf16>
    %c0_102 = arith.constant 0 : index
    %c0_103 = arith.constant 0 : index
    %193 = vector.load %arg16[%c0_102, %c0_103] : memref<64x256xbf16, #tpu.memory_space<vmem>>, vector<64x256xbf16>
    %cst_104 = arith.constant dense<0.000000e+00> : vector<64x256xf32>
    %194 = tpu.matmul %192, %193, %cst_104 {dimension_numbers = #tpu.dot_dimension_numbers<[1], [0], [0], [1], [0, 0, 1, 1], [], []>} : vector<64x64xbf16>, vector<64x256xbf16>, vector<64x256xf32> -> vector<64x256xf32>
    %cst_105 = arith.constant 0.000000e+00 : f32
    %195 = vector.broadcast %cst_105 : f32 to vector<64x256xf32>
    %196 = arith.maximumf %194, %195 : vector<64x256xf32>
    %197 = arith.truncf %196 : vector<64x256xf32> to vector<64x256xbf16>
    %198 = arith.mulf %197, %197 : vector<64x256xbf16>
    %c0_106 = arith.constant 0 : index
    %c0_107 = arith.constant 0 : index
    %199 = vector.load %arg17[%c0_106, %c0_107] : memref<256x64xbf16, #tpu.memory_space<vmem>>, vector<256x64xbf16>
    %cst_108 = arith.constant dense<0.000000e+00> : vector<64x64xf32>
    %200 = tpu.matmul %198, %199, %cst_108 {dimension_numbers = #tpu.dot_dimension_numbers<[1], [0], [0], [1], [0, 0, 1, 1], [], []>} : vector<64x256xbf16>, vector<256x64xbf16>, vector<64x64xf32> -> vector<64x64xf32>
    %201 = arith.addf %181, %200 : vector<64x64xf32>
    %c0_109 = arith.constant 0 : index
    %c0_110 = arith.constant 0 : index
    %202 = vector.load %arg18[%c0_109, %c0_110] : memref<64x64xf32, #tpu.memory_space<vmem>>, vector<64x64xf32>
    tpu.vector_store %arg18[%c0_109, %c0_110], %201 {strides = array<i32>} : memref<64x64xf32, #tpu.memory_space<vmem>>, vector<64x64xf32>,
    return
  }
  func.func @transform_0(%arg0: i32) -> i32 {
    %c0_i32 = arith.constant 0 : i32
    %c0_i32_0 = arith.constant 0 : i32
    return %c0_i32 : i32
  }
  func.func @transform_1(%arg0: i32) -> i32 {
    %c0_i32 = arith.constant 0 : i32
    %c0_i32_0 = arith.constant 0 : i32
    return %c0_i32 : i32
  }
  func.func @transform_2(%arg0: i32) -> (i32, i32) {
    %c0_i32 = arith.constant 0 : i32
    %c0_i32_0 = arith.constant 0 : i32
    %c0_i32_1 = arith.constant 0 : i32
    return %c0_i32, %c0_i32_0 : i32, i32
  }
  func.func @transform_3(%arg0: i32) -> (i32, i32) {
    %c0_i32 = arith.constant 0 : i32
    %c0_i32_0 = arith.constant 0 : i32
    %c0_i32_1 = arith.constant 0 : i32
    return %c0_i32, %c0_i32_0 : i32, i32
  }
  func.func @transform_4(%arg0: i32) -> (i32, i32) {
    %c0_i32 = arith.constant 0 : i32
    %c0_i32_0 = arith.constant 0 : i32
    %c0_i32_1 = arith.constant 0 : i32
    return %c0_i32, %c0_i32_0 : i32, i32
  }
  func.func @transform_5(%arg0: i32) -> (i32, i32) {
    %c0_i32 = arith.constant 0 : i32
    %c0_i32_0 = arith.constant 0 : i32
    return %arg0, %c0_i32 : i32, i32
  }
  func.func @transform_6(%arg0: i32) -> (i32, i32) {
    %c0_i32 = arith.constant 0 : i32
    %c0_i32_0 = arith.constant 0 : i32
    return %arg0, %c0_i32 : i32, i32
  }
  func.func @transform_7(%arg0: i32) -> (i32, i32) {
    %c0_i32 = arith.constant 0 : i32
    %c0_i32_0 = arith.constant 0 : i32
    %c0_i32_1 = arith.constant 0 : i32
    return %c0_i32, %c0_i32_0 : i32, i32
  }
  func.func @transform_8(%arg0: i32) -> (i32, i32) {
    %c0_i32 = arith.constant 0 : i32
    %c0_i32_0 = arith.constant 0 : i32
    %c0_i32_1 = arith.constant 0 : i32
    return %c0_i32, %c0_i32_0 : i32, i32
  }
  func.func @transform_9(%arg0: i32) -> (i32, i32) {
    %c0_i32 = arith.constant 0 : i32
    %c0_i32_0 = arith.constant 0 : i32
    return %arg0, %c0_i32 : i32, i32
  }
  func.func @transform_10(%arg0: i32) -> (i32, i32) {
    %c0_i32 = arith.constant 0 : i32
    %c0_i32_0 = arith.constant 0 : i32
    return %arg0, %c0_i32 : i32, i32
  }
  func.func @transform_11(%arg0: i32) -> (i32, i32) {
    %c0_i32 = arith.constant 0 : i32
    %c0_i32_0 = arith.constant 0 : i32
    return %arg0, %c0_i32 : i32, i32
  }
  func.func @transform_12(%arg0: i32) -> (i32, i32) {
    %c0_i32 = arith.constant 0 : i32
    %c0_i32_0 = arith.constant 0 : i32
    %c0_i32_1 = arith.constant 0 : i32
    return %c0_i32, %c0_i32_0 : i32, i32
  }
  func.func @transform_13(%arg0: i32) -> (i32, i32) {
    %c0_i32 = arith.constant 0 : i32
    %c0_i32_0 = arith.constant 0 : i32
    %c0_i32_1 = arith.constant 0 : i32
    return %c0_i32, %c0_i32_0 : i32, i32
  }
  func.func @transform_14(%arg0: i32) -> (i32, i32) {
    %c0_i32 = arith.constant 0 : i32
    %c0_i32_0 = arith.constant 0 : i32
    %c0_i32_1 = arith.constant 0 : i32
    return %c0_i32, %c0_i32_0 : i32, i32
  }
  func.func @transform_15(%arg0: i32) -> (i32, i32) {
    %c0_i32 = arith.constant 0 : i32
    %c0_i32_0 = arith.constant 0 : i32
    %c0_i32_1 = arith.constant 0 : i32
    return %c0_i32, %c0_i32_0 : i32, i32
  }
  func.func @transform_16(%arg0: i32) -> (i32, i32) {
    %c0_i32 = arith.constant 0 : i32
    %c0_i32_0 = arith.constant 0 : i32
    %c0_i32_1 = arith.constant 0 : i32
    return %c0_i32, %c0_i32_0 : i32, i32
  }
  func.func @transform_17(%arg0: i32) -> (i32, i32) {
    %c0_i32 = arith.constant 0 : i32
    %c0_i32_0 = arith.constant 0 : i32
    return %arg0, %c0_i32 : i32, i32
  }
}

</mosaic_0001>

<llo_original>
// kernel: block_forward.1
$region0: #{block_forward.1}
  #allocation0 [shape = 'u32[]', space=smem, size = 0x4, offset = 0x4, fixed_abs, tag = 'smem constant byte address 0x4 - core index']
  #allocation1 [shape = 'u32[144,128]{1,0:T(1,128)}', space=vmem, size = 0x12000, scoped, tag = 'internal scratch']
  #allocation2 [shape = 'f32[128,192]{1,0:T(8,128)}', space=vmem, size = 0x20000, scoped, tag = 'scratch operand']
  #allocation3 [shape = 'f32[64,128]{1,0:T(8,128)}', space=vmem, size = 0x8000, scoped, tag = 'scratch operand']
  #allocation4 [shape = 'f32[64,64]{1,0:T(8,128)}', space=vmem, size = 0x8000, scoped, tag = 'scratch operand']
  %s0 = inlined_call_operand.vmem [shape: f32[2], index: 0, kind: input, shape index: {}]
  %s1 = inlined_call_operand.vmem [shape: f32[2], index: 1, kind: input, shape index: {}]
  %s2 = inlined_call_operand.vmem [shape: f32[128,64], index: 2, kind: input, shape index: {}, may-alias: {2,5}]
  %s3 = inlined_call_operand.vmem [shape: f32[128,64], index: 3, kind: input, shape index: {}, may-alias: {3,6}]
  %s4 = inlined_call_operand.vmem [shape: f32[128,64], index: 4, kind: input, shape index: {}]
  %s5 = inlined_call_operand.vmem [shape: f32[128,64], index: 5, kind: input, shape index: {}, may-alias: {2,5}]
  %s6 = inlined_call_operand.vmem [shape: f32[128,64], index: 6, kind: input, shape index: {}, may-alias: {3,6}]
  %s7 = inlined_call_operand.vmem [shape: f32[128,32], index: 7, kind: input, shape index: {}, may-alias: {7,9}]
  %s8 = inlined_call_operand.vmem [shape: f32[128,32], index: 8, kind: input, shape index: {}, may-alias: {8,10}]
  %s9 = inlined_call_operand.vmem [shape: f32[128,32], index: 9, kind: input, shape index: {}, may-alias: {7,9}]
  %s10 = inlined_call_operand.vmem [shape: f32[128,32], index: 10, kind: input, shape index: {}, may-alias: {8,10}]
  %s11 = inlined_call_operand.vmem [shape: f32[128,128], index: 11, kind: input, shape index: {}]
  %s12 = inlined_call_operand.vmem [shape: bf16[64,128], index: 12, kind: input, shape index: {}]
  %s13 = inlined_call_operand.vmem [shape: bf16[64,192], index: 13, kind: input, shape index: {}]
  %s14 = inlined_call_operand.vmem [shape: bf16[64,64], index: 14, kind: input, shape index: {}]
  %s15 = inlined_call_operand.vmem [shape: bf16[64,256], index: 15, kind: input, shape index: {}]
  %s16 = inlined_call_operand.vmem [shape: bf16[256,64], index: 16, kind: input, shape index: {}]
  %s17 = inlined_call_operand.vmem [shape: f32[128,64], index: 17, kind: output, shape index: {}]
  %s18 = sld [smem:[#allocation0]]
  $region109: #{block_forward.1} parent=0
    _
  %s20 = ssub.s32 1, %s18
  %s21 = scalar_select 0, %s20, %s18
  $region1: #{block_forward.1} parent=0
    #allocation5 [shape = 'u8[512]{0}', space=smem, size = 0x200, scoped, tag = 'input window, operand 0, single buffered']
    #allocation6 [shape = 's32[2]{0}', space=sflag, size = 0x8, scoped, tag = 'scoped memory for block_forward.1']
    #allocation7 [shape = 'u8[512]{0}', space=smem, size = 0x200, scoped, tag = 'input window, operand 1, single buffered']
    #allocation8 [shape = 's32[1]{0}', space=sflag, size = 0x4, scoped, tag = 'scoped memory for block_forward.1']
    %22 = vsyncpa [#allocation6], 0
    %23 = vsyncpa [#allocation8], 0
    loop: start=0, step=1, limit=4
    $region2: #{block_forward.1} parent=1 // loop_pre_header
      _
    $region3: #{block_forward.1} parent=1 // loop_header
      %s25 = sphi 0, %s29
      %p26 = scmp.ge.s32.totalorder %s25, 4
      %s33 = sphi 0, %s33
      %s35 = sphi 0, %s33
      %s36 = sphi 0, %s35
      %s50 = sphi 0, %s36
      %s54 = sphi 0, %s54
      %s56 = sphi 0, %s54
      %s57 = sphi 0, %s56
      %s71 = sphi 0, %s57
      %s75 = sphi 0, %s75
      %s77 = sphi 0, %s75
      %s78 = sphi 0, %s77
      %s92 = sphi 0, %s78
      %s96 = sphi 0, %s96
      %s98 = sphi 0, %s96
      %s99 = sphi 0, %s98
      %s113 = sphi 0, %s99
      %s117 = sphi 0, %s117
      %s119 = sphi 0, %s117
      %s120 = sphi 0, %s119
      %s134 = sphi 0, %s120
      %s140 = sphi 0, %s142
      %s143 = sphi 0, %s140
      %s144 = sphi 0, %s143
      %s160 = sphi 0, %s144
      %s166 = sphi 0, %s168
      %s169 = sphi 0, %s166
      %s170 = sphi 0, %s169
      %s186 = sphi 0, %s170
      %s190 = sphi 0, %s190
      %s192 = sphi 0, %s190
      %s193 = sphi 0, %s192
      %s207 = sphi 0, %s193
      %s211 = sphi 0, %s211
      %s213 = sphi 0, %s211
      %s214 = sphi 0, %s213
      %s228 = sphi 0, %s214
      %s234 = sphi 0, %s236
      %s237 = sphi 0, %s234
      %s238 = sphi 0, %s237
      %s254 = sphi 0, %s238
      %s260 = sphi 0, %s262
      %s263 = sphi 0, %s260
      %s264 = sphi 0, %s263
      %s280 = sphi 0, %s264
      %s286 = sphi 0, %s288
      %s289 = sphi 0, %s286
      %s290 = sphi 0, %s289
      %s306 = sphi 0, %s290
      %s310 = sphi 0, %s310
      %s312 = sphi 0, %s310
      %s313 = sphi 0, %s312
      %s327 = sphi 0, %s313
      %s331 = sphi 0, %s331
      %s333 = sphi 0, %s331
      %s334 = sphi 0, %s333
      %s348 = sphi 0, %s334
      %s352 = sphi 0, %s352
      %s354 = sphi 0, %s352
      %s355 = sphi 0, %s354
      %s369 = sphi 0, %s355
      %s373 = sphi 0, %s373
      %s375 = sphi 0, %s373
      %s376 = sphi 0, %s375
      %s390 = sphi 0, %s376
      %s394 = sphi 0, %s394
      %s396 = sphi 0, %s394
      %s397 = sphi 0, %s396
      %s411 = sphi 0, %s397
      %s417 = sphi 0, %s419
      %s420 = sphi 0, %s417
      %s421 = sphi 0, %s420
      %s437 = sphi 0, %s421
    $region4: #{block_forward.1} parent=1 // loop_header_branch
      %28 = sbr.rel (%p26) target = $region8
    $region5: #{block_forward.1} parent=1 // loop_body
      %s30 = ssub.s32 %s25, 1
      %s31 = ssub.s32 %s25, 2
      %s32 = sadd.s32 %s25, 1
      %s34 = sadd.s32 %s33, 1
      %p37 = scmp.eq.s32.totalorder %s25, 1
      %p38 = scmp.ne.s32.totalorder %s33, %s35
      %p39 = scmp.eq.s32.totalorder %s25, 0
      %p40 = por %p38, %p39
      %p41 = scmp.ne.s32.totalorder %s33, %s35
      %p42 = scmp.eq.s32.totalorder %s30, 1
      %p43 = por %p41, %p42
      %p44 = scmp.ne.s32.totalorder %s35, %s36
      %p45 = scmp.eq.s32.totalorder %s30, 0
      %p46 = por %p44, %p45
      %p47 = scmp.ne.s32.totalorder %s35, %s36
      %p48 = scmp.eq.s32.totalorder %s31, 1
      %p49 = por %p47, %p48
      %p51 = scmp.ne.s32.totalorder %s36, %s50
      %p52 = scmp.eq.s32.totalorder %s31, 0
      %p53 = por %p51, %p52
      %s55 = sadd.s32 %s54, 1
      %p58 = scmp.eq.s32.totalorder %s25, 1
      %p59 = scmp.ne.s32.totalorder %s54, %s56
      %p60 = scmp.eq.s32.totalorder %s25, 0
      %p61 = por %p59, %p60
      %p62 = scmp.ne.s32.totalorder %s54, %s56
      %p63 = scmp.eq.s32.totalorder %s30, 1
      %p64 = por %p62, %p63
      %p65 = scmp.ne.s32.totalorder %s56, %s57
      %p66 = scmp.eq.s32.totalorder %s30, 0
      %p67 = por %p65, %p66
      %p68 = scmp.ne.s32.totalorder %s56, %s57
      %p69 = scmp.eq.s32.totalorder %s31, 1
      %p70 = por %p68, %p69
      %p72 = scmp.ne.s32.totalorder %s57, %s71
      %p73 = scmp.eq.s32.totalorder %s31, 0
      %p74 = por %p72, %p73
      %s76 = sadd.s32 %s75, 1
      %p79 = scmp.eq.s32.totalorder %s25, 1
      %p80 = scmp.ne.s32.totalorder %s75, %s77
      %p81 = scmp.eq.s32.totalorder %s25, 0
      %p82 = por %p80, %p81
      %p83 = scmp.ne.s32.totalorder %s75, %s77
      %p84 = scmp.eq.s32.totalorder %s30, 1
      %p85 = por %p83, %p84
      %p86 = scmp.ne.s32.totalorder %s77, %s78
      %p87 = scmp.eq.s32.totalorder %s30, 0
      %p88 = por %p86, %p87
      %p89 = scmp.ne.s32.totalorder %s77, %s78
      %p90 = scmp.eq.s32.totalorder %s31, 1
      %p91 = por %p89, %p90
      %p93 = scmp.ne.s32.totalorder %s78, %s92
      %p94 = scmp.eq.s32.totalorder %s31, 0
      %p95 = por %p93, %p94
      %s97 = sadd.s32 %s96, 1
      %p100 = scmp.eq.s32.totalorder %s25, 1
      %p101 = scmp.ne.s32.totalorder %s96, %s98
      %p102 = scmp.eq.s32.totalorder %s25, 0
      %p103 = por %p101, %p102
      %p104 = scmp.ne.s32.totalorder %s96, %s98
      %p105 = scmp.eq.s32.totalorder %s30, 1
      %p106 = por %p104, %p105
      %p107 = scmp.ne.s32.totalorder %s98, %s99
      %p108 = scmp.eq.s32.totalorder %s30, 0
      %p109 = por %p107, %p108
      %p110 = scmp.ne.s32.totalorder %s98, %s99
      %p111 = scmp.eq.s32.totalorder %s31, 1
      %p112 = por %p110, %p111
      %p114 = scmp.ne.s32.totalorder %s99, %s113
      %p115 = scmp.eq.s32.totalorder %s31, 0
      %p116 = por %p114, %p115
      %s118 = sadd.s32 %s117, 1
      %p121 = scmp.eq.s32.totalorder %s25, 1
      %p122 = scmp.ne.s32.totalorder %s117, %s119
      %p123 = scmp.eq.s32.totalorder %s25, 0
      %p124 = por %p122, %p123
      %p125 = scmp.ne.s32.totalorder %s117, %s119
      %p126 = scmp.eq.s32.totalorder %s30, 1
      %p127 = por %p125, %p126
      %p128 = scmp.ne.s32.totalorder %s119, %s120
      %p129 = scmp.eq.s32.totalorder %s30, 0
      %p130 = por %p128, %p129
      %p131 = scmp.ne.s32.totalorder %s119, %s120
      %p132 = scmp.eq.s32.totalorder %s31, 1
      %p133 = por %p131, %p132
      %p135 = scmp.ne.s32.totalorder %s120, %s134
      %p136 = scmp.eq.s32.totalorder %s31, 0
      %p137 = por %p135, %p136
      %s138 = ssub.s32 %s25, %s32
      %p139 = scmp.eq.s32.totalorder %s138, 0
      %s141 = sadd.s32 %s140, 1
      %s142 = scalar_select %p139, %s140, %s141
      %p145 = pneg %p139
      %p146 = scmp.eq.s32.totalorder %s25, 1
      %p147 = por %p145, %p146
      %p148 = scmp.ne.s32.totalorder %s140, %s143
      %p149 = scmp.eq.s32.totalorder %s25, 0
      %p150 = por %p148, %p149
      %p151 = scmp.ne.s32.totalorder %s140, %s143
      %p152 = scmp.eq.s32.totalorder %s30, 1
      %p153 = por %p151, %p152
      %p154 = scmp.ne.s32.totalorder %s143, %s144
      %p155 = scmp.eq.s32.totalorder %s30, 0
      %p156 = por %p154, %p155
      %p157 = scmp.ne.s32.totalorder %s143, %s144
      %p158 = scmp.eq.s32.totalorder %s31, 1
      %p159 = por %p157, %p158
      %p161 = scmp.ne.s32.totalorder %s144, %s160
      %p162 = scmp.eq.s32.totalorder %s31, 0
      %p163 = por %p161, %p162
      %s164 = ssub.s32 %s25, %s32
      %p165 = scmp.eq.s32.totalorder %s164, 0
      %s167 = sadd.s32 %s166, 1
      %s168 = scalar_select %p165, %s166, %s167
      %p171 = pneg %p165
      %p172 = scmp.eq.s32.totalorder %s25, 1
      %p173 = por %p171, %p172
      %p174 = scmp.ne.s32.totalorder %s166, %s169
      %p175 = scmp.eq.s32.totalorder %s25, 0
      %p176 = por %p174, %p175
      %p177 = scmp.ne.s32.totalorder %s166, %s169
      %p178 = scmp.eq.s32.totalorder %s30, 1
      %p179 = por %p177, %p178
      %p180 = scmp.ne.s32.totalorder %s169, %s170
      %p181 = scmp.eq.s32.totalorder %s30, 0
      %p182 = por %p180, %p181
      %p183 = scmp.ne.s32.totalorder %s169, %s170
      %p184 = scmp.eq.s32.totalorder %s31, 1
      %p185 = por %p183, %p184
      %p187 = scmp.ne.s32.totalorder %s170, %s186
      %p188 = scmp.eq.s32.totalorder %s31, 0
      %p189 = por %p187, %p188
      %s191 = sadd.s32 %s190, 1
      %p194 = scmp.eq.s32.totalorder %s25, 1
      %p195 = scmp.ne.s32.totalorder %s190, %s192
      %p196 = scmp.eq.s32.totalorder %s25, 0
      %p197 = por %p195, %p196
      %p198 = scmp.ne.s32.totalorder %s190, %s192
      %p199 = scmp.eq.s32.totalorder %s30, 1
      %p200 = por %p198, %p199
      %p201 = scmp.ne.s32.totalorder %s192, %s193
      %p202 = scmp.eq.s32.totalorder %s30, 0
      %p203 = por %p201, %p202
      %p204 = scmp.ne.s32.totalorder %s192, %s193
      %p205 = scmp.eq.s32.totalorder %s31, 1
      %p206 = por %p204, %p205
      %p208 = scmp.ne.s32.totalorder %s193, %s207
      %p209 = scmp.eq.s32.totalorder %s31, 0
      %p210 = por %p208, %p209
      %s212 = sadd.s32 %s211, 1
      %p215 = scmp.eq.s32.totalorder %s25, 1
      %p216 = scmp.ne.s32.totalorder %s211, %s213
      %p217 = scmp.eq.s32.totalorder %s25, 0
      %p218 = por %p216, %p217
      %p219 = scmp.ne.s32.totalorder %s211, %s213
      %p220 = scmp.eq.s32.totalorder %s30, 1
      %p221 = por %p219, %p220
      %p222 = scmp.ne.s32.totalorder %s213, %s214
      %p223 = scmp.eq.s32.totalorder %s30, 0
      %p224 = por %p222, %p223
      %p225 = scmp.ne.s32.totalorder %s213, %s214
      %p226 = scmp.eq.s32.totalorder %s31, 1
      %p227 = por %p225, %p226
      %p229 = scmp.ne.s32.totalorder %s214, %s228
      %p230 = scmp.eq.s32.totalorder %s31, 0
      %p231 = por %p229, %p230
      %s232 = ssub.s32 %s25, %s32
      %p233 = scmp.eq.s32.totalorder %s232, 0
      %s235 = sadd.s32 %s234, 1
      %s236 = scalar_select %p233, %s234, %s235
      %p239 = pneg %p233
      %p240 = scmp.eq.s32.totalorder %s25, 1
      %p241 = por %p239, %p240
      %p242 = scmp.ne.s32.totalorder %s234, %s237
      %p243 = scmp.eq.s32.totalorder %s25, 0
      %p244 = por %p242, %p243
      %p245 = scmp.ne.s32.totalorder %s234, %s237
      %p246 = scmp.eq.s32.totalorder %s30, 1
      %p247 = por %p245, %p246
      %p248 = scmp.ne.s32.totalorder %s237, %s238
      %p249 = scmp.eq.s32.totalorder %s30, 0
      %p250 = por %p248, %p249
      %p251 = scmp.ne.s32.totalorder %s237, %s238
      %p252 = scmp.eq.s32.totalorder %s31, 1
      %p253 = por %p251, %p252
      %p255 = scmp.ne.s32.totalorder %s238, %s254
      %p256 = scmp.eq.s32.totalorder %s31, 0
      %p257 = por %p255, %p256
      %s258 = ssub.s32 %s25, %s32
      %p259 = scmp.eq.s32.totalorder %s258, 0
      %s261 = sadd.s32 %s260, 1
      %s262 = scalar_select %p259, %s260, %s261
      %p265 = pneg %p259
      %p266 = scmp.eq.s32.totalorder %s25, 1
      %p267 = por %p265, %p266
      %p268 = scmp.ne.s32.totalorder %s260, %s263
      %p269 = scmp.eq.s32.totalorder %s25, 0
      %p270 = por %p268, %p269
      %p271 = scmp.ne.s32.totalorder %s260, %s263
      %p272 = scmp.eq.s32.totalorder %s30, 1
      %p273 = por %p271, %p272
      %p274 = scmp.ne.s32.totalorder %s263, %s264
      %p275 = scmp.eq.s32.totalorder %s30, 0
      %p276 = por %p274, %p275
      %p277 = scmp.ne.s32.totalorder %s263, %s264
      %p278 = scmp.eq.s32.totalorder %s31, 1
      %p279 = por %p277, %p278
      %p281 = scmp.ne.s32.totalorder %s264, %s280
      %p282 = scmp.eq.s32.totalorder %s31, 0
      %p283 = por %p281, %p282
      %s284 = ssub.s32 %s25, %s32
      %p285 = scmp.eq.s32.totalorder %s284, 0
      %s287 = sadd.s32 %s286, 1
      %s288 = scalar_select %p285, %s286, %s287
      %p291 = pneg %p285
      %p292 = scmp.eq.s32.totalorder %s25, 1
      %p293 = por %p291, %p292
      %p294 = scmp.ne.s32.totalorder %s286, %s289
      %p295 = scmp.eq.s32.totalorder %s25, 0
      %p296 = por %p294, %p295
      %p297 = scmp.ne.s32.totalorder %s286, %s289
      %p298 = scmp.eq.s32.totalorder %s30, 1
      %p299 = por %p297, %p298
      %p300 = scmp.ne.s32.totalorder %s289, %s290
      %p301 = scmp.eq.s32.totalorder %s30, 0
      %p302 = por %p300, %p301
      %p303 = scmp.ne.s32.totalorder %s289, %s290
      %p304 = scmp.eq.s32.totalorder %s31, 1
      %p305 = por %p303, %p304
      %p307 = scmp.ne.s32.totalorder %s290, %s306
      %p308 = scmp.eq.s32.totalorder %s31, 0
      %p309 = por %p307, %p308
      %s311 = sadd.s32 %s310, 1
      %p314 = scmp.eq.s32.totalorder %s25, 1
      %p315 = scmp.ne.s32.totalorder %s310, %s312
      %p316 = scmp.eq.s32.totalorder %s25, 0
      %p317 = por %p315, %p316
      %p318 = scmp.ne.s32.totalorder %s310, %s312
      %p319 = scmp.eq.s32.totalorder %s30, 1
      %p320 = por %p318, %p319
      %p321 = scmp.ne.s32.totalorder %s312, %s313
      %p322 = scmp.eq.s32.totalorder %s30, 0
      %p323 = por %p321, %p322
      %p324 = scmp.ne.s32.totalorder %s312, %s313
      %p325 = scmp.eq.s32.totalorder %s31, 1
      %p326 = por %p324, %p325
      %p328 = scmp.ne.s32.totalorder %s313, %s327
      %p329 = scmp.eq.s32.totalorder %s31, 0
      %p330 = por %p328, %p329
      %s332 = sadd.s32 %s331, 1
      %p335 = scmp.eq.s32.totalorder %s25, 1
      %p336 = scmp.ne.s32.totalorder %s331, %s333
      %p337 = scmp.eq.s32.totalorder %s25, 0
      %p338 = por %p336, %p337
      %p339 = scmp.ne.s32.totalorder %s331, %s333
      %p340 = scmp.eq.s32.totalorder %s30, 1
      %p341 = por %p339, %p340
      %p342 = scmp.ne.s32.totalorder %s333, %s334
      %p343 = scmp.eq.s32.totalorder %s30, 0
      %p344 = por %p342, %p343
      %p345 = scmp.ne.s32.totalorder %s333, %s334
      %p346 = scmp.eq.s32.totalorder %s31, 1
      %p347 = por %p345, %p346
      %p349 = scmp.ne.s32.totalorder %s334, %s348
      %p350 = scmp.eq.s32.totalorder %s31, 0
      %p351 = por %p349, %p350
      %s353 = sadd.s32 %s352, 1
      %p356 = scmp.eq.s32.totalorder %s25, 1
      %p357 = scmp.ne.s32.totalorder %s352, %s354
      %p358 = scmp.eq.s32.totalorder %s25, 0
      %p359 = por %p357, %p358
      %p360 = scmp.ne.s32.totalorder %s352, %s354
      %p361 = scmp.eq.s32.totalorder %s30, 1
      %p362 = por %p360, %p361
      %p363 = scmp.ne.s32.totalorder %s354, %s355
      %p364 = scmp.eq.s32.totalorder %s30, 0
      %p365 = por %p363, %p364
      %p366 = scmp.ne.s32.totalorder %s354, %s355
      %p367 = scmp.eq.s32.totalorder %s31, 1
      %p368 = por %p366, %p367
      %p370 = scmp.ne.s32.totalorder %s355, %s369
      %p371 = scmp.eq.s32.totalorder %s31, 0
      %p372 = por %p370, %p371
      %s374 = sadd.s32 %s373, 1
      %p377 = scmp.eq.s32.totalorder %s25, 1
      %p378 = scmp.ne.s32.totalorder %s373, %s375
      %p379 = scmp.eq.s32.totalorder %s25, 0
      %p380 = por %p378, %p379
      %p381 = scmp.ne.s32.totalorder %s373, %s375
      %p382 = scmp.eq.s32.totalorder %s30, 1
      %p383 = por %p381, %p382
      %p384 = scmp.ne.s32.totalorder %s375, %s376
      %p385 = scmp.eq.s32.totalorder %s30, 0
      %p386 = por %p384, %p385
      %p387 = scmp.ne.s32.totalorder %s375, %s376
      %p388 = scmp.eq.s32.totalorder %s31, 1
      %p389 = por %p387, %p388
      %p391 = scmp.ne.s32.totalorder %s376, %s390
      %p392 = scmp.eq.s32.totalorder %s31, 0
      %p393 = por %p391, %p392
      %s395 = sadd.s32 %s394, 1
      %p398 = scmp.eq.s32.totalorder %s25, 1
      %p399 = scmp.ne.s32.totalorder %s394, %s396
      %p400 = scmp.eq.s32.totalorder %s25, 0
      %p401 = por %p399, %p400
      %p402 = scmp.ne.s32.totalorder %s394, %s396
      %p403 = scmp.eq.s32.totalorder %s30, 1
      %p404 = por %p402, %p403
      %p405 = scmp.ne.s32.totalorder %s396, %s397
      %p406 = scmp.eq.s32.totalorder %s30, 0
      %p407 = por %p405, %p406
      %p408 = scmp.ne.s32.totalorder %s396, %s397
      %p409 = scmp.eq.s32.totalorder %s31, 1
      %p410 = por %p408, %p409
      %p412 = scmp.ne.s32.totalorder %s397, %s411
      %p413 = scmp.eq.s32.totalorder %s31, 0
      %p414 = por %p412, %p413
      %s415 = ssub.s32 %s25, %s32
      %p416 = scmp.eq.s32.totalorder %s415, 0
      %s418 = sadd.s32 %s417, 1
      %s419 = scalar_select %p416, %s417, %s418
      %p422 = pneg %p416
      %p423 = scmp.eq.s32.totalorder %s25, 1
      %p424 = por %p422, %p423
      %p425 = scmp.ne.s32.totalorder %s417, %s420
      %p426 = scmp.eq.s32.totalorder %s25, 0
      %p427 = por %p425, %p426
      %p428 = scmp.ne.s32.totalorder %s417, %s420
      %p429 = scmp.eq.s32.totalorder %s30, 1
      %p430 = por %p428, %p429
      %p431 = scmp.ne.s32.totalorder %s420, %s421
      %p432 = scmp.eq.s32.totalorder %s30, 0
      %p433 = por %p431, %p432
      %p434 = scmp.ne.s32.totalorder %s420, %s421
      %p435 = scmp.eq.s32.totalorder %s31, 1
      %p436 = por %p434, %p435
      %p438 = scmp.ne.s32.totalorder %s421, %s437
      %p439 = scmp.eq.s32.totalorder %s31, 0
      %p440 = por %p438, %p439
      %p441 = scmp.le.s32.totalorder 1, %s25
      %p442 = scmp.lt.s32.totalorder %s25, 3
      %p443 = pnand %p441, %p442
      %p444 = pneg %p443
      // Predicated region
      $region9: #{block_forward.1} parent=5 // pred_check
        _
      $region10: #{block_forward.1} parent=5 // pred_check_branch
        %446 = sbr.rel (%p443) target = $region12
      $region11: #{block_forward.1} parent=5 // pred_region
        %s447 = ssub.s32 %s25, 1
        // Predicated region
        $region13: #{block_forward.1} parent=11 // pred_check
          %p448 = pneg %p46
        $region14: #{block_forward.1} parent=11 // pred_check_branch
          %450 = sbr.rel (%p448) target = $region16
        $region15: #{block_forward.1} parent=11 // pred_region
          %s452 = ssub.s32 16, 16
          %453 = vsyncadd [#allocation6], %s452
          %s455 = sshll.u32 %s0, 4
          %s456 = int_to_ptr.vmem [resolvable:$true] %s455
          %458 = dma.vmem_to_smem %s456, 16, [#allocation5], [#allocation6]
        $region16: #{block_forward.1} parent=11 // pred_fallthru
          _
        // Predicated region
        $region17: #{block_forward.1} parent=11 // pred_check
          %p459 = pneg %p67
        $region18: #{block_forward.1} parent=11 // pred_check_branch
          %461 = sbr.rel (%p459) target = $region20
        $region19: #{block_forward.1} parent=11 // pred_region
          %s463 = ssub.s32 16, 16
          %464 = vsyncadd [#allocation8], %s463
          %s466 = sshll.u32 %s1, 4
          %s467 = int_to_ptr.vmem [resolvable:$true] %s466
          %469 = dma.vmem_to_smem %s467, 16, [#allocation7], [#allocation8]
        $region20: #{block_forward.1} parent=11 // pred_fallthru
          _
        // Predicated region
        $region21: #{block_forward.1} parent=11 // pred_check
          %p470 = pneg %p88
        $region22: #{block_forward.1} parent=11 // pred_check_branch
          %472 = sbr.rel (%p470) target = $region24
        $region23: #{block_forward.1} parent=11 // pred_region
          _
        $region24: #{block_forward.1} parent=11 // pred_fallthru
          _
        // Predicated region
        $region25: #{block_forward.1} parent=11 // pred_check
          %p473 = pneg %p109
        $region26: #{block_forward.1} parent=11 // pred_check_branch
          %475 = sbr.rel (%p473) target = $region28
        $region27: #{block_forward.1} parent=11 // pred_region
          _
        $region28: #{block_forward.1} parent=11 // pred_fallthru
          _
        // Predicated region
        $region29: #{block_forward.1} parent=11 // pred_check
          %p476 = pneg %p130
        $region30: #{block_forward.1} parent=11 // pred_check_branch
          %478 = sbr.rel (%p476) target = $region32
        $region31: #{block_forward.1} parent=11 // pred_region
          _
        $region32: #{block_forward.1} parent=11 // pred_fallthru
          _
        // Predicated region
        $region33: #{block_forward.1} parent=11 // pred_check
          %p479 = pneg %p203
        $region34: #{block_forward.1} parent=11 // pred_check_branch
          %481 = sbr.rel (%p479) target = $region36
        $region35: #{block_forward.1} parent=11 // pred_region
          _
        $region36: #{block_forward.1} parent=11 // pred_fallthru
          _
        // Predicated region
        $region37: #{block_forward.1} parent=11 // pred_check
          %p482 = pneg %p224
        $region38: #{block_forward.1} parent=11 // pred_check_branch
          %484 = sbr.rel (%p482) target = $region40
        $region39: #{block_forward.1} parent=11 // pred_region
          _
        $region40: #{block_forward.1} parent=11 // pred_fallthru
          _
        // Predicated region
        $region41: #{block_forward.1} parent=11 // pred_check
          %p485 = pneg %p323
        $region42: #{block_forward.1} parent=11 // pred_check_branch
          %487 = sbr.rel (%p485) target = $region44
        $region43: #{block_forward.1} parent=11 // pred_region
          _
        $region44: #{block_forward.1} parent=11 // pred_fallthru
          _
        // Predicated region
        $region45: #{block_forward.1} parent=11 // pred_check
          %p488 = pneg %p344
        $region46: #{block_forward.1} parent=11 // pred_check_branch
          %490 = sbr.rel (%p488) target = $region48
        $region47: #{block_forward.1} parent=11 // pred_region
          _
        $region48: #{block_forward.1} parent=11 // pred_fallthru
          _
        // Predicated region
        $region49: #{block_forward.1} parent=11 // pred_check
          %p491 = pneg %p365
        $region50: #{block_forward.1} parent=11 // pred_check_branch
          %493 = sbr.rel (%p491) target = $region52
        $region51: #{block_forward.1} parent=11 // pred_region
          _
        $region52: #{block_forward.1} parent=11 // pred_fallthru
          _
        // Predicated region
        $region53: #{block_forward.1} parent=11 // pred_check
          %p494 = pneg %p386
        $region54: #{block_forward.1} parent=11 // pred_check_branch
          %496 = sbr.rel (%p494) target = $region56
        $region55: #{block_forward.1} parent=11 // pred_region
          _
        $region56: #{block_forward.1} parent=11 // pred_fallthru
          _
        // Predicated region
        $region57: #{block_forward.1} parent=11 // pred_check
          %p497 = pneg %p407
        $region58: #{block_forward.1} parent=11 // pred_check_branch
          %499 = sbr.rel (%p497) target = $region60
        $region59: #{block_forward.1} parent=11 // pred_region
          _
        $region60: #{block_forward.1} parent=11 // pred_fallthru
          _
      $region12: #{block_forward.1} parent=5 // pred_fallthru
        _
      %p500 = scmp.lt.s32.totalorder %s25, 2
      // Predicated region
      $region61: #{block_forward.1} parent=5 // pred_check
        %p501 = pneg %p500
      $region62: #{block_forward.1} parent=5 // pred_check_branch
        %503 = sbr.rel (%p501) target = $region64
      $region63: #{block_forward.1} parent=5 // pred_region
        // Predicated region
        $region65: #{block_forward.1} parent=63 // pred_check
          %p504 = pneg %p150
        $region66: #{block_forward.1} parent=63 // pred_check_branch
          %506 = sbr.rel (%p504) target = $region68
        $region67: #{block_forward.1} parent=63 // pred_region
          %s507 = smul.u32 8, %s25
          %p508 = scmp.lt.s32.totalorder %s507, 15
          %s509 = scalar_select %p508, %s507, 15
          %s510 = smul.addr %s509, 8
          %s511 = scalar_lea.vmem %s5, %s510
          %s512 = smul.u32 8, %s25
        $region68: #{block_forward.1} parent=63 // pred_fallthru
          _
        // Predicated region
        $region69: #{block_forward.1} parent=63 // pred_check
          %p513 = pneg %p176
        $region70: #{block_forward.1} parent=63 // pred_check_branch
          %515 = sbr.rel (%p513) target = $region72
        $region71: #{block_forward.1} parent=63 // pred_region
          %s516 = smul.u32 8, %s25
          %p517 = scmp.lt.s32.totalorder %s516, 15
          %s518 = scalar_select %p517, %s516, 15
          %s519 = smul.addr %s518, 8
          %s520 = scalar_lea.vmem %s6, %s519
          %s521 = smul.u32 8, %s25
        $region72: #{block_forward.1} parent=63 // pred_fallthru
          _
        // Predicated region
        $region73: #{block_forward.1} parent=63 // pred_check
          %p522 = pneg %p244
        $region74: #{block_forward.1} parent=63 // pred_check_branch
          %524 = sbr.rel (%p522) target = $region76
        $region75: #{block_forward.1} parent=63 // pred_region
          %s525 = smul.u32 8, %s25
          %p526 = scmp.lt.s32.totalorder %s525, 15
          %s527 = scalar_select %p526, %s525, 15
          %s528 = smul.addr %s527, 8
          %s529 = scalar_lea.vmem %s9, %s528
          %s530 = smul.u32 8, %s25
        $region76: #{block_forward.1} parent=63 // pred_fallthru
          _
        // Predicated region
        $region77: #{block_forward.1} parent=63 // pred_check
          %p531 = pneg %p270
        $region78: #{block_forward.1} parent=63 // pred_check_branch
          %533 = sbr.rel (%p531) target = $region80
        $region79: #{block_forward.1} parent=63 // pred_region
          %s534 = smul.u32 8, %s25
          %p535 = scmp.lt.s32.totalorder %s534, 15
          %s536 = scalar_select %p535, %s534, 15
          %s537 = smul.addr %s536, 8
          %s538 = scalar_lea.vmem %s10, %s537
          %s539 = smul.u32 8, %s25
        $region80: #{block_forward.1} parent=63 // pred_fallthru
          _
        // Predicated region
        $region81: #{block_forward.1} parent=63 // pred_check
          %p540 = pneg %p296
        $region82: #{block_forward.1} parent=63 // pred_check_branch
          %542 = sbr.rel (%p540) target = $region84
        $region83: #{block_forward.1} parent=63 // pred_region
          %s543 = smul.u32 8, %s25
          %p544 = scmp.lt.s32.totalorder %s543, 15
          %s545 = scalar_select %p544, %s543, 15
          %s546 = smul.addr %s545, 8
          %s547 = scalar_lea.vmem %s11, %s546
          %s548 = smul.u32 8, %s25
        $region84: #{block_forward.1} parent=63 // pred_fallthru
          _
      $region64: #{block_forward.1} parent=5 // pred_fallthru
        _
      %p549 = scmp.le.s32.totalorder 1, %s25
      %p550 = scmp.lt.s32.totalorder %s25, 3
      %p551 = pnand %p549, %p550
      %p552 = pneg %p551
      // Predicated region
      $region85: #{block_forward.1} parent=5 // pred_check
        _
      $region86: #{block_forward.1} parent=5 // pred_check_branch
        %554 = sbr.rel (%p551) target = $region88
      $region87: #{block_forward.1} parent=5 // pred_region
        %s555 = ssub.s32 %s25, 1
        // Predicated region
        $region89: #{block_forward.1} parent=87 // pred_check
          %p556 = pneg %p46
        $region90: #{block_forward.1} parent=87 // pred_check_branch
          %558 = sbr.rel (%p556) target = $region92
        $region91: #{block_forward.1} parent=87 // pred_region
          %559 = dma.done [#allocation6], 16
        $region92: #{block_forward.1} parent=87 // pred_fallthru
          _
        // Predicated region
        $region93: #{block_forward.1} parent=87 // pred_check
          %p560 = pneg %p67
        $region94: #{block_forward.1} parent=87 // pred_check_branch
          %562 = sbr.rel (%p560) target = $region96
        $region95: #{block_forward.1} parent=87 // pred_region
          %563 = dma.done [#allocation8], 16
        $region96: #{block_forward.1} parent=87 // pred_fallthru
          _
        %564 = sfence
        %p565 = pneg %p46
        %p566 = pneg %p43
        %p567 = pneg %p67
        %p568 = pneg %p64
        %p569 = pneg %p88
        %p570 = pneg %p85
        %p571 = pneg %p109
        %p572 = pneg %p106
        %p573 = pneg %p130
        %p574 = pneg %p127
        %s575 = smul.u32 8, %s30
        %p576 = scmp.lt.s32.totalorder %s575, 15
        %s577 = scalar_select %p576, %s575, 15
        %s578 = smul.addr %s577, 8
        %s579 = scalar_lea.vmem %s5, %s578
        %p580 = pneg %p156
        %p581 = pneg %p153
        %s582 = smul.u32 8, %s30
        %p583 = scmp.lt.s32.totalorder %s582, 15
        %s584 = scalar_select %p583, %s582, 15
        %s585 = smul.addr %s584, 8
        %s586 = scalar_lea.vmem %s6, %s585
        %p587 = pneg %p182
        %p588 = pneg %p179
        %p589 = pneg %p203
        %p590 = pneg %p200
        %p591 = pneg %p224
        %p592 = pneg %p221
        %s593 = smul.u32 8, %s30
        %p594 = scmp.lt.s32.totalorder %s593, 15
        %s595 = scalar_select %p594, %s593, 15
        %s596 = smul.addr %s595, 8
        %s597 = scalar_lea.vmem %s9, %s596
        %p598 = pneg %p250
        %p599 = pneg %p247
        %s600 = smul.u32 8, %s30
        %p601 = scmp.lt.s32.totalorder %s600, 15
        %s602 = scalar_select %p601, %s600, 15
        %s603 = smul.addr %s602, 8
        %s604 = scalar_lea.vmem %s10, %s603
        %p605 = pneg %p276
        %p606 = pneg %p273
        %s607 = smul.u32 8, %s30
        %p608 = scmp.lt.s32.totalorder %s607, 15
        %s609 = scalar_select %p608, %s607, 15
        %s610 = smul.addr %s609, 8
        %s611 = scalar_lea.vmem %s11, %s610
        %p612 = pneg %p302
        %p613 = pneg %p299
        %p614 = pneg %p323
        %p615 = pneg %p320
        %p616 = pneg %p344
        %p617 = pneg %p341
        %p618 = pneg %p365
        %p619 = pneg %p362
        %p620 = pneg %p386
        %p621 = pneg %p383
        %p622 = pneg %p407
        %p623 = pneg %p404
        %p624 = pneg %p433
        %p625 = pneg %p430
        %s626 = smul.u32 8, %s30
        %p627 = scmp.lt.s32.totalorder %s626, 15
        %s628 = scalar_select %p627, %s626, 15
        %s629 = smul.addr %s628, 8
        %s630 = scalar_lea.vmem %s17, %s629
        %s631 = smul.u32 8, %s30
        %p632 = scmp.lt.s32.totalorder %s631, 15
        %s633 = scalar_select %p632, %s631, 15
        %s634 = smul.addr %s633, 8
        %s635 = scalar_lea.vmem %s5, %s634
        %s636 = smul.u32 8, %s30
        %s637 = smul.u32 8, %s30
        %p638 = scmp.lt.s32.totalorder %s637, 15
        %s639 = scalar_select %p638, %s637, 15
        %s640 = smul.addr %s639, 8
        %s641 = scalar_lea.vmem %s6, %s640
        %s642 = smul.u32 8, %s30
        %s643 = smul.u32 8, %s30
        %p644 = scmp.lt.s32.totalorder %s643, 15
        %s645 = scalar_select %p644, %s643, 15
        %s646 = smul.addr %s645, 8
        %s647 = scalar_lea.vmem %s9, %s646
        %s648 = smul.u32 8, %s30
        %s649 = smul.u32 8, %s30
        %p650 = scmp.lt.s32.totalorder %s649, 15
        %s651 = scalar_select %p650, %s649, 15
        %s652 = smul.addr %s651, 8
        %s653 = scalar_lea.vmem %s10, %s652
        %s654 = smul.u32 8, %s30
        %s655 = smul.u32 8, %s30
        %p656 = scmp.lt.s32.totalorder %s655, 15
        %s657 = scalar_select %p656, %s655, 15
        %s658 = smul.addr %s657, 8
        %s659 = scalar_lea.vmem %s11, %s658
        %s660 = smul.u32 8, %s30
        %s661 = smul.u32 8, %s30
        %p662 = scmp.lt.s32.totalorder %s661, 15
        %s663 = scalar_select %p662, %s661, 15
        %s664 = smul.addr %s663, 8
        %s665 = scalar_lea.vmem %s17, %s664
        %s666 = smul.u32 8, %s30
        %s668 = sld [smem:[#allocation5]]
        %s669 = sld [smem:[#allocation5 + $0x1]]
        %s670 = sld [smem:[#allocation7]]
        %s671 = sld [smem:[#allocation7 + $0x1]]
        %v672 = vld [vmem:[%s2] sm:$0xff]
        %v673 = vld [vmem:[%s2 + $0x8] sm:$0xff]
        %v674 = vld [vmem:[%s2 + $0x10] sm:$0xff]
        %v675 = vld [vmem:[%s2 + $0x18] sm:$0xff]
        %v676 = vld [vmem:[%s2 + $0x20] sm:$0xff]
        %v677 = vld [vmem:[%s2 + $0x28] sm:$0xff]
        %v678 = vld [vmem:[%s2 + $0x30] sm:$0xff]
        %v679 = vld [vmem:[%s2 + $0x38] sm:$0xff]
        %v680 = vld [vmem:[%s2 + $0x40] sm:$0xff]
        %v681 = vld [vmem:[%s2 + $0x48] sm:$0xff]
        %v682 = vld [vmem:[%s2 + $0x50] sm:$0xff]
        %v683 = vld [vmem:[%s2 + $0x58] sm:$0xff]
        %v684 = vld [vmem:[%s2 + $0x60] sm:$0xff]
        %v685 = vld [vmem:[%s2 + $0x68] sm:$0xff]
        %v686 = vld [vmem:[%s2 + $0x70] sm:$0xff]
        %v687 = vld [vmem:[%s2 + $0x78] sm:$0xff]
        %v688 = vstv %s668
        %v689 = vmul.f32 %v688, %v672
        %v690 = vmul.f32 %v688, %v673
        %v691 = vmul.f32 %v688, %v674
        %v692 = vmul.f32 %v688, %v675
        %v693 = vmul.f32 %v688, %v676
        %v694 = vmul.f32 %v688, %v677
        %v695 = vmul.f32 %v688, %v678
        %v696 = vmul.f32 %v688, %v679
        %v697 = vmul.f32 %v688, %v680
        %v698 = vmul.f32 %v688, %v681
        %v699 = vmul.f32 %v688, %v682
        %v700 = vmul.f32 %v688, %v683
        %v701 = vmul.f32 %v688, %v684
        %v702 = vmul.f32 %v688, %v685
        %v703 = vmul.f32 %v688, %v686
        %v704 = vmul.f32 %v688, %v687
        %v705 = vld [vmem:[%s3] sm:$0xff]
        %v706 = vld [vmem:[%s3 + $0x8] sm:$0xff]
        %v707 = vld [vmem:[%s3 + $0x10] sm:$0xff]
        %v708 = vld [vmem:[%s3 + $0x18] sm:$0xff]
        %v709 = vld [vmem:[%s3 + $0x20] sm:$0xff]
        %v710 = vld [vmem:[%s3 + $0x28] sm:$0xff]
        %v711 = vld [vmem:[%s3 + $0x30] sm:$0xff]
        %v712 = vld [vmem:[%s3 + $0x38] sm:$0xff]
        %v713 = vld [vmem:[%s3 + $0x40] sm:$0xff]
        %v714 = vld [vmem:[%s3 + $0x48] sm:$0xff]
        %v715 = vld [vmem:[%s3 + $0x50] sm:$0xff]
        %v716 = vld [vmem:[%s3 + $0x58] sm:$0xff]
        %v717 = vld [vmem:[%s3 + $0x60] sm:$0xff]
        %v718 = vld [vmem:[%s3 + $0x68] sm:$0xff]
        %v719 = vld [vmem:[%s3 + $0x70] sm:$0xff]
        %v720 = vld [vmem:[%s3 + $0x78] sm:$0xff]
        %v721 = vstv %s669
        %v722 = vmul.f32 %v721, %v705
        %v723 = vmul.f32 %v721, %v706
        %v724 = vmul.f32 %v721, %v707
        %v725 = vmul.f32 %v721, %v708
        %v726 = vmul.f32 %v721, %v709
        %v727 = vmul.f32 %v721, %v710
        %v728 = vmul.f32 %v721, %v711
        %v729 = vmul.f32 %v721, %v712
        %v730 = vmul.f32 %v721, %v713
        %v731 = vmul.f32 %v721, %v714
        %v732 = vmul.f32 %v721, %v715
        %v733 = vmul.f32 %v721, %v716
        %v734 = vmul.f32 %v721, %v717
        %v735 = vmul.f32 %v721, %v718
        %v736 = vmul.f32 %v721, %v719
        %v737 = vmul.f32 %v721, %v720
        %v738 = vadd.f32 %v689, %v722
        %v739 = vadd.f32 %v690, %v723
        %v740 = vadd.f32 %v691, %v724
        %v741 = vadd.f32 %v692, %v725
        %v742 = vadd.f32 %v693, %v726
        %v743 = vadd.f32 %v694, %v727
        %v744 = vadd.f32 %v695, %v728
        %v745 = vadd.f32 %v696, %v729
        %v746 = vadd.f32 %v697, %v730
        %v747 = vadd.f32 %v698, %v731
        %v748 = vadd.f32 %v699, %v732
        %v749 = vadd.f32 %v700, %v733
        %v750 = vadd.f32 %v701, %v734
        %v751 = vadd.f32 %v702, %v735
        %v752 = vadd.f32 %v703, %v736
        %v753 = vadd.f32 %v704, %v737
        %v754 = vmul.f32 %v738, %v738
        %v755 = vmul.f32 %v739, %v739
        %v756 = vmul.f32 %v740, %v740
        %v757 = vmul.f32 %v741, %v741
        %v758 = vmul.f32 %v742, %v742
        %v759 = vmul.f32 %v743, %v743
        %v760 = vmul.f32 %v744, %v744
        %v761 = vmul.f32 %v745, %v745
        %v762 = vmul.f32 %v746, %v746
        %v763 = vmul.f32 %v747, %v747
        %v764 = vmul.f32 %v748, %v748
        %v765 = vmul.f32 %v749, %v749
        %v766 = vmul.f32 %v750, %v750
        %v767 = vmul.f32 %v751, %v751
        %v768 = vmul.f32 %v752, %v752
        %v769 = vmul.f32 %v753, %v753
        %vm770 = vcmask 523264
        %v771 = vsel %vm770, %v754, 0.0
        %772 = vadd.xlane.f32.xlu0 %v771
        %v773 = vpop.xlane.xlu0 %772
        %v774 = vsel %vm770, %v755, 0.0
        %775 = vadd.xlane.f32.xlu0 %v774
        %v776 = vpop.xlane.xlu0 %775
        %v777 = vsel %vm770, %v756, 0.0
        %778 = vadd.xlane.f32.xlu0 %v777
        %v779 = vpop.xlane.xlu0 %778
        %v780 = vsel %vm770, %v757, 0.0
        %781 = vadd.xlane.f32.xlu0 %v780
        %v782 = vpop.xlane.xlu0 %781
        %v783 = vsel %vm770, %v758, 0.0
        %784 = vadd.xlane.f32.xlu0 %v783
        %v785 = vpop.xlane.xlu0 %784
        %v786 = vsel %vm770, %v759, 0.0
        %787 = vadd.xlane.f32.xlu0 %v786
        %v788 = vpop.xlane.xlu0 %787
        %v789 = vsel %vm770, %v760, 0.0
        %790 = vadd.xlane.f32.xlu0 %v789
        %v791 = vpop.xlane.xlu0 %790
        %v792 = vsel %vm770, %v761, 0.0
        %793 = vadd.xlane.f32.xlu0 %v792
        %v794 = vpop.xlane.xlu0 %793
        %v795 = vsel %vm770, %v762, 0.0
        %796 = vadd.xlane.f32.xlu0 %v795
        %v797 = vpop.xlane.xlu0 %796
        %v798 = vsel %vm770, %v763, 0.0
        %799 = vadd.xlane.f32.xlu0 %v798
        %v800 = vpop.xlane.xlu0 %799
        %v801 = vsel %vm770, %v764, 0.0
        %802 = vadd.xlane.f32.xlu0 %v801
        %v803 = vpop.xlane.xlu0 %802
        %v804 = vsel %vm770, %v765, 0.0
        %805 = vadd.xlane.f32.xlu0 %v804
        %v806 = vpop.xlane.xlu0 %805
        %v807 = vsel %vm770, %v766, 0.0
        %808 = vadd.xlane.f32.xlu0 %v807
        %v809 = vpop.xlane.xlu0 %808
        %v810 = vsel %vm770, %v767, 0.0
        %811 = vadd.xlane.f32.xlu0 %v810
        %v812 = vpop.xlane.xlu0 %811
        %v813 = vsel %vm770, %v768, 0.0
        %814 = vadd.xlane.f32.xlu0 %v813
        %v815 = vpop.xlane.xlu0 %814
        %v816 = vsel %vm770, %v769, 0.0
        %817 = vadd.xlane.f32.xlu0 %v816
        %v818 = vpop.xlane.xlu0 %817
        %v819 = vrcp.pop 64.0
        %v820 = vmul.f32 %v773, %v819
        %v821 = vmul.f32 %v776, %v819
        %v822 = vmul.f32 %v779, %v819
        %v823 = vmul.f32 %v782, %v819
        %v824 = vmul.f32 %v785, %v819
        %v825 = vmul.f32 %v788, %v819
        %v826 = vmul.f32 %v791, %v819
        %v827 = vmul.f32 %v794, %v819
        %v828 = vmul.f32 %v797, %v819
        %v829 = vmul.f32 %v800, %v819
        %v830 = vmul.f32 %v803, %v819
        %v831 = vmul.f32 %v806, %v819
        %v832 = vmul.f32 %v809, %v819
        %v833 = vmul.f32 %v812, %v819
        %v834 = vmul.f32 %v815, %v819
        %v835 = vmul.f32 %v818, %v819
        %v836 = vadd.f32 %v820, 1.1920929e-07
        %v837 = vadd.f32 %v821, 1.1920929e-07
        %v838 = vadd.f32 %v822, 1.1920929e-07
        %v839 = vadd.f32 %v823, 1.1920929e-07
        %v840 = vadd.f32 %v824, 1.1920929e-07
        %v841 = vadd.f32 %v825, 1.1920929e-07
        %v842 = vadd.f32 %v826, 1.1920929e-07
        %v843 = vadd.f32 %v827, 1.1920929e-07
        %v844 = vadd.f32 %v828, 1.1920929e-07
        %v845 = vadd.f32 %v829, 1.1920929e-07
        %v846 = vadd.f32 %v830, 1.1920929e-07
        %v847 = vadd.f32 %v831, 1.1920929e-07
        %v848 = vadd.f32 %v832, 1.1920929e-07
        %v849 = vadd.f32 %v833, 1.1920929e-07
        %v850 = vadd.f32 %v834, 1.1920929e-07
        %v851 = vadd.f32 %v835, 1.1920929e-07
        %v852 = vrsqrt.pop %v836
        %v853 = vrsqrt.pop %v837
        %v854 = vrsqrt.pop %v838
        %v855 = vrsqrt.pop %v839
        %v856 = vrsqrt.pop %v840
        %v857 = vrsqrt.pop %v841
        %v858 = vrsqrt.pop %v842
        %v859 = vrsqrt.pop %v843
        %v860 = vrsqrt.pop %v844
        %v861 = vrsqrt.pop %v845
        %v862 = vrsqrt.pop %v846
        %v863 = vrsqrt.pop %v847
        %v864 = vrsqrt.pop %v848
        %v865 = vrsqrt.pop %v849
        %v866 = vrsqrt.pop %v850
        %v867 = vrsqrt.pop %v851
        %v868 = vmul.f32 %v738, %v852
        %v869 = vmul.f32 %v739, %v853
        %v870 = vmul.f32 %v740, %v854
        %v871 = vmul.f32 %v741, %v855
        %v872 = vmul.f32 %v742, %v856
        %v873 = vmul.f32 %v743, %v857
        %v874 = vmul.f32 %v744, %v858
        %v875 = vmul.f32 %v745, %v859
        %v876 = vmul.f32 %v746, %v860
        %v877 = vmul.f32 %v747, %v861
        %v878 = vmul.f32 %v748, %v862
        %v879 = vmul.f32 %v749, %v863
        %v880 = vmul.f32 %v750, %v864
        %v881 = vmul.f32 %v751, %v865
        %v882 = vmul.f32 %v752, %v866
        %v883 = vmul.f32 %v753, %v867
        %v884 = vpack.c.bf16 %v869, %v868
        %v885 = vpack.c.bf16 %v871, %v870
        %v886 = vpack.c.bf16 %v873, %v872
        %v887 = vpack.c.bf16 %v875, %v874
        %v888 = vpack.c.bf16 %v877, %v876
        %v889 = vpack.c.bf16 %v879, %v878
        %v890 = vpack.c.bf16 %v881, %v880
        %v891 = vpack.c.bf16 %v883, %v882
        %v892 = vld [vmem:[%s13] sm:$0xff]
        %v893 = vld [vmem:[%s13 + $0x8] sm:$0xff]
        %v894 = vld [vmem:[%s13 + $0x10] sm:$0xff]
        %v895 = vld [vmem:[%s13 + $0x18] sm:$0xff]
        %v896 = vld [vmem:[%s13 + $0x20] sm:$0xff]
        %v897 = vld [vmem:[%s13 + $0x28] sm:$0xff]
        %v898 = vld [vmem:[%s13 + $0x30] sm:$0xff]
        %v899 = vld [vmem:[%s13 + $0x38] sm:$0xff]
        %v908 = vunpack.c.l.b16 %v892
        %v909 = vunpack.c.h.b16 %v892
        %v910 = vunpack.c.l.b16 %v893
        %v911 = vunpack.c.h.b16 %v893
        %v912 = vunpack.c.l.b16 %v894
        %v913 = vunpack.c.h.b16 %v894
        %v914 = vunpack.c.l.b16 %v895
        %v915 = vunpack.c.h.b16 %v895
        %v916 = vunpack.c.l.b16 %v896
        %v917 = vunpack.c.h.b16 %v896
        %v918 = vunpack.c.l.b16 %v897
        %v919 = vunpack.c.h.b16 %v897
        %v920 = vunpack.c.l.b16 %v898
        %v921 = vunpack.c.h.b16 %v898
        %v922 = vunpack.c.l.b16 %v899
        %v923 = vunpack.c.h.b16 %v899
        %v924 = vpack.c.b16 %v910, %v908
        %v925 = vpack.c.b16 %v911, %v909
        %v926 = vpack.c.b16 %v914, %v912
        %v927 = vpack.c.b16 %v915, %v913
        %v928 = vpack.c.b16 %v918, %v916
        %v929 = vpack.c.b16 %v919, %v917
        %v930 = vpack.c.b16 %v922, %v920
        %v931 = vpack.c.b16 %v923, %v921
        %v941 = vsel %vm770, %v884, 0
        %v944 = vsel %vm770, %v885, 0
        %v947 = vsel %vm770, %v886, 0
        %v950 = vsel %vm770, %v887, 0
        %v953 = vsel %vm770, %v888, 0
        %v956 = vsel %vm770, %v889, 0
        %v959 = vsel %vm770, %v890, 0
        %v962 = vsel %vm770, %v891, 0
        %964 = vmatprep.subr.bf16.mxu0 0
        %965 = vmatpush1.bf16.msra.mxu0 0
        %966 = vmatprep.subr.bf16.mxu0 0
        %967 = vmatpush1.bf16.msra.mxu0 0
        %968 = vmatprep.subr.bf16.mxu0 0
        %969 = vmatpush1.bf16.msra.mxu0 0
        %970 = vmatprep.subr.bf16.mxu0 0
        %971 = vmatpush1.bf16.msra.mxu0 0
        %972 = vmatprep.subr.bf16.mxu0 %v931
        %973 = vmatpush1.bf16.msra.mxu0 %v930
        %974 = vmatprep.subr.bf16.mxu0 %v929
        %975 = vmatpush1.bf16.msra.mxu0 %v928
        %976 = vmatprep.subr.bf16.mxu0 %v927
        %977 = vmatpush1.bf16.msra.mxu0 %v926
        %978 = vmatprep.subr.bf16.mxu0 %v925
        %979 = vmatpush1.bf16.msra.mxu0 %v924
        %980 = vmatprep.subr.bf16.mxu0 0
        %981 = vmatpush2.bf16.msra.mxu0 0
        %982 = vmatprep.subr.bf16.mxu0 0
        %983 = vmatpush2.bf16.msra.mxu0 0
        %984 = vmatprep.subr.bf16.mxu0 0
        %985 = vmatpush2.bf16.msra.mxu0 0
        %986 = vmatprep.subr.bf16.mxu0 0
        %987 = vmatpush2.bf16.msra.mxu0 0
        %988 = vmatprep.subr.bf16.mxu0 0
        %989 = vmatpush2.bf16.msra.mxu0 0
        %990 = vmatprep.subr.bf16.mxu0 0
        %991 = vmatpush2.bf16.msra.mxu0 0
        %992 = vmatprep.subr.bf16.mxu0 0
        %993 = vmatpush2.bf16.msra.mxu0 0
        %994 = vmatprep.subr.bf16.mxu0 0
        %995 = vmatpush2.bf16.msra.mxu0 0
        %996 = vmatprep.mubr.bf16.mxu0 0
        %997 = vmatmul.mubr.bf16.gmra.mxu0 %v941
        %v998 = vpop.f32.mrf.mxu0
        %v999 = vadd.f32 0.0, %v998
        %v1000 = vpop.f32.mrf.mxu0
        %v1001 = vadd.f32 0.0, %v1000
        %v1002 = vpop.f32.mrf.mxu0
        %v1003 = vadd.f32 0.0, %v1002
        %v1004 = vpop.f32.mrf.mxu0
        %v1005 = vadd.f32 0.0, %v1004
        %1006 = vmatprep.mubr.bf16.mxu0 0
        %1007 = vmatmul.mubr.bf16.gmra.mxu0 %v944
        %v1008 = vpop.f32.mrf.mxu0
        %v1009 = vadd.f32 0.0, %v1008
        %v1010 = vpop.f32.mrf.mxu0
        %v1011 = vadd.f32 0.0, %v1010
        %v1012 = vpop.f32.mrf.mxu0
        %v1013 = vadd.f32 0.0, %v1012
        %v1014 = vpop.f32.mrf.mxu0
        %v1015 = vadd.f32 0.0, %v1014
        %1016 = vmatprep.mubr.bf16.mxu0 0
        %1017 = vmatmul.mubr.bf16.gmra.mxu0 %v947
        %v1018 = vpop.f32.mrf.mxu0
        %v1019 = vadd.f32 0.0, %v1018
        %v1020 = vpop.f32.mrf.mxu0
        %v1021 = vadd.f32 0.0, %v1020
        %v1022 = vpop.f32.mrf.mxu0
        %v1023 = vadd.f32 0.0, %v1022
        %v1024 = vpop.f32.mrf.mxu0
        %v1025 = vadd.f32 0.0, %v1024
        %1026 = vmatprep.mubr.bf16.mxu0 0
        %1027 = vmatmul.mubr.bf16.gmra.mxu0 %v950
        %v1028 = vpop.f32.mrf.mxu0
        %v1029 = vadd.f32 0.0, %v1028
        %v1030 = vpop.f32.mrf.mxu0
        %v1031 = vadd.f32 0.0, %v1030
        %v1032 = vpop.f32.mrf.mxu0
        %v1033 = vadd.f32 0.0, %v1032
        %v1034 = vpop.f32.mrf.mxu0
        %v1035 = vadd.f32 0.0, %v1034
        %1036 = vmatprep.mubr.bf16.mxu0 0
        %1037 = vmatmul.mubr.bf16.gmra.mxu0 %v953
        %v1038 = vpop.f32.mrf.mxu0
        %v1039 = vadd.f32 0.0, %v1038
        %v1040 = vpop.f32.mrf.mxu0
        %v1041 = vadd.f32 0.0, %v1040
        %v1042 = vpop.f32.mrf.mxu0
        %v1043 = vadd.f32 0.0, %v1042
        %v1044 = vpop.f32.mrf.mxu0
        %v1045 = vadd.f32 0.0, %v1044
        %1046 = vmatprep.mubr.bf16.mxu0 0
        %1047 = vmatmul.mubr.bf16.gmra.mxu0 %v956
        %v1048 = vpop.f32.mrf.mxu0
        %v1049 = vadd.f32 0.0, %v1048
        %v1050 = vpop.f32.mrf.mxu0
        %v1051 = vadd.f32 0.0, %v1050
        %v1052 = vpop.f32.mrf.mxu0
        %v1053 = vadd.f32 0.0, %v1052
        %v1054 = vpop.f32.mrf.mxu0
        %v1055 = vadd.f32 0.0, %v1054
        %1056 = vmatprep.mubr.bf16.mxu0 0
        %1057 = vmatmul.mubr.bf16.gmra.mxu0 %v959
        %v1058 = vpop.f32.mrf.mxu0
        %v1059 = vadd.f32 0.0, %v1058
        %v1060 = vpop.f32.mrf.mxu0
        %v1061 = vadd.f32 0.0, %v1060
        %v1062 = vpop.f32.mrf.mxu0
        %v1063 = vadd.f32 0.0, %v1062
        %v1064 = vpop.f32.mrf.mxu0
        %v1065 = vadd.f32 0.0, %v1064
        %1066 = vmatprep.mubr.bf16.mxu0 0
        %1067 = vmatmul.mubr.bf16.gmra.mxu0 %v962
        %v1068 = vpop.f32.mrf.mxu0
        %v1069 = vadd.f32 0.0, %v1068
        %v1070 = vpop.f32.mrf.mxu0
        %v1071 = vadd.f32 0.0, %v1070
        %v1072 = vpop.f32.mrf.mxu0
        %v1073 = vadd.f32 0.0, %v1072
        %v1074 = vpop.f32.mrf.mxu0
        %v1075 = vadd.f32 0.0, %v1074
        %1076 = vdwg.mxu0
        %1077 = vst [vmem:[#allocation2] sm:$0xff] %v999
        %1078 = vst.msk [vmem:[#allocation2 + $0x8] sm:$0xff] %vm770, %v1001
        %1079 = vst [vmem:[#allocation2 + $0x10] sm:$0xff] %v1003
        %1080 = vst.msk [vmem:[#allocation2 + $0x18] sm:$0xff] %vm770, %v1005
        %1081 = vst [vmem:[#allocation2 + $0x20] sm:$0xff] %v1009
        %1082 = vst.msk [vmem:[#allocation2 + $0x28] sm:$0xff] %vm770, %v1011
        %1083 = vst [vmem:[#allocation2 + $0x30] sm:$0xff] %v1013
        %1084 = vst.msk [vmem:[#allocation2 + $0x38] sm:$0xff] %vm770, %v1015
        %1085 = vst [vmem:[#allocation2 + $0x40] sm:$0xff] %v1019
        %1086 = vst.msk [vmem:[#allocation2 + $0x48] sm:$0xff] %vm770, %v1021
        %1087 = vst [vmem:[#allocation2 + $0x50] sm:$0xff] %v1023
        %1088 = vst.msk [vmem:[#allocation2 + $0x58] sm:$0xff] %vm770, %v1025
        %1089 = vst [vmem:[#allocation2 + $0x60] sm:$0xff] %v1029
        %1090 = vst.msk [vmem:[#allocation2 + $0x68] sm:$0xff] %vm770, %v1031
        %1091 = vst [vmem:[#allocation2 + $0x70] sm:$0xff] %v1033
        %1092 = vst.msk [vmem:[#allocation2 + $0x78] sm:$0xff] %vm770, %v1035
        %1093 = vst [vmem:[#allocation2 + $0x80] sm:$0xff] %v1039
        %1094 = vst.msk [vmem:[#allocation2 + $0x88] sm:$0xff] %vm770, %v1041
        %1095 = vst [vmem:[#allocation2 + $0x90] sm:$0xff] %v1043
        %1096 = vst.msk [vmem:[#allocation2 + $0x98] sm:$0xff] %vm770, %v1045
        %1097 = vst [vmem:[#allocation2 + $0xa0] sm:$0xff] %v1049
        %1098 = vst.msk [vmem:[#allocation2 + $0xa8] sm:$0xff] %vm770, %v1051
        %1099 = vst [vmem:[#allocation2 + $0xb0] sm:$0xff] %v1053
        %1100 = vst.msk [vmem:[#allocation2 + $0xb8] sm:$0xff] %vm770, %v1055
        %1101 = vst [vmem:[#allocation2 + $0xc0] sm:$0xff] %v1059
        %1102 = vst.msk [vmem:[#allocation2 + $0xc8] sm:$0xff] %vm770, %v1061
        %1103 = vst [vmem:[#allocation2 + $0xd0] sm:$0xff] %v1063
        %1104 = vst.msk [vmem:[#allocation2 + $0xd8] sm:$0xff] %vm770, %v1065
        %1105 = vst [vmem:[#allocation2 + $0xe0] sm:$0xff] %v1069
        %1106 = vst.msk [vmem:[#allocation2 + $0xe8] sm:$0xff] %vm770, %v1071
        %1107 = vst [vmem:[#allocation2 + $0xf0] sm:$0xff] %v1073
        %1108 = vst.msk [vmem:[#allocation2 + $0xf8] sm:$0xff] %vm770, %v1075
        %v1109 = vld [vmem:[%s635] sm:$0xff]
        %v1110 = vld [vmem:[%s635 + $0x8] sm:$0xff]
        %v1111 = vld [vmem:[%s635 + $0x10] sm:$0xff]
        %v1112 = vld [vmem:[%s635 + $0x18] sm:$0xff]
        %v1113 = vld [vmem:[%s635 + $0x20] sm:$0xff]
        %v1114 = vld [vmem:[%s635 + $0x28] sm:$0xff]
        %v1115 = vld [vmem:[%s635 + $0x30] sm:$0xff]
        %v1116 = vld [vmem:[%s635 + $0x38] sm:$0xff]
        %v1117 = vmul.f32 %v688, %v1109
        %v1118 = vmul.f32 %v688, %v1110
        %v1119 = vmul.f32 %v688, %v1111
        %v1120 = vmul.f32 %v688, %v1112
        %v1121 = vmul.f32 %v688, %v1113
        %v1122 = vmul.f32 %v688, %v1114
        %v1123 = vmul.f32 %v688, %v1115
        %v1124 = vmul.f32 %v688, %v1116
        %v1125 = vld [vmem:[%s641] sm:$0xff]
        %v1126 = vld [vmem:[%s641 + $0x8] sm:$0xff]
        %v1127 = vld [vmem:[%s641 + $0x10] sm:$0xff]
        %v1128 = vld [vmem:[%s641 + $0x18] sm:$0xff]
        %v1129 = vld [vmem:[%s641 + $0x20] sm:$0xff]
        %v1130 = vld [vmem:[%s641 + $0x28] sm:$0xff]
        %v1131 = vld [vmem:[%s641 + $0x30] sm:$0xff]
        %v1132 = vld [vmem:[%s641 + $0x38] sm:$0xff]
        %v1133 = vmul.f32 %v721, %v1125
        %v1134 = vmul.f32 %v721, %v1126
        %v1135 = vmul.f32 %v721, %v1127
        %v1136 = vmul.f32 %v721, %v1128
        %v1137 = vmul.f32 %v721, %v1129
        %v1138 = vmul.f32 %v721, %v1130
        %v1139 = vmul.f32 %v721, %v1131
        %v1140 = vmul.f32 %v721, %v1132
        %v1141 = vadd.f32 %v1117, %v1133
        %v1142 = vadd.f32 %v1118, %v1134
        %v1143 = vadd.f32 %v1119, %v1135
        %v1144 = vadd.f32 %v1120, %v1136
        %v1145 = vadd.f32 %v1121, %v1137
        %v1146 = vadd.f32 %v1122, %v1138
        %v1147 = vadd.f32 %v1123, %v1139
        %v1148 = vadd.f32 %v1124, %v1140
        %v1149 = vmul.f32 %v1141, %v1141
        %v1150 = vmul.f32 %v1142, %v1142
        %v1151 = vmul.f32 %v1143, %v1143
        %v1152 = vmul.f32 %v1144, %v1144
        %v1153 = vmul.f32 %v1145, %v1145
        %v1154 = vmul.f32 %v1146, %v1146
        %v1155 = vmul.f32 %v1147, %v1147
        %v1156 = vmul.f32 %v1148, %v1148
        %v1157 = vsel %vm770, %v1149, 0.0
        %1158 = vadd.xlane.f32.xlu0 %v1157
        %v1159 = vpop.xlane.xlu0 %1158
        %v1160 = vsel %vm770, %v1150, 0.0
        %1161 = vadd.xlane.f32.xlu0 %v1160
        %v1162 = vpop.xlane.xlu0 %1161
        %v1163 = vsel %vm770, %v1151, 0.0
        %1164 = vadd.xlane.f32.xlu0 %v1163
        %v1165 = vpop.xlane.xlu0 %1164
        %v1166 = vsel %vm770, %v1152, 0.0
        %1167 = vadd.xlane.f32.xlu0 %v1166
        %v1168 = vpop.xlane.xlu0 %1167
        %v1169 = vsel %vm770, %v1153, 0.0
        %1170 = vadd.xlane.f32.xlu0 %v1169
        %v1171 = vpop.xlane.xlu0 %1170
        %v1172 = vsel %vm770, %v1154, 0.0
        %1173 = vadd.xlane.f32.xlu0 %v1172
        %v1174 = vpop.xlane.xlu0 %1173
        %v1175 = vsel %vm770, %v1155, 0.0
        %1176 = vadd.xlane.f32.xlu0 %v1175
        %v1177 = vpop.xlane.xlu0 %1176
        %v1178 = vsel %vm770, %v1156, 0.0
        %1179 = vadd.xlane.f32.xlu0 %v1178
        %v1180 = vpop.xlane.xlu0 %1179
        %v1181 = vmul.f32 %v1159, %v819
        %v1182 = vmul.f32 %v1162, %v819
        %v1183 = vmul.f32 %v1165, %v819
        %v1184 = vmul.f32 %v1168, %v819
        %v1185 = vmul.f32 %v1171, %v819
        %v1186 = vmul.f32 %v1174, %v819
        %v1187 = vmul.f32 %v1177, %v819
        %v1188 = vmul.f32 %v1180, %v819
        %v1189 = vadd.f32 %v1181, 1.1920929e-07
        %v1190 = vadd.f32 %v1182, 1.1920929e-07
        %v1191 = vadd.f32 %v1183, 1.1920929e-07
        %v1192 = vadd.f32 %v1184, 1.1920929e-07
        %v1193 = vadd.f32 %v1185, 1.1920929e-07
        %v1194 = vadd.f32 %v1186, 1.1920929e-07
        %v1195 = vadd.f32 %v1187, 1.1920929e-07
        %v1196 = vadd.f32 %v1188, 1.1920929e-07
        %v1197 = vrsqrt.pop %v1189
        %v1198 = vrsqrt.pop %v1190
        %v1199 = vrsqrt.pop %v1191
        %v1200 = vrsqrt.pop %v1192
        %v1201 = vrsqrt.pop %v1193
        %v1202 = vrsqrt.pop %v1194
        %v1203 = vrsqrt.pop %v1195
        %v1204 = vrsqrt.pop %v1196
        %v1205 = vmul.f32 %v1141, %v1197
        %v1206 = vmul.f32 %v1142, %v1198
        %v1207 = vmul.f32 %v1143, %v1199
        %v1208 = vmul.f32 %v1144, %v1200
        %v1209 = vmul.f32 %v1145, %v1201
        %v1210 = vmul.f32 %v1146, %v1202
        %v1211 = vmul.f32 %v1147, %v1203
        %v1212 = vmul.f32 %v1148, %v1204
        %v1213 = vpack.c.bf16 %v1206, %v1205
        %v1214 = vpack.c.bf16 %v1208, %v1207
        %v1215 = vpack.c.bf16 %v1210, %v1209
        %v1216 = vpack.c.bf16 %v1212, %v1211
        %v1217 = vld [vmem:[%s12] sm:$0xf]
        %v1218 = vld [vmem:[%s12 + $0x4] sm:$0xf]
        %v1219 = vld [vmem:[%s12 + $0x8] sm:$0xf]
        %v1220 = vld [vmem:[%s12 + $0xc] sm:$0xf]
        %v1221 = vld [vmem:[%s12 + $0x10] sm:$0xf]
        %v1222 = vld [vmem:[%s12 + $0x14] sm:$0xf]
        %v1223 = vld [vmem:[%s12 + $0x18] sm:$0xf]
        %v1224 = vld [vmem:[%s12 + $0x1c] sm:$0xf]
        %v1233 = vunpack.c.l.b16 %v1217
        %v1234 = vunpack.c.l.b16 %v1218
        %v1235 = vunpack.c.l.b16 %v1219
        %v1236 = vunpack.c.l.b16 %v1220
        %v1237 = vunpack.c.l.b16 %v1221
        %v1238 = vunpack.c.l.b16 %v1222
        %v1239 = vunpack.c.l.b16 %v1223
        %v1240 = vunpack.c.l.b16 %v1224
        %v1241 = vpack.c.b16 %v1234, %v1233
        %v1242 = vpack.c.b16 %v1236, %v1235
        %v1243 = vpack.c.b16 %v1238, %v1237
        %v1244 = vpack.c.b16 %v1240, %v1239
        %v1250 = vsel %vm770, %v1213, 0
        %v1253 = vsel %vm770, %v1214, 0
        %v1256 = vsel %vm770, %v1215, 0
        %v1259 = vsel %vm770, %v1216, 0
        %1261 = vmatprep.subr.bf16.mxu0 0
        %1262 = vmatpush1.bf16.msra.mxu0 0
        %1263 = vmatprep.subr.bf16.mxu0 0
        %1264 = vmatpush1.bf16.msra.mxu0 0
        %1265 = vmatprep.subr.bf16.mxu0 0
        %1266 = vmatpush1.bf16.msra.mxu0 0
        %1267 = vmatprep.subr.bf16.mxu0 0
        %1268 = vmatpush1.bf16.msra.mxu0 0
        %1269 = vmatprep.subr.bf16.mxu0 0
        %1270 = vmatpush1.bf16.msra.mxu0 %v1244
        %1271 = vmatprep.subr.bf16.mxu0 0
        %1272 = vmatpush1.bf16.msra.mxu0 %v1243
        %1273 = vmatprep.subr.bf16.mxu0 0
        %1274 = vmatpush1.bf16.msra.mxu0 %v1242
        %1275 = vmatprep.subr.bf16.mxu0 0
        %1276 = vmatpush1.bf16.msra.mxu0 %v1241
        %1277 = vmatprep.subr.bf16.mxu0 0
        %1278 = vmatpush2.bf16.msra.mxu0 0
        %1279 = vmatprep.subr.bf16.mxu0 0
        %1280 = vmatpush2.bf16.msra.mxu0 0
        %1281 = vmatprep.subr.bf16.mxu0 0
        %1282 = vmatpush2.bf16.msra.mxu0 0
        %1283 = vmatprep.subr.bf16.mxu0 0
        %1284 = vmatpush2.bf16.msra.mxu0 0
        %1285 = vmatprep.subr.bf16.mxu0 0
        %1286 = vmatpush2.bf16.msra.mxu0 0
        %1287 = vmatprep.subr.bf16.mxu0 0
        %1288 = vmatpush2.bf16.msra.mxu0 0
        %1289 = vmatprep.subr.bf16.mxu0 0
        %1290 = vmatpush2.bf16.msra.mxu0 0
        %1291 = vmatprep.subr.bf16.mxu0 0
        %1292 = vmatpush2.bf16.msra.mxu0 0
        %1293 = vmatprep.mubr.bf16.mxu0 0
        %1294 = vmatmul.mubr.bf16.gmra.mxu0 %v1250
        %v1295 = vpop.f32.mrf.mxu0
        %v1296 = vadd.f32 0.0, %v1295
        %v1297 = vpop.f32.mrf.mxu0
        %v1298 = vpop.f32.mrf.mxu0
        %v1299 = vadd.f32 0.0, %v1298
        %v1300 = vpop.f32.mrf.mxu0
        %1301 = vmatprep.mubr.bf16.mxu0 0
        %1302 = vmatmul.mubr.bf16.gmra.mxu0 %v1253
        %v1303 = vpop.f32.mrf.mxu0
        %v1304 = vadd.f32 0.0, %v1303
        %v1305 = vpop.f32.mrf.mxu0
        %v1306 = vpop.f32.mrf.mxu0
        %v1307 = vadd.f32 0.0, %v1306
        %v1308 = vpop.f32.mrf.mxu0
        %1309 = vmatprep.mubr.bf16.mxu0 0
        %1310 = vmatmul.mubr.bf16.gmra.mxu0 %v1256
        %v1311 = vpop.f32.mrf.mxu0
        %v1312 = vadd.f32 0.0, %v1311
        %v1313 = vpop.f32.mrf.mxu0
        %v1314 = vpop.f32.mrf.mxu0
        %v1315 = vadd.f32 0.0, %v1314
        %v1316 = vpop.f32.mrf.mxu0
        %1317 = vmatprep.mubr.bf16.mxu0 0
        %1318 = vmatmul.mubr.bf16.gmra.mxu0 %v1259
        %v1319 = vpop.f32.mrf.mxu0
        %v1320 = vadd.f32 0.0, %v1319
        %v1321 = vpop.f32.mrf.mxu0
        %v1322 = vpop.f32.mrf.mxu0
        %v1323 = vadd.f32 0.0, %v1322
        %v1324 = vpop.f32.mrf.mxu0
        %1325 = vdwg.mxu0
        %1326 = vst [vmem:[#allocation3] sm:$0xff] %v1296
        %1327 = vst [vmem:[#allocation3 + $0x8] sm:$0xff] %v1299
        %1328 = vst [vmem:[#allocation3 + $0x10] sm:$0xff] %v1304
        %1329 = vst [vmem:[#allocation3 + $0x18] sm:$0xff] %v1307
        %1330 = vst [vmem:[#allocation3 + $0x20] sm:$0xff] %v1312
        %1331 = vst [vmem:[#allocation3 + $0x28] sm:$0xff] %v1315
        %1332 = vst [vmem:[#allocation3 + $0x30] sm:$0xff] %v1320
        %1333 = vst [vmem:[#allocation3 + $0x38] sm:$0xff] %v1323
        %v1334 = vld [vmem:[#allocation3] sm:$0xff]
        %v1335 = vld [vmem:[#allocation3 + $0x8] sm:$0xff]
        %v1336 = vld [vmem:[#allocation3 + $0x10] sm:$0xff]
        %v1337 = vld [vmem:[#allocation3 + $0x18] sm:$0xff]
        %v1338 = vld [vmem:[#allocation3 + $0x20] sm:$0xff]
        %v1339 = vld [vmem:[#allocation3 + $0x28] sm:$0xff]
        %v1340 = vld [vmem:[#allocation3 + $0x30] sm:$0xff]
        %v1341 = vld [vmem:[#allocation3 + $0x38] sm:$0xff]
        %v1342 = vld [vmem:[%s647] sm:$0xff]
        %v1343 = vld [vmem:[%s647 + $0x8] sm:$0xff]
        %v1344 = vld [vmem:[%s647 + $0x10] sm:$0xff]
        %v1345 = vld [vmem:[%s647 + $0x18] sm:$0xff]
        %v1346 = vld [vmem:[%s647 + $0x20] sm:$0xff]
        %v1347 = vld [vmem:[%s647 + $0x28] sm:$0xff]
        %v1348 = vld [vmem:[%s647 + $0x30] sm:$0xff]
        %v1349 = vld [vmem:[%s647 + $0x38] sm:$0xff]
        %v1350 = vmul.f32 %v1334, %v1342
        %v1351 = vmul.f32 %v1335, %v1343
        %v1352 = vmul.f32 %v1336, %v1344
        %v1353 = vmul.f32 %v1337, %v1345
        %v1354 = vmul.f32 %v1338, %v1346
        %v1355 = vmul.f32 %v1339, %v1347
        %v1356 = vmul.f32 %v1340, %v1348
        %v1357 = vmul.f32 %v1341, %v1349
        %v1358 = vld [vmem:[%s653] sm:$0xff]
        %v1359 = vld [vmem:[%s653 + $0x8] sm:$0xff]
        %v1360 = vld [vmem:[%s653 + $0x10] sm:$0xff]
        %v1361 = vld [vmem:[%s653 + $0x18] sm:$0xff]
        %v1362 = vld [vmem:[%s653 + $0x20] sm:$0xff]
        %v1363 = vld [vmem:[%s653 + $0x28] sm:$0xff]
        %v1364 = vld [vmem:[%s653 + $0x30] sm:$0xff]
        %v1365 = vld [vmem:[%s653 + $0x38] sm:$0xff]
        %1374 = vrot.lane.b32.xlu0 %v1358, 64
        %v1375 = vpop.permute.xlu0 %1374
        %1376 = vrot.lane.b32.xlu0 %v1359, 64
        %v1377 = vpop.permute.xlu0 %1376
        %1378 = vrot.lane.b32.xlu0 %v1360, 64
        %v1379 = vpop.permute.xlu0 %1378
        %1380 = vrot.lane.b32.xlu0 %v1361, 64
        %v1381 = vpop.permute.xlu0 %1380
        %1382 = vrot.lane.b32.xlu0 %v1362, 64
        %v1383 = vpop.permute.xlu0 %1382
        %1384 = vrot.lane.b32.xlu0 %v1363, 64
        %v1385 = vpop.permute.xlu0 %1384
        %1386 = vrot.lane.b32.xlu0 %v1364, 64
        %v1387 = vpop.permute.xlu0 %1386
        %1388 = vrot.lane.b32.xlu0 %v1365, 64
        %v1389 = vpop.permute.xlu0 %1388
        %v1398 = vmul.f32 %v1334, %v1375
        %v1399 = vmul.f32 %v1335, %v1377
        %v1400 = vmul.f32 %v1336, %v1379
        %v1401 = vmul.f32 %v1337, %v1381
        %v1402 = vmul.f32 %v1338, %v1383
        %v1403 = vmul.f32 %v1339, %v1385
        %v1404 = vmul.f32 %v1340, %v1387
        %v1405 = vmul.f32 %v1341, %v1389
        %1414 = vrot.lane.b32.xlu0 %v1398, 64
        %v1415 = vpop.permute.xlu0 %1414
        %1416 = vrot.lane.b32.xlu0 %v1399, 64
        %v1417 = vpop.permute.xlu0 %1416
        %1418 = vrot.lane.b32.xlu0 %v1400, 64
        %v1419 = vpop.permute.xlu0 %1418
        %1420 = vrot.lane.b32.xlu0 %v1401, 64
        %v1421 = vpop.permute.xlu0 %1420
        %1422 = vrot.lane.b32.xlu0 %v1402, 64
        %v1423 = vpop.permute.xlu0 %1422
        %1424 = vrot.lane.b32.xlu0 %v1403, 64
        %v1425 = vpop.permute.xlu0 %1424
        %1426 = vrot.lane.b32.xlu0 %v1404, 64
        %v1427 = vpop.permute.xlu0 %1426
        %1428 = vrot.lane.b32.xlu0 %v1405, 64
        %v1429 = vpop.permute.xlu0 %1428
        %v1438 = vadd.f32 %v1350, %v1415
        %v1439 = vadd.f32 %v1351, %v1417
        %v1440 = vadd.f32 %v1352, %v1419
        %v1441 = vadd.f32 %v1353, %v1421
        %v1442 = vadd.f32 %v1354, %v1423
        %v1443 = vadd.f32 %v1355, %v1425
        %v1444 = vadd.f32 %v1356, %v1427
        %v1445 = vadd.f32 %v1357, %v1429
        %v1446 = vmul.f32 %v1334, %v1334
        %v1447 = vmul.f32 %v1335, %v1335
        %v1448 = vmul.f32 %v1336, %v1336
        %v1449 = vmul.f32 %v1337, %v1337
        %v1450 = vmul.f32 %v1338, %v1338
        %v1451 = vmul.f32 %v1339, %v1339
        %v1452 = vmul.f32 %v1340, %v1340
        %v1453 = vmul.f32 %v1341, %v1341
        %vm1454 = vcmask 261120
        %v1455 = vsel %vm1454, %v1446, 0.0
        %1456 = vadd.xlane.f32.xlu0 %v1455
        %v1457 = vpop.xlane.xlu0 %1456
        %v1458 = vsel %vm1454, %v1447, 0.0
        %1459 = vadd.xlane.f32.xlu0 %v1458
        %v1460 = vpop.xlane.xlu0 %1459
        %v1461 = vsel %vm1454, %v1448, 0.0
        %1462 = vadd.xlane.f32.xlu0 %v1461
        %v1463 = vpop.xlane.xlu0 %1462
        %v1464 = vsel %vm1454, %v1449, 0.0
        %1465 = vadd.xlane.f32.xlu0 %v1464
        %v1466 = vpop.xlane.xlu0 %1465
        %v1467 = vsel %vm1454, %v1450, 0.0
        %1468 = vadd.xlane.f32.xlu0 %v1467
        %v1469 = vpop.xlane.xlu0 %1468
        %v1470 = vsel %vm1454, %v1451, 0.0
        %1471 = vadd.xlane.f32.xlu0 %v1470
        %v1472 = vpop.xlane.xlu0 %1471
        %v1473 = vsel %vm1454, %v1452, 0.0
        %1474 = vadd.xlane.f32.xlu0 %v1473
        %v1475 = vpop.xlane.xlu0 %1474
        %v1476 = vsel %vm1454, %v1453, 0.0
        %1477 = vadd.xlane.f32.xlu0 %v1476
        %v1478 = vpop.xlane.xlu0 %1477
        %v1479 = vrcp.pop 32.0
        %v1480 = vmul.f32 %v1457, %v1479
        %v1481 = vmul.f32 %v1460, %v1479
        %v1482 = vmul.f32 %v1463, %v1479
        %v1483 = vmul.f32 %v1466, %v1479
        %v1484 = vmul.f32 %v1469, %v1479
        %v1485 = vmul.f32 %v1472, %v1479
        %v1486 = vmul.f32 %v1475, %v1479
        %v1487 = vmul.f32 %v1478, %v1479
        %v1488 = vadd.f32 %v1480, 1.1920929e-07
        %v1489 = vadd.f32 %v1481, 1.1920929e-07
        %v1490 = vadd.f32 %v1482, 1.1920929e-07
        %v1491 = vadd.f32 %v1483, 1.1920929e-07
        %v1492 = vadd.f32 %v1484, 1.1920929e-07
        %v1493 = vadd.f32 %v1485, 1.1920929e-07
        %v1494 = vadd.f32 %v1486, 1.1920929e-07
        %v1495 = vadd.f32 %v1487, 1.1920929e-07
        %v1496 = vrsqrt.pop %v1488
        %v1497 = vrsqrt.pop %v1489
        %v1498 = vrsqrt.pop %v1490
        %v1499 = vrsqrt.pop %v1491
        %v1500 = vrsqrt.pop %v1492
        %v1501 = vrsqrt.pop %v1493
        %v1502 = vrsqrt.pop %v1494
        %v1503 = vrsqrt.pop %v1495
        %v1504 = vmul.f32 %v1496, 0.17677669
        %v1505 = vmul.f32 %v1497, 0.17677669
        %v1506 = vmul.f32 %v1498, 0.17677669
        %v1507 = vmul.f32 %v1499, 0.17677669
        %v1508 = vmul.f32 %v1500, 0.17677669
        %v1509 = vmul.f32 %v1501, 0.17677669
        %v1510 = vmul.f32 %v1502, 0.17677669
        %v1511 = vmul.f32 %v1503, 0.17677669
        %v1512 = vmul.f32 %v1438, %v1504
        %v1513 = vmul.f32 %v1439, %v1505
        %v1514 = vmul.f32 %v1440, %v1506
        %v1515 = vmul.f32 %v1441, %v1507
        %v1516 = vmul.f32 %v1442, %v1508
        %v1517 = vmul.f32 %v1443, %v1509
        %v1518 = vmul.f32 %v1444, %v1510
        %v1519 = vmul.f32 %v1445, %v1511
        %v1520 = vld [vmem:[#allocation2] sm:$0xff]
        %v1521 = vld [vmem:[#allocation2 + $0x10] sm:$0xff]
        %v1522 = vld [vmem:[#allocation2 + $0x20] sm:$0xff]
        %v1523 = vld [vmem:[#allocation2 + $0x30] sm:$0xff]
        %v1524 = vld [vmem:[#allocation2 + $0x40] sm:$0xff]
        %v1525 = vld [vmem:[#allocation2 + $0x50] sm:$0xff]
        %v1526 = vld [vmem:[#allocation2 + $0x60] sm:$0xff]
        %v1527 = vld [vmem:[#allocation2 + $0x70] sm:$0xff]
        %v1528 = vld [vmem:[#allocation2 + $0x80] sm:$0xff]
        %v1529 = vld [vmem:[#allocation2 + $0x90] sm:$0xff]
        %v1530 = vld [vmem:[#allocation2 + $0xa0] sm:$0xff]
        %v1531 = vld [vmem:[#allocation2 + $0xb0] sm:$0xff]
        %v1532 = vld [vmem:[#allocation2 + $0xc0] sm:$0xff]
        %v1533 = vld [vmem:[#allocation2 + $0xd0] sm:$0xff]
        %v1534 = vld [vmem:[#allocation2 + $0xe0] sm:$0xff]
        %v1535 = vld [vmem:[#allocation2 + $0xf0] sm:$0xff]
        %v1536 = vld [vmem:[%s7] sm:$0xff]
        %v1537 = vld [vmem:[%s7 + $0x8] sm:$0xff]
        %v1538 = vld [vmem:[%s7 + $0x10] sm:$0xff]
        %v1539 = vld [vmem:[%s7 + $0x18] sm:$0xff]
        %v1540 = vld [vmem:[%s7 + $0x20] sm:$0xff]
        %v1541 = vld [vmem:[%s7 + $0x28] sm:$0xff]
        %v1542 = vld [vmem:[%s7 + $0x30] sm:$0xff]
        %v1543 = vld [vmem:[%s7 + $0x38] sm:$0xff]
        %v1544 = vld [vmem:[%s7 + $0x40] sm:$0xff]
        %v1545 = vld [vmem:[%s7 + $0x48] sm:$0xff]
        %v1546 = vld [vmem:[%s7 + $0x50] sm:$0xff]
        %v1547 = vld [vmem:[%s7 + $0x58] sm:$0xff]
        %v1548 = vld [vmem:[%s7 + $0x60] sm:$0xff]
        %v1549 = vld [vmem:[%s7 + $0x68] sm:$0xff]
        %v1550 = vld [vmem:[%s7 + $0x70] sm:$0xff]
        %v1551 = vld [vmem:[%s7 + $0x78] sm:$0xff]
        %v1552 = vmul.f32 %v1520, %v1536
        %v1553 = vmul.f32 %v1521, %v1537
        %v1554 = vmul.f32 %v1522, %v1538
        %v1555 = vmul.f32 %v1523, %v1539
        %v1556 = vmul.f32 %v1524, %v1540
        %v1557 = vmul.f32 %v1525, %v1541
        %v1558 = vmul.f32 %v1526, %v1542
        %v1559 = vmul.f32 %v1527, %v1543
        %v1560 = vmul.f32 %v1528, %v1544
        %v1561 = vmul.f32 %v1529, %v1545
        %v1562 = vmul.f32 %v1530, %v1546
        %v1563 = vmul.f32 %v1531, %v1547
        %v1564 = vmul.f32 %v1532, %v1548
        %v1565 = vmul.f32 %v1533, %v1549
        %v1566 = vmul.f32 %v1534, %v1550
        %v1567 = vmul.f32 %v1535, %v1551
        %v1568 = vld [vmem:[%s8] sm:$0xff]
        %v1569 = vld [vmem:[%s8 + $0x8] sm:$0xff]
        %v1570 = vld [vmem:[%s8 + $0x10] sm:$0xff]
        %v1571 = vld [vmem:[%s8 + $0x18] sm:$0xff]
        %v1572 = vld [vmem:[%s8 + $0x20] sm:$0xff]
        %v1573 = vld [vmem:[%s8 + $0x28] sm:$0xff]
        %v1574 = vld [vmem:[%s8 + $0x30] sm:$0xff]
        %v1575 = vld [vmem:[%s8 + $0x38] sm:$0xff]
        %v1576 = vld [vmem:[%s8 + $0x40] sm:$0xff]
        %v1577 = vld [vmem:[%s8 + $0x48] sm:$0xff]
        %v1578 = vld [vmem:[%s8 + $0x50] sm:$0xff]
        %v1579 = vld [vmem:[%s8 + $0x58] sm:$0xff]
        %v1580 = vld [vmem:[%s8 + $0x60] sm:$0xff]
        %v1581 = vld [vmem:[%s8 + $0x68] sm:$0xff]
        %v1582 = vld [vmem:[%s8 + $0x70] sm:$0xff]
        %v1583 = vld [vmem:[%s8 + $0x78] sm:$0xff]
        %1600 = vrot.lane.b32.xlu0 %v1568, 64
        %v1601 = vpop.permute.xlu0 %1600
        %1602 = vrot.lane.b32.xlu0 %v1569, 64
        %v1603 = vpop.permute.xlu0 %1602
        %1604 = vrot.lane.b32.xlu0 %v1570, 64
        %v1605 = vpop.permute.xlu0 %1604
        %1606 = vrot.lane.b32.xlu0 %v1571, 64
        %v1607 = vpop.permute.xlu0 %1606
        %1608 = vrot.lane.b32.xlu0 %v1572, 64
        %v1609 = vpop.permute.xlu0 %1608
        %1610 = vrot.lane.b32.xlu0 %v1573, 64
        %v1611 = vpop.permute.xlu0 %1610
        %1612 = vrot.lane.b32.xlu0 %v1574, 64
        %v1613 = vpop.permute.xlu0 %1612
        %1614 = vrot.lane.b32.xlu0 %v1575, 64
        %v1615 = vpop.permute.xlu0 %1614
        %1616 = vrot.lane.b32.xlu0 %v1576, 64
        %v1617 = vpop.permute.xlu0 %1616
        %1618 = vrot.lane.b32.xlu0 %v1577, 64
        %v1619 = vpop.permute.xlu0 %1618
        %1620 = vrot.lane.b32.xlu0 %v1578, 64
        %v1621 = vpop.permute.xlu0 %1620
        %1622 = vrot.lane.b32.xlu0 %v1579, 64
        %v1623 = vpop.permute.xlu0 %1622
        %1624 = vrot.lane.b32.xlu0 %v1580, 64
        %v1625 = vpop.permute.xlu0 %1624
        %1626 = vrot.lane.b32.xlu0 %v1581, 64
        %v1627 = vpop.permute.xlu0 %1626
        %1628 = vrot.lane.b32.xlu0 %v1582, 64
        %v1629 = vpop.permute.xlu0 %1628
        %1630 = vrot.lane.b32.xlu0 %v1583, 64
        %v1631 = vpop.permute.xlu0 %1630
        %v1648 = vmul.f32 %v1520, %v1601
        %v1649 = vmul.f32 %v1521, %v1603
        %v1650 = vmul.f32 %v1522, %v1605
        %v1651 = vmul.f32 %v1523, %v1607
        %v1652 = vmul.f32 %v1524, %v1609
        %v1653 = vmul.f32 %v1525, %v1611
        %v1654 = vmul.f32 %v1526, %v1613
        %v1655 = vmul.f32 %v1527, %v1615
        %v1656 = vmul.f32 %v1528, %v1617
        %v1657 = vmul.f32 %v1529, %v1619
        %v1658 = vmul.f32 %v1530, %v1621
        %v1659 = vmul.f32 %v1531, %v1623
        %v1660 = vmul.f32 %v1532, %v1625
        %v1661 = vmul.f32 %v1533, %v1627
        %v1662 = vmul.f32 %v1534, %v1629
        %v1663 = vmul.f32 %v1535, %v1631
        %1680 = vrot.lane.b32.xlu0 %v1648, 64
        %v1681 = vpop.permute.xlu0 %1680
        %1682 = vrot.lane.b32.xlu0 %v1649, 64
        %v1683 = vpop.permute.xlu0 %1682
        %1684 = vrot.lane.b32.xlu0 %v1650, 64
        %v1685 = vpop.permute.xlu0 %1684
        %1686 = vrot.lane.b32.xlu0 %v1651, 64
        %v1687 = vpop.permute.xlu0 %1686
        %1688 = vrot.lane.b32.xlu0 %v1652, 64
        %v1689 = vpop.permute.xlu0 %1688
        %1690 = vrot.lane.b32.xlu0 %v1653, 64
        %v1691 = vpop.permute.xlu0 %1690
        %1692 = vrot.lane.b32.xlu0 %v1654, 64
        %v1693 = vpop.permute.xlu0 %1692
        %1694 = vrot.lane.b32.xlu0 %v1655, 64
        %v1695 = vpop.permute.xlu0 %1694
        %1696 = vrot.lane.b32.xlu0 %v1656, 64
        %v1697 = vpop.permute.xlu0 %1696
        %1698 = vrot.lane.b32.xlu0 %v1657, 64
        %v1699 = vpop.permute.xlu0 %1698
        %1700 = vrot.lane.b32.xlu0 %v1658, 64
        %v1701 = vpop.permute.xlu0 %1700
        %1702 = vrot.lane.b32.xlu0 %v1659, 64
        %v1703 = vpop.permute.xlu0 %1702
        %1704 = vrot.lane.b32.xlu0 %v1660, 64
        %v1705 = vpop.permute.xlu0 %1704
        %1706 = vrot.lane.b32.xlu0 %v1661, 64
        %v1707 = vpop.permute.xlu0 %1706
        %1708 = vrot.lane.b32.xlu0 %v1662, 64
        %v1709 = vpop.permute.xlu0 %1708
        %1710 = vrot.lane.b32.xlu0 %v1663, 64
        %v1711 = vpop.permute.xlu0 %1710
        %v1728 = vadd.f32 %v1552, %v1681
        %v1729 = vadd.f32 %v1553, %v1683
        %v1730 = vadd.f32 %v1554, %v1685
        %v1731 = vadd.f32 %v1555, %v1687
        %v1732 = vadd.f32 %v1556, %v1689
        %v1733 = vadd.f32 %v1557, %v1691
        %v1734 = vadd.f32 %v1558, %v1693
        %v1735 = vadd.f32 %v1559, %v1695
        %v1736 = vadd.f32 %v1560, %v1697
        %v1737 = vadd.f32 %v1561, %v1699
        %v1738 = vadd.f32 %v1562, %v1701
        %v1739 = vadd.f32 %v1563, %v1703
        %v1740 = vadd.f32 %v1564, %v1705
        %v1741 = vadd.f32 %v1565, %v1707
        %v1742 = vadd.f32 %v1566, %v1709
        %v1743 = vadd.f32 %v1567, %v1711
        %v1744 = vmul.f32 %v1520, %v1520
        %v1745 = vmul.f32 %v1521, %v1521
        %v1746 = vmul.f32 %v1522, %v1522
        %v1747 = vmul.f32 %v1523, %v1523
        %v1748 = vmul.f32 %v1524, %v1524
        %v1749 = vmul.f32 %v1525, %v1525
        %v1750 = vmul.f32 %v1526, %v1526
        %v1751 = vmul.f32 %v1527, %v1527
        %v1752 = vmul.f32 %v1528, %v1528
        %v1753 = vmul.f32 %v1529, %v1529
        %v1754 = vmul.f32 %v1530, %v1530
        %v1755 = vmul.f32 %v1531, %v1531
        %v1756 = vmul.f32 %v1532, %v1532
        %v1757 = vmul.f32 %v1533, %v1533
        %v1758 = vmul.f32 %v1534, %v1534
        %v1759 = vmul.f32 %v1535, %v1535
        %v1760 = vsel %vm1454, %v1744, 0.0
        %1761 = vadd.xlane.f32.xlu0 %v1760
        %v1762 = vpop.xlane.xlu0 %1761
        %v1763 = vsel %vm1454, %v1745, 0.0
        %1764 = vadd.xlane.f32.xlu0 %v1763
        %v1765 = vpop.xlane.xlu0 %1764
        %v1766 = vsel %vm1454, %v1746, 0.0
        %1767 = vadd.xlane.f32.xlu0 %v1766
        %v1768 = vpop.xlane.xlu0 %1767
        %v1769 = vsel %vm1454, %v1747, 0.0
        %1770 = vadd.xlane.f32.xlu0 %v1769
        %v1771 = vpop.xlane.xlu0 %1770
        %v1772 = vsel %vm1454, %v1748, 0.0
        %1773 = vadd.xlane.f32.xlu0 %v1772
        %v1774 = vpop.xlane.xlu0 %1773
        %v1775 = vsel %vm1454, %v1749, 0.0
        %1776 = vadd.xlane.f32.xlu0 %v1775
        %v1777 = vpop.xlane.xlu0 %1776
        %v1778 = vsel %vm1454, %v1750, 0.0
        %1779 = vadd.xlane.f32.xlu0 %v1778
        %v1780 = vpop.xlane.xlu0 %1779
        %v1781 = vsel %vm1454, %v1751, 0.0
        %1782 = vadd.xlane.f32.xlu0 %v1781
        %v1783 = vpop.xlane.xlu0 %1782
        %v1784 = vsel %vm1454, %v1752, 0.0
        %1785 = vadd.xlane.f32.xlu0 %v1784
        %v1786 = vpop.xlane.xlu0 %1785
        %v1787 = vsel %vm1454, %v1753, 0.0
        %1788 = vadd.xlane.f32.xlu0 %v1787
        %v1789 = vpop.xlane.xlu0 %1788
        %v1790 = vsel %vm1454, %v1754, 0.0
        %1791 = vadd.xlane.f32.xlu0 %v1790
        %v1792 = vpop.xlane.xlu0 %1791
        %v1793 = vsel %vm1454, %v1755, 0.0
        %1794 = vadd.xlane.f32.xlu0 %v1793
        %v1795 = vpop.xlane.xlu0 %1794
        %v1796 = vsel %vm1454, %v1756, 0.0
        %1797 = vadd.xlane.f32.xlu0 %v1796
        %v1798 = vpop.xlane.xlu0 %1797
        %v1799 = vsel %vm1454, %v1757, 0.0
        %1800 = vadd.xlane.f32.xlu0 %v1799
        %v1801 = vpop.xlane.xlu0 %1800
        %v1802 = vsel %vm1454, %v1758, 0.0
        %1803 = vadd.xlane.f32.xlu0 %v1802
        %v1804 = vpop.xlane.xlu0 %1803
        %v1805 = vsel %vm1454, %v1759, 0.0
        %1806 = vadd.xlane.f32.xlu0 %v1805
        %v1807 = vpop.xlane.xlu0 %1806
        %v1808 = vmul.f32 %v1762, %v1479
        %v1809 = vmul.f32 %v1765, %v1479
        %v1810 = vmul.f32 %v1768, %v1479
        %v1811 = vmul.f32 %v1771, %v1479
        %v1812 = vmul.f32 %v1774, %v1479
        %v1813 = vmul.f32 %v1777, %v1479
        %v1814 = vmul.f32 %v1780, %v1479
        %v1815 = vmul.f32 %v1783, %v1479
        %v1816 = vmul.f32 %v1786, %v1479
        %v1817 = vmul.f32 %v1789, %v1479
        %v1818 = vmul.f32 %v1792, %v1479
        %v1819 = vmul.f32 %v1795, %v1479
        %v1820 = vmul.f32 %v1798, %v1479
        %v1821 = vmul.f32 %v1801, %v1479
        %v1822 = vmul.f32 %v1804, %v1479
        %v1823 = vmul.f32 %v1807, %v1479
        %v1824 = vadd.f32 %v1808, 1.1920929e-07
        %v1825 = vadd.f32 %v1809, 1.1920929e-07
        %v1826 = vadd.f32 %v1810, 1.1920929e-07
        %v1827 = vadd.f32 %v1811, 1.1920929e-07
        %v1828 = vadd.f32 %v1812, 1.1920929e-07
        %v1829 = vadd.f32 %v1813, 1.1920929e-07
        %v1830 = vadd.f32 %v1814, 1.1920929e-07
        %v1831 = vadd.f32 %v1815, 1.1920929e-07
        %v1832 = vadd.f32 %v1816, 1.1920929e-07
        %v1833 = vadd.f32 %v1817, 1.1920929e-07
        %v1834 = vadd.f32 %v1818, 1.1920929e-07
        %v1835 = vadd.f32 %v1819, 1.1920929e-07
        %v1836 = vadd.f32 %v1820, 1.1920929e-07
        %v1837 = vadd.f32 %v1821, 1.1920929e-07
        %v1838 = vadd.f32 %v1822, 1.1920929e-07
        %v1839 = vadd.f32 %v1823, 1.1920929e-07
        %v1840 = vrsqrt.pop %v1824
        %v1841 = vrsqrt.pop %v1825
        %v1842 = vrsqrt.pop %v1826
        %v1843 = vrsqrt.pop %v1827
        %v1844 = vrsqrt.pop %v1828
        %v1845 = vrsqrt.pop %v1829
        %v1846 = vrsqrt.pop %v1830
        %v1847 = vrsqrt.pop %v1831
        %v1848 = vrsqrt.pop %v1832
        %v1849 = vrsqrt.pop %v1833
        %v1850 = vrsqrt.pop %v1834
        %v1851 = vrsqrt.pop %v1835
        %v1852 = vrsqrt.pop %v1836
        %v1853 = vrsqrt.pop %v1837
        %v1854 = vrsqrt.pop %v1838
        %v1855 = vrsqrt.pop %v1839
        %v1856 = vmul.f32 %v1728, %v1840
        %v1857 = vmul.f32 %v1729, %v1841
        %v1858 = vmul.f32 %v1730, %v1842
        %v1859 = vmul.f32 %v1731, %v1843
        %v1860 = vmul.f32 %v1732, %v1844
        %v1861 = vmul.f32 %v1733, %v1845
        %v1862 = vmul.f32 %v1734, %v1846
        %v1863 = vmul.f32 %v1735, %v1847
        %v1864 = vmul.f32 %v1736, %v1848
        %v1865 = vmul.f32 %v1737, %v1849
        %v1866 = vmul.f32 %v1738, %v1850
        %v1867 = vmul.f32 %v1739, %v1851
        %v1868 = vmul.f32 %v1740, %v1852
        %v1869 = vmul.f32 %v1741, %v1853
        %v1870 = vmul.f32 %v1742, %v1854
        %v1871 = vmul.f32 %v1743, %v1855
        %v1872 = vld [vmem:[#allocation2 + $0x8] sm:$0xff]
        %v1873 = vld [vmem:[#allocation2 + $0x18] sm:$0xff]
        %v1874 = vld [vmem:[#allocation2 + $0x28] sm:$0xff]
        %v1875 = vld [vmem:[#allocation2 + $0x38] sm:$0xff]
        %v1876 = vld [vmem:[#allocation2 + $0x48] sm:$0xff]
        %v1877 = vld [vmem:[#allocation2 + $0x58] sm:$0xff]
        %v1878 = vld [vmem:[#allocation2 + $0x68] sm:$0xff]
        %v1879 = vld [vmem:[#allocation2 + $0x78] sm:$0xff]
        %v1880 = vld [vmem:[#allocation2 + $0x88] sm:$0xff]
        %v1881 = vld [vmem:[#allocation2 + $0x98] sm:$0xff]
        %v1882 = vld [vmem:[#allocation2 + $0xa8] sm:$0xff]
        %v1883 = vld [vmem:[#allocation2 + $0xb8] sm:$0xff]
        %v1884 = vld [vmem:[#allocation2 + $0xc8] sm:$0xff]
        %v1885 = vld [vmem:[#allocation2 + $0xd8] sm:$0xff]
        %v1886 = vld [vmem:[#allocation2 + $0xe8] sm:$0xff]
        %v1887 = vld [vmem:[#allocation2 + $0xf8] sm:$0xff]
        %v1888 = vstv %s670
        %v1889 = vmul.f32 %v1888, %v1872
        %v1890 = vmul.f32 %v1888, %v1873
        %v1891 = vmul.f32 %v1888, %v1874
        %v1892 = vmul.f32 %v1888, %v1875
        %v1893 = vmul.f32 %v1888, %v1876
        %v1894 = vmul.f32 %v1888, %v1877
        %v1895 = vmul.f32 %v1888, %v1878
        %v1896 = vmul.f32 %v1888, %v1879
        %v1897 = vmul.f32 %v1888, %v1880
        %v1898 = vmul.f32 %v1888, %v1881
        %v1899 = vmul.f32 %v1888, %v1882
        %v1900 = vmul.f32 %v1888, %v1883
        %v1901 = vmul.f32 %v1888, %v1884
        %v1902 = vmul.f32 %v1888, %v1885
        %v1903 = vmul.f32 %v1888, %v1886
        %v1904 = vmul.f32 %v1888, %v1887
        %v1905 = vld [vmem:[%s4] sm:$0xff]
        %v1906 = vld [vmem:[%s4 + $0x8] sm:$0xff]
        %v1907 = vld [vmem:[%s4 + $0x10] sm:$0xff]
        %v1908 = vld [vmem:[%s4 + $0x18] sm:$0xff]
        %v1909 = vld [vmem:[%s4 + $0x20] sm:$0xff]
        %v1910 = vld [vmem:[%s4 + $0x28] sm:$0xff]
        %v1911 = vld [vmem:[%s4 + $0x30] sm:$0xff]
        %v1912 = vld [vmem:[%s4 + $0x38] sm:$0xff]
        %v1913 = vld [vmem:[%s4 + $0x40] sm:$0xff]
        %v1914 = vld [vmem:[%s4 + $0x48] sm:$0xff]
        %v1915 = vld [vmem:[%s4 + $0x50] sm:$0xff]
        %v1916 = vld [vmem:[%s4 + $0x58] sm:$0xff]
        %v1917 = vld [vmem:[%s4 + $0x60] sm:$0xff]
        %v1918 = vld [vmem:[%s4 + $0x68] sm:$0xff]
        %v1919 = vld [vmem:[%s4 + $0x70] sm:$0xff]
        %v1920 = vld [vmem:[%s4 + $0x78] sm:$0xff]
        %v1921 = vstv %s671
        %v1922 = vmul.f32 %v1921, %v1905
        %v1923 = vmul.f32 %v1921, %v1906
        %v1924 = vmul.f32 %v1921, %v1907
        %v1925 = vmul.f32 %v1921, %v1908
        %v1926 = vmul.f32 %v1921, %v1909
        %v1927 = vmul.f32 %v1921, %v1910
        %v1928 = vmul.f32 %v1921, %v1911
        %v1929 = vmul.f32 %v1921, %v1912
        %v1930 = vmul.f32 %v1921, %v1913
        %v1931 = vmul.f32 %v1921, %v1914
        %v1932 = vmul.f32 %v1921, %v1915
        %v1933 = vmul.f32 %v1921, %v1916
        %v1934 = vmul.f32 %v1921, %v1917
        %v1935 = vmul.f32 %v1921, %v1918
        %v1936 = vmul.f32 %v1921, %v1919
        %v1937 = vmul.f32 %v1921, %v1920
        %v1938 = vadd.f32 %v1889, %v1922
        %v1939 = vadd.f32 %v1890, %v1923
        %v1940 = vadd.f32 %v1891, %v1924
        %v1941 = vadd.f32 %v1892, %v1925
        %v1942 = vadd.f32 %v1893, %v1926
        %v1943 = vadd.f32 %v1894, %v1927
        %v1944 = vadd.f32 %v1895, %v1928
        %v1945 = vadd.f32 %v1896, %v1929
        %v1946 = vadd.f32 %v1897, %v1930
        %v1947 = vadd.f32 %v1898, %v1931
        %v1948 = vadd.f32 %v1899, %v1932
        %v1949 = vadd.f32 %v1900, %v1933
        %v1950 = vadd.f32 %v1901, %v1934
        %v1951 = vadd.f32 %v1902, %v1935
        %v1952 = vadd.f32 %v1903, %v1936
        %v1953 = vadd.f32 %v1904, %v1937
        %v1954 = vpack.c.bf16 %v1513, %v1512
        %v1955 = vpack.c.bf16 %v1515, %v1514
        %v1956 = vpack.c.bf16 %v1517, %v1516
        %v1957 = vpack.c.bf16 %v1519, %v1518
        %v1958 = vpack.c.bf16 %v1857, %v1856
        %v1959 = vpack.c.bf16 %v1859, %v1858
        %v1960 = vpack.c.bf16 %v1861, %v1860
        %v1961 = vpack.c.bf16 %v1863, %v1862
        %v1962 = vpack.c.bf16 %v1865, %v1864
        %v1963 = vpack.c.bf16 %v1867, %v1866
        %v1964 = vpack.c.bf16 %v1869, %v1868
        %v1965 = vpack.c.bf16 %v1871, %v1870
        %v1966 = vld [vmem:[%s659] sm:$0xff]
        %v1967 = vld [vmem:[%s659 + $0x8] sm:$0xff]
        %v1968 = vld [vmem:[%s659 + $0x10] sm:$0xff]
        %v1969 = vld [vmem:[%s659 + $0x18] sm:$0xff]
        %v1970 = vld [vmem:[%s659 + $0x20] sm:$0xff]
        %v1971 = vld [vmem:[%s659 + $0x28] sm:$0xff]
        %v1972 = vld [vmem:[%s659 + $0x30] sm:$0xff]
        %v1973 = vld [vmem:[%s659 + $0x38] sm:$0xff]
        %v1975 = vsel %vm1454, %v1954, 0
        %v1978 = vsel %vm1454, %v1955, 0
        %v1981 = vsel %vm1454, %v1956, 0
        %v1984 = vsel %vm1454, %v1957, 0
        %v1987 = vsel %vm1454, %v1958, 0
        %v1990 = vsel %vm1454, %v1959, 0
        %v1993 = vsel %vm1454, %v1960, 0
        %v1996 = vsel %vm1454, %v1961, 0
        %v1999 = vsel %vm1454, %v1962, 0
        %v2002 = vsel %vm1454, %v1963, 0
        %v2005 = vsel %vm1454, %v1964, 0
        %v2008 = vsel %vm1454, %v1965, 0
        %2010 = vmatprep.subr.bf16.mxu0 0
        %2011 = vmatpush1.bf16.xpose.msra.mxu0 %v2008
        %2012 = vmatprep.subr.bf16.mxu0 0
        %2013 = vmatpush1.bf16.xpose.msra.mxu0 %v2005
        %2014 = vmatprep.subr.bf16.mxu0 0
        %2015 = vmatpush1.bf16.xpose.msra.mxu0 %v2002
        %2016 = vmatprep.subr.bf16.mxu0 0
        %2017 = vmatpush1.bf16.xpose.msra.mxu0 %v1999
        %2018 = vmatprep.subr.bf16.mxu0 0
        %2019 = vmatpush1.bf16.xpose.msra.mxu0 %v1996
        %2020 = vmatprep.subr.bf16.mxu0 0
        %2021 = vmatpush1.bf16.xpose.msra.mxu0 %v1993
        %2022 = vmatprep.subr.bf16.mxu0 0
        %2023 = vmatpush1.bf16.xpose.msra.mxu0 %v1990
        %2024 = vmatprep.subr.bf16.mxu0 0
        %2025 = vmatpush1.bf16.xpose.msra.mxu0 %v1987
        %2026 = vmatprep.subr.bf16.mxu0 0
        %2027 = vmatpush2.bf16.xpose.msra.mxu0 0
        %2028 = vmatprep.subr.bf16.mxu0 0
        %2029 = vmatpush2.bf16.xpose.msra.mxu0 0
        %2030 = vmatprep.subr.bf16.mxu0 0
        %2031 = vmatpush2.bf16.xpose.msra.mxu0 0
        %2032 = vmatprep.subr.bf16.mxu0 0
        %2033 = vmatpush2.bf16.xpose.msra.mxu0 0
        %2034 = vmatprep.subr.bf16.mxu0 0
        %2035 = vmatpush2.bf16.xpose.msra.mxu0 0
        %2036 = vmatprep.subr.bf16.mxu0 0
        %2037 = vmatpush2.bf16.xpose.msra.mxu0 0
        %2038 = vmatprep.subr.bf16.mxu0 0
        %2039 = vmatpush2.bf16.xpose.msra.mxu0 0
        %2040 = vmatprep.subr.bf16.mxu0 0
        %2041 = vmatpush2.bf16.xpose.msra.mxu0 0
        %2042 = vmatprep.mubr.bf16.mxu0 0
        %2043 = vmatmul.mubr.bf16.gmra.mxu0 %v1975
        %v2044 = vpop.f32.mrf.mxu0
        %v2045 = vadd.f32 %v1966, %v2044
        %v2046 = vpop.f32.mrf.mxu0
        %v2047 = vpop.f32.mrf.mxu0
        %v2048 = vadd.f32 %v1967, %v2047
        %v2049 = vpop.f32.mrf.mxu0
        %2050 = vmatprep.mubr.bf16.mxu0 0
        %2051 = vmatmul.mubr.bf16.gmra.mxu0 %v1978
        %v2052 = vpop.f32.mrf.mxu0
        %v2053 = vadd.f32 %v1968, %v2052
        %v2054 = vpop.f32.mrf.mxu0
        %v2055 = vpop.f32.mrf.mxu0
        %v2056 = vadd.f32 %v1969, %v2055
        %v2057 = vpop.f32.mrf.mxu0
        %2058 = vmatprep.mubr.bf16.mxu0 0
        %2059 = vmatmul.mubr.bf16.gmra.mxu0 %v1981
        %v2060 = vpop.f32.mrf.mxu0
        %v2061 = vadd.f32 %v1970, %v2060
        %v2062 = vpop.f32.mrf.mxu0
        %v2063 = vpop.f32.mrf.mxu0
        %v2064 = vadd.f32 %v1971, %v2063
        %v2065 = vpop.f32.mrf.mxu0
        %2066 = vmatprep.mubr.bf16.mxu0 0
        %2067 = vmatmul.mubr.bf16.gmra.mxu0 %v1984
        %v2068 = vpop.f32.mrf.mxu0
        %v2069 = vadd.f32 %v1972, %v2068
        %v2070 = vpop.f32.mrf.mxu0
        %v2071 = vpop.f32.mrf.mxu0
        %v2072 = vadd.f32 %v1973, %v2071
        %v2073 = vpop.f32.mrf.mxu0
        %2074 = vdwg.mxu0
        %2075 = vmax.xlane.f32.xlu0 %v2045
        %v2076 = vpop.xlane.xlu0 %2075
        %2077 = vmax.xlane.f32.xlu0 %v2048
        %v2078 = vpop.xlane.xlu0 %2077
        %2079 = vmax.xlane.f32.xlu0 %v2053
        %v2080 = vpop.xlane.xlu0 %2079
        %2081 = vmax.xlane.f32.xlu0 %v2056
        %v2082 = vpop.xlane.xlu0 %2081
        %2083 = vmax.xlane.f32.xlu0 %v2061
        %v2084 = vpop.xlane.xlu0 %2083
        %2085 = vmax.xlane.f32.xlu0 %v2064
        %v2086 = vpop.xlane.xlu0 %2085
        %2087 = vmax.xlane.f32.xlu0 %v2069
        %v2088 = vpop.xlane.xlu0 %2087
        %2089 = vmax.xlane.f32.xlu0 %v2072
        %v2090 = vpop.xlane.xlu0 %2089
        %v2091 = vsub.f32 %v2045, %v2076
        %v2092 = vsub.f32 %v2048, %v2078
        %v2093 = vsub.f32 %v2053, %v2080
        %v2094 = vsub.f32 %v2056, %v2082
        %v2095 = vsub.f32 %v2061, %v2084
        %v2096 = vsub.f32 %v2064, %v2086
        %v2097 = vsub.f32 %v2069, %v2088
        %v2098 = vsub.f32 %v2072, %v2090
        %v2099 = vmul.f32 %v2091, 1.442695
        %v2100 = vpow.pop %v2099
        %v2101 = vmul.f32 %v2092, 1.442695
        %v2102 = vpow.pop %v2101
        %v2103 = vmul.f32 %v2093, 1.442695
        %v2104 = vpow.pop %v2103
        %v2105 = vmul.f32 %v2094, 1.442695
        %v2106 = vpow.pop %v2105
        %v2107 = vmul.f32 %v2095, 1.442695
        %v2108 = vpow.pop %v2107
        %v2109 = vmul.f32 %v2096, 1.442695
        %v2110 = vpow.pop %v2109
        %v2111 = vmul.f32 %v2097, 1.442695
        %v2112 = vpow.pop %v2111
        %v2113 = vmul.f32 %v2098, 1.442695
        %v2114 = vpow.pop %v2113
        %2115 = vadd.xlane.f32.xlu0 %v2100
        %v2116 = vpop.xlane.xlu0 %2115
        %2117 = vadd.xlane.f32.xlu0 %v2102
        %v2118 = vpop.xlane.xlu0 %2117
        %2119 = vadd.xlane.f32.xlu0 %v2104
        %v2120 = vpop.xlane.xlu0 %2119
        %2121 = vadd.xlane.f32.xlu0 %v2106
        %v2122 = vpop.xlane.xlu0 %2121
        %2123 = vadd.xlane.f32.xlu0 %v2108
        %v2124 = vpop.xlane.xlu0 %2123
        %2125 = vadd.xlane.f32.xlu0 %v2110
        %v2126 = vpop.xlane.xlu0 %2125
        %2127 = vadd.xlane.f32.xlu0 %v2112
        %v2128 = vpop.xlane.xlu0 %2127
        %2129 = vadd.xlane.f32.xlu0 %v2114
        %v2130 = vpop.xlane.xlu0 %2129
        %v2131 = vpack.c.bf16 %v2102, %v2100
        %v2132 = vpack.c.bf16 %v2106, %v2104
        %v2133 = vpack.c.bf16 %v2110, %v2108
        %v2134 = vpack.c.bf16 %v2114, %v2112
        %v2135 = vpack.c.bf16 %v1939, %v1938
        %v2136 = vpack.c.bf16 %v1941, %v1940
        %v2137 = vpack.c.bf16 %v1943, %v1942
        %v2138 = vpack.c.bf16 %v1945, %v1944
        %v2139 = vpack.c.bf16 %v1947, %v1946
        %v2140 = vpack.c.bf16 %v1949, %v1948
        %v2141 = vpack.c.bf16 %v1951, %v1950
        %v2142 = vpack.c.bf16 %v1953, %v1952
        %2143 = vmatprep.subr.bf16.mxu0 0
        %2144 = vmatpush1.bf16.msra.mxu0 %v2142
        %2145 = vmatprep.subr.bf16.mxu0 0
        %2146 = vmatpush1.bf16.msra.mxu0 %v2141
        %2147 = vmatprep.subr.bf16.mxu0 0
        %2148 = vmatpush1.bf16.msra.mxu0 %v2140
        %2149 = vmatprep.subr.bf16.mxu0 0
        %2150 = vmatpush1.bf16.msra.mxu0 %v2139
        %2151 = vmatprep.subr.bf16.mxu0 0
        %2152 = vmatpush1.bf16.msra.mxu0 %v2138
        %2153 = vmatprep.subr.bf16.mxu0 0
        %2154 = vmatpush1.bf16.msra.mxu0 %v2137
        %2155 = vmatprep.subr.bf16.mxu0 0
        %2156 = vmatpush1.bf16.msra.mxu0 %v2136
        %2157 = vmatprep.subr.bf16.mxu0 0
        %2158 = vmatpush1.bf16.msra.mxu0 %v2135
        %2159 = vmatprep.subr.bf16.mxu0 0
        %2160 = vmatpush2.bf16.msra.mxu0 0
        %2161 = vmatprep.subr.bf16.mxu0 0
        %2162 = vmatpush2.bf16.msra.mxu0 0
        %2163 = vmatprep.subr.bf16.mxu0 0
        %2164 = vmatpush2.bf16.msra.mxu0 0
        %2165 = vmatprep.subr.bf16.mxu0 0
        %2166 = vmatpush2.bf16.msra.mxu0 0
        %2167 = vmatprep.subr.bf16.mxu0 0
        %2168 = vmatpush2.bf16.msra.mxu0 0
        %2169 = vmatprep.subr.bf16.mxu0 0
        %2170 = vmatpush2.bf16.msra.mxu0 0
        %2171 = vmatprep.subr.bf16.mxu0 0
        %2172 = vmatpush2.bf16.msra.mxu0 0
        %2173 = vmatprep.subr.bf16.mxu0 0
        %2174 = vmatpush2.bf16.msra.mxu0 0
        %2175 = vmatprep.mubr.bf16.mxu0 0
        %2176 = vmatmul.mubr.bf16.gmra.mxu0 %v2131
        %v2177 = vpop.f32.mrf.mxu0
        %v2178 = vadd.f32 0.0, %v2177
        %v2179 = vpop.f32.mrf.mxu0
        %v2180 = vpop.f32.mrf.mxu0
        %v2181 = vadd.f32 0.0, %v2180
        %v2182 = vpop.f32.mrf.mxu0
        %2183 = vmatprep.mubr.bf16.mxu0 0
        %2184 = vmatmul.mubr.bf16.gmra.mxu0 %v2132
        %v2185 = vpop.f32.mrf.mxu0
        %v2186 = vadd.f32 0.0, %v2185
        %v2187 = vpop.f32.mrf.mxu0
        %v2188 = vpop.f32.mrf.mxu0
        %v2189 = vadd.f32 0.0, %v2188
        %v2190 = vpop.f32.mrf.mxu0
        %2191 = vmatprep.mubr.bf16.mxu0 0
        %2192 = vmatmul.mubr.bf16.gmra.mxu0 %v2133
        %v2193 = vpop.f32.mrf.mxu0
        %v2194 = vadd.f32 0.0, %v2193
        %v2195 = vpop.f32.mrf.mxu0
        %v2196 = vpop.f32.mrf.mxu0
        %v2197 = vadd.f32 0.0, %v2196
        %v2198 = vpop.f32.mrf.mxu0
        %2199 = vmatprep.mubr.bf16.mxu0 0
        %2200 = vmatmul.mubr.bf16.gmra.mxu0 %v2134
        %v2201 = vpop.f32.mrf.mxu0
        %v2202 = vadd.f32 0.0, %v2201
        %v2203 = vpop.f32.mrf.mxu0
        %v2204 = vpop.f32.mrf.mxu0
        %v2205 = vadd.f32 0.0, %v2204
        %v2206 = vpop.f32.mrf.mxu0
        %2207 = vdwg.mxu0
        %v2208 = vrcp.pop %v2116
        %v2209 = vrcp.pop %v2118
        %v2210 = vrcp.pop %v2120
        %v2211 = vrcp.pop %v2122
        %v2212 = vrcp.pop %v2124
        %v2213 = vrcp.pop %v2126
        %v2214 = vrcp.pop %v2128
        %v2215 = vrcp.pop %v2130
        %v2216 = vmul.f32 %v2178, %v2208
        %v2217 = vmul.f32 %v2181, %v2209
        %v2218 = vmul.f32 %v2186, %v2210
        %v2219 = vmul.f32 %v2189, %v2211
        %v2220 = vmul.f32 %v2194, %v2212
        %v2221 = vmul.f32 %v2197, %v2213
        %v2222 = vmul.f32 %v2202, %v2214
        %v2223 = vmul.f32 %v2205, %v2215
        %2224 = vst.msk [vmem:[#allocation4] sm:$0xff] %vm1454, %v2216
        %2225 = vst.msk [vmem:[#allocation4 + $0x8] sm:$0xff] %vm1454, %v2217
        %2226 = vst.msk [vmem:[#allocation4 + $0x10] sm:$0xff] %vm1454, %v2218
        %2227 = vst.msk [vmem:[#allocation4 + $0x18] sm:$0xff] %vm1454, %v2219
        %2228 = vst.msk [vmem:[#allocation4 + $0x20] sm:$0xff] %vm1454, %v2220
        %2229 = vst.msk [vmem:[#allocation4 + $0x28] sm:$0xff] %vm1454, %v2221
        %2230 = vst.msk [vmem:[#allocation4 + $0x30] sm:$0xff] %vm1454, %v2222
        %2231 = vst.msk [vmem:[#allocation4 + $0x38] sm:$0xff] %vm1454, %v2223
        %v2232 = vld [vmem:[#allocation3] sm:$0xff]
        %v2233 = vld [vmem:[#allocation3 + $0x8] sm:$0xff]
        %v2234 = vld [vmem:[#allocation3 + $0x10] sm:$0xff]
        %v2235 = vld [vmem:[#allocation3 + $0x18] sm:$0xff]
        %v2236 = vld [vmem:[#allocation3 + $0x20] sm:$0xff]
        %v2237 = vld [vmem:[#allocation3 + $0x28] sm:$0xff]
        %v2238 = vld [vmem:[#allocation3 + $0x30] sm:$0xff]
        %v2239 = vld [vmem:[#allocation3 + $0x38] sm:$0xff]
        %v2240 = vld [vmem:[%s647] sm:$0xff]
        %v2241 = vld [vmem:[%s647 + $0x8] sm:$0xff]
        %v2242 = vld [vmem:[%s647 + $0x10] sm:$0xff]
        %v2243 = vld [vmem:[%s647 + $0x18] sm:$0xff]
        %v2244 = vld [vmem:[%s647 + $0x20] sm:$0xff]
        %v2245 = vld [vmem:[%s647 + $0x28] sm:$0xff]
        %v2246 = vld [vmem:[%s647 + $0x30] sm:$0xff]
        %v2247 = vld [vmem:[%s647 + $0x38] sm:$0xff]
        %2256 = vrot.lane.b32.xlu0 %v2240, 32
        %v2257 = vpop.permute.xlu0 %2256
        %2258 = vrot.lane.b32.xlu0 %v2241, 32
        %v2259 = vpop.permute.xlu0 %2258
        %2260 = vrot.lane.b32.xlu0 %v2242, 32
        %v2261 = vpop.permute.xlu0 %2260
        %2262 = vrot.lane.b32.xlu0 %v2243, 32
        %v2263 = vpop.permute.xlu0 %2262
        %2264 = vrot.lane.b32.xlu0 %v2244, 32
        %v2265 = vpop.permute.xlu0 %2264
        %2266 = vrot.lane.b32.xlu0 %v2245, 32
        %v2267 = vpop.permute.xlu0 %2266
        %2268 = vrot.lane.b32.xlu0 %v2246, 32
        %v2269 = vpop.permute.xlu0 %2268
        %2270 = vrot.lane.b32.xlu0 %v2247, 32
        %v2271 = vpop.permute.xlu0 %2270
        %v2280 = vmul.f32 %v2232, %v2257
        %v2281 = vmul.f32 %v2233, %v2259
        %v2282 = vmul.f32 %v2234, %v2261
        %v2283 = vmul.f32 %v2235, %v2263
        %v2284 = vmul.f32 %v2236, %v2265
        %v2285 = vmul.f32 %v2237, %v2267
        %v2286 = vmul.f32 %v2238, %v2269
        %v2287 = vmul.f32 %v2239, %v2271
        %v2288 = vld [vmem:[%s653] sm:$0xff]
        %v2289 = vld [vmem:[%s653 + $0x8] sm:$0xff]
        %v2290 = vld [vmem:[%s653 + $0x10] sm:$0xff]
        %v2291 = vld [vmem:[%s653 + $0x18] sm:$0xff]
        %v2292 = vld [vmem:[%s653 + $0x20] sm:$0xff]
        %v2293 = vld [vmem:[%s653 + $0x28] sm:$0xff]
        %v2294 = vld [vmem:[%s653 + $0x30] sm:$0xff]
        %v2295 = vld [vmem:[%s653 + $0x38] sm:$0xff]
        %2304 = vrot.lane.b32.xlu0 %v2288, 96
        %v2305 = vpop.permute.xlu0 %2304
        %2306 = vrot.lane.b32.xlu0 %v2289, 96
        %v2307 = vpop.permute.xlu0 %2306
        %2308 = vrot.lane.b32.xlu0 %v2290, 96
        %v2309 = vpop.permute.xlu0 %2308
        %2310 = vrot.lane.b32.xlu0 %v2291, 96
        %v2311 = vpop.permute.xlu0 %2310
        %2312 = vrot.lane.b32.xlu0 %v2292, 96
        %v2313 = vpop.permute.xlu0 %2312
        %2314 = vrot.lane.b32.xlu0 %v2293, 96
        %v2315 = vpop.permute.xlu0 %2314
        %2316 = vrot.lane.b32.xlu0 %v2294, 96
        %v2317 = vpop.permute.xlu0 %2316
        %2318 = vrot.lane.b32.xlu0 %v2295, 96
        %v2319 = vpop.permute.xlu0 %2318
        %v2328 = vmul.f32 %v2232, %v2305
        %v2329 = vmul.f32 %v2233, %v2307
        %v2330 = vmul.f32 %v2234, %v2309
        %v2331 = vmul.f32 %v2235, %v2311
        %v2332 = vmul.f32 %v2236, %v2313
        %v2333 = vmul.f32 %v2237, %v2315
        %v2334 = vmul.f32 %v2238, %v2317
        %v2335 = vmul.f32 %v2239, %v2319
        %2344 = vrot.lane.b32.xlu0 %v2328, 64
        %v2345 = vpop.permute.xlu0 %2344
        %2346 = vrot.lane.b32.xlu0 %v2329, 64
        %v2347 = vpop.permute.xlu0 %2346
        %2348 = vrot.lane.b32.xlu0 %v2330, 64
        %v2349 = vpop.permute.xlu0 %2348
        %2350 = vrot.lane.b32.xlu0 %v2331, 64
        %v2351 = vpop.permute.xlu0 %2350
        %2352 = vrot.lane.b32.xlu0 %v2332, 64
        %v2353 = vpop.permute.xlu0 %2352
        %2354 = vrot.lane.b32.xlu0 %v2333, 64
        %v2355 = vpop.permute.xlu0 %2354
        %2356 = vrot.lane.b32.xlu0 %v2334, 64
        %v2357 = vpop.permute.xlu0 %2356
        %2358 = vrot.lane.b32.xlu0 %v2335, 64
        %v2359 = vpop.permute.xlu0 %2358
        %v2368 = vadd.f32 %v2280, %v2345
        %v2369 = vadd.f32 %v2281, %v2347
        %v2370 = vadd.f32 %v2282, %v2349
        %v2371 = vadd.f32 %v2283, %v2351
        %v2372 = vadd.f32 %v2284, %v2353
        %v2373 = vadd.f32 %v2285, %v2355
        %v2374 = vadd.f32 %v2286, %v2357
        %v2375 = vadd.f32 %v2287, %v2359
        %v2376 = vmul.f32 %v2232, %v2232
        %v2377 = vmul.f32 %v2233, %v2233
        %v2378 = vmul.f32 %v2234, %v2234
        %v2379 = vmul.f32 %v2235, %v2235
        %v2380 = vmul.f32 %v2236, %v2236
        %v2381 = vmul.f32 %v2237, %v2237
        %v2382 = vmul.f32 %v2238, %v2238
        %v2383 = vmul.f32 %v2239, %v2239
        %2392 = vrot.lane.b32.xlu0 %v2376, 96
        %v2393 = vpop.permute.xlu0 %2392
        %2394 = vrot.lane.b32.xlu0 %v2377, 96
        %v2395 = vpop.permute.xlu0 %2394
        %2396 = vrot.lane.b32.xlu0 %v2378, 96
        %v2397 = vpop.permute.xlu0 %2396
        %2398 = vrot.lane.b32.xlu0 %v2379, 96
        %v2399 = vpop.permute.xlu0 %2398
        %2400 = vrot.lane.b32.xlu0 %v2380, 96
        %v2401 = vpop.permute.xlu0 %2400
        %2402 = vrot.lane.b32.xlu0 %v2381, 96
        %v2403 = vpop.permute.xlu0 %2402
        %2404 = vrot.lane.b32.xlu0 %v2382, 96
        %v2405 = vpop.permute.xlu0 %2404
        %2406 = vrot.lane.b32.xlu0 %v2383, 96
        %v2407 = vpop.permute.xlu0 %2406
        %v2416 = vsel %vm1454, %v2393, 0.0
        %2417 = vadd.xlane.f32.xlu0 %v2416
        %v2418 = vpop.xlane.xlu0 %2417
        %v2419 = vsel %vm1454, %v2395, 0.0
        %2420 = vadd.xlane.f32.xlu0 %v2419
        %v2421 = vpop.xlane.xlu0 %2420
        %v2422 = vsel %vm1454, %v2397, 0.0
        %2423 = vadd.xlane.f32.xlu0 %v2422
        %v2424 = vpop.xlane.xlu0 %2423
        %v2425 = vsel %vm1454, %v2399, 0.0
        %2426 = vadd.xlane.f32.xlu0 %v2425
        %v2427 = vpop.xlane.xlu0 %2426
        %v2428 = vsel %vm1454, %v2401, 0.0
        %2429 = vadd.xlane.f32.xlu0 %v2428
        %v2430 = vpop.xlane.xlu0 %2429
        %v2431 = vsel %vm1454, %v2403, 0.0
        %2432 = vadd.xlane.f32.xlu0 %v2431
        %v2433 = vpop.xlane.xlu0 %2432
        %v2434 = vsel %vm1454, %v2405, 0.0
        %2435 = vadd.xlane.f32.xlu0 %v2434
        %v2436 = vpop.xlane.xlu0 %2435
        %v2437 = vsel %vm1454, %v2407, 0.0
        %2438 = vadd.xlane.f32.xlu0 %v2437
        %v2439 = vpop.xlane.xlu0 %2438
        %v2440 = vmul.f32 %v2418, %v1479
        %v2441 = vmul.f32 %v2421, %v1479
        %v2442 = vmul.f32 %v2424, %v1479
        %v2443 = vmul.f32 %v2427, %v1479
        %v2444 = vmul.f32 %v2430, %v1479
        %v2445 = vmul.f32 %v2433, %v1479
        %v2446 = vmul.f32 %v2436, %v1479
        %v2447 = vmul.f32 %v2439, %v1479
        %v2448 = vadd.f32 %v2440, 1.1920929e-07
        %v2449 = vadd.f32 %v2441, 1.1920929e-07
        %v2450 = vadd.f32 %v2442, 1.1920929e-07
        %v2451 = vadd.f32 %v2443, 1.1920929e-07
        %v2452 = vadd.f32 %v2444, 1.1920929e-07
        %v2453 = vadd.f32 %v2445, 1.1920929e-07
        %v2454 = vadd.f32 %v2446, 1.1920929e-07
        %v2455 = vadd.f32 %v2447, 1.1920929e-07
        %v2456 = vrsqrt.pop %v2448
        %v2457 = vrsqrt.pop %v2449
        %v2458 = vrsqrt.pop %v2450
        %v2459 = vrsqrt.pop %v2451
        %v2460 = vrsqrt.pop %v2452
        %v2461 = vrsqrt.pop %v2453
        %v2462 = vrsqrt.pop %v2454
        %v2463 = vrsqrt.pop %v2455
        %v2464 = vmul.f32 %v2456, 0.17677669
        %v2465 = vmul.f32 %v2457, 0.17677669
        %v2466 = vmul.f32 %v2458, 0.17677669
        %v2467 = vmul.f32 %v2459, 0.17677669
        %v2468 = vmul.f32 %v2460, 0.17677669
        %v2469 = vmul.f32 %v2461, 0.17677669
        %v2470 = vmul.f32 %v2462, 0.17677669
        %v2471 = vmul.f32 %v2463, 0.17677669
        %v2472 = vmul.f32 %v2368, %v2464
        %v2473 = vmul.f32 %v2369, %v2465
        %v2474 = vmul.f32 %v2370, %v2466
        %v2475 = vmul.f32 %v2371, %v2467
        %v2476 = vmul.f32 %v2372, %v2468
        %v2477 = vmul.f32 %v2373, %v2469
        %v2478 = vmul.f32 %v2374, %v2470
        %v2479 = vmul.f32 %v2375, %v2471
        %v2480 = vld [vmem:[#allocation2] sm:$0xff]
        %v2481 = vld [vmem:[#allocation2 + $0x10] sm:$0xff]
        %v2482 = vld [vmem:[#allocation2 + $0x20] sm:$0xff]
        %v2483 = vld [vmem:[#allocation2 + $0x30] sm:$0xff]
        %v2484 = vld [vmem:[#allocation2 + $0x40] sm:$0xff]
        %v2485 = vld [vmem:[#allocation2 + $0x50] sm:$0xff]
        %v2486 = vld [vmem:[#allocation2 + $0x60] sm:$0xff]
        %v2487 = vld [vmem:[#allocation2 + $0x70] sm:$0xff]
        %v2488 = vld [vmem:[#allocation2 + $0x80] sm:$0xff]
        %v2489 = vld [vmem:[#allocation2 + $0x90] sm:$0xff]
        %v2490 = vld [vmem:[#allocation2 + $0xa0] sm:$0xff]
        %v2491 = vld [vmem:[#allocation2 + $0xb0] sm:$0xff]
        %v2492 = vld [vmem:[#allocation2 + $0xc0] sm:$0xff]
        %v2493 = vld [vmem:[#allocation2 + $0xd0] sm:$0xff]
        %v2494 = vld [vmem:[#allocation2 + $0xe0] sm:$0xff]
        %v2495 = vld [vmem:[#allocation2 + $0xf0] sm:$0xff]
        %v2496 = vld [vmem:[%s7] sm:$0xff]
        %v2497 = vld [vmem:[%s7 + $0x8] sm:$0xff]
        %v2498 = vld [vmem:[%s7 + $0x10] sm:$0xff]
        %v2499 = vld [vmem:[%s7 + $0x18] sm:$0xff]
        %v2500 = vld [vmem:[%s7 + $0x20] sm:$0xff]
        %v2501 = vld [vmem:[%s7 + $0x28] sm:$0xff]
        %v2502 = vld [vmem:[%s7 + $0x30] sm:$0xff]
        %v2503 = vld [vmem:[%s7 + $0x38] sm:$0xff]
        %v2504 = vld [vmem:[%s7 + $0x40] sm:$0xff]
        %v2505 = vld [vmem:[%s7 + $0x48] sm:$0xff]
        %v2506 = vld [vmem:[%s7 + $0x50] sm:$0xff]
        %v2507 = vld [vmem:[%s7 + $0x58] sm:$0xff]
        %v2508 = vld [vmem:[%s7 + $0x60] sm:$0xff]
        %v2509 = vld [vmem:[%s7 + $0x68] sm:$0xff]
        %v2510 = vld [vmem:[%s7 + $0x70] sm:$0xff]
        %v2511 = vld [vmem:[%s7 + $0x78] sm:$0xff]
        %2528 = vrot.lane.b32.xlu0 %v2496, 32
        %v2529 = vpop.permute.xlu0 %2528
        %2530 = vrot.lane.b32.xlu0 %v2497, 32
        %v2531 = vpop.permute.xlu0 %2530
        %2532 = vrot.lane.b32.xlu0 %v2498, 32
        %v2533 = vpop.permute.xlu0 %2532
        %2534 = vrot.lane.b32.xlu0 %v2499, 32
        %v2535 = vpop.permute.xlu0 %2534
        %2536 = vrot.lane.b32.xlu0 %v2500, 32
        %v2537 = vpop.permute.xlu0 %2536
        %2538 = vrot.lane.b32.xlu0 %v2501, 32
        %v2539 = vpop.permute.xlu0 %2538
        %2540 = vrot.lane.b32.xlu0 %v2502, 32
        %v2541 = vpop.permute.xlu0 %2540
        %2542 = vrot.lane.b32.xlu0 %v2503, 32
        %v2543 = vpop.permute.xlu0 %2542
        %2544 = vrot.lane.b32.xlu0 %v2504, 32
        %v2545 = vpop.permute.xlu0 %2544
        %2546 = vrot.lane.b32.xlu0 %v2505, 32
        %v2547 = vpop.permute.xlu0 %2546
        %2548 = vrot.lane.b32.xlu0 %v2506, 32
        %v2549 = vpop.permute.xlu0 %2548
        %2550 = vrot.lane.b32.xlu0 %v2507, 32
        %v2551 = vpop.permute.xlu0 %2550
        %2552 = vrot.lane.b32.xlu0 %v2508, 32
        %v2553 = vpop.permute.xlu0 %2552
        %2554 = vrot.lane.b32.xlu0 %v2509, 32
        %v2555 = vpop.permute.xlu0 %2554
        %2556 = vrot.lane.b32.xlu0 %v2510, 32
        %v2557 = vpop.permute.xlu0 %2556
        %2558 = vrot.lane.b32.xlu0 %v2511, 32
        %v2559 = vpop.permute.xlu0 %2558
        %v2576 = vmul.f32 %v2480, %v2529
        %v2577 = vmul.f32 %v2481, %v2531
        %v2578 = vmul.f32 %v2482, %v2533
        %v2579 = vmul.f32 %v2483, %v2535
        %v2580 = vmul.f32 %v2484, %v2537
        %v2581 = vmul.f32 %v2485, %v2539
        %v2582 = vmul.f32 %v2486, %v2541
        %v2583 = vmul.f32 %v2487, %v2543
        %v2584 = vmul.f32 %v2488, %v2545
        %v2585 = vmul.f32 %v2489, %v2547
        %v2586 = vmul.f32 %v2490, %v2549
        %v2587 = vmul.f32 %v2491, %v2551
        %v2588 = vmul.f32 %v2492, %v2553
        %v2589 = vmul.f32 %v2493, %v2555
        %v2590 = vmul.f32 %v2494, %v2557
        %v2591 = vmul.f32 %v2495, %v2559
        %v2592 = vld [vmem:[%s8] sm:$0xff]
        %v2593 = vld [vmem:[%s8 + $0x8] sm:$0xff]
        %v2594 = vld [vmem:[%s8 + $0x10] sm:$0xff]
        %v2595 = vld [vmem:[%s8 + $0x18] sm:$0xff]
        %v2596 = vld [vmem:[%s8 + $0x20] sm:$0xff]
        %v2597 = vld [vmem:[%s8 + $0x28] sm:$0xff]
        %v2598 = vld [vmem:[%s8 + $0x30] sm:$0xff]
        %v2599 = vld [vmem:[%s8 + $0x38] sm:$0xff]
        %v2600 = vld [vmem:[%s8 + $0x40] sm:$0xff]
        %v2601 = vld [vmem:[%s8 + $0x48] sm:$0xff]
        %v2602 = vld [vmem:[%s8 + $0x50] sm:$0xff]
        %v2603 = vld [vmem:[%s8 + $0x58] sm:$0xff]
        %v2604 = vld [vmem:[%s8 + $0x60] sm:$0xff]
        %v2605 = vld [vmem:[%s8 + $0x68] sm:$0xff]
        %v2606 = vld [vmem:[%s8 + $0x70] sm:$0xff]
        %v2607 = vld [vmem:[%s8 + $0x78] sm:$0xff]
        %2624 = vrot.lane.b32.xlu0 %v2592, 96
        %v2625 = vpop.permute.xlu0 %2624
        %2626 = vrot.lane.b32.xlu0 %v2593, 96
        %v2627 = vpop.permute.xlu0 %2626
        %2628 = vrot.lane.b32.xlu0 %v2594, 96
        %v2629 = vpop.permute.xlu0 %2628
        %2630 = vrot.lane.b32.xlu0 %v2595, 96
        %v2631 = vpop.permute.xlu0 %2630
        %2632 = vrot.lane.b32.xlu0 %v2596, 96
        %v2633 = vpop.permute.xlu0 %2632
        %2634 = vrot.lane.b32.xlu0 %v2597, 96
        %v2635 = vpop.permute.xlu0 %2634
        %2636 = vrot.lane.b32.xlu0 %v2598, 96
        %v2637 = vpop.permute.xlu0 %2636
        %2638 = vrot.lane.b32.xlu0 %v2599, 96
        %v2639 = vpop.permute.xlu0 %2638
        %2640 = vrot.lane.b32.xlu0 %v2600, 96
        %v2641 = vpop.permute.xlu0 %2640
        %2642 = vrot.lane.b32.xlu0 %v2601, 96
        %v2643 = vpop.permute.xlu0 %2642
        %2644 = vrot.lane.b32.xlu0 %v2602, 96
        %v2645 = vpop.permute.xlu0 %2644
        %2646 = vrot.lane.b32.xlu0 %v2603, 96
        %v2647 = vpop.permute.xlu0 %2646
        %2648 = vrot.lane.b32.xlu0 %v2604, 96
        %v2649 = vpop.permute.xlu0 %2648
        %2650 = vrot.lane.b32.xlu0 %v2605, 96
        %v2651 = vpop.permute.xlu0 %2650
        %2652 = vrot.lane.b32.xlu0 %v2606, 96
        %v2653 = vpop.permute.xlu0 %2652
        %2654 = vrot.lane.b32.xlu0 %v2607, 96
        %v2655 = vpop.permute.xlu0 %2654
        %v2672 = vmul.f32 %v2480, %v2625
        %v2673 = vmul.f32 %v2481, %v2627
        %v2674 = vmul.f32 %v2482, %v2629
        %v2675 = vmul.f32 %v2483, %v2631
        %v2676 = vmul.f32 %v2484, %v2633
        %v2677 = vmul.f32 %v2485, %v2635
        %v2678 = vmul.f32 %v2486, %v2637
        %v2679 = vmul.f32 %v2487, %v2639
        %v2680 = vmul.f32 %v2488, %v2641
        %v2681 = vmul.f32 %v2489, %v2643
        %v2682 = vmul.f32 %v2490, %v2645
        %v2683 = vmul.f32 %v2491, %v2647
        %v2684 = vmul.f32 %v2492, %v2649
        %v2685 = vmul.f32 %v2493, %v2651
        %v2686 = vmul.f32 %v2494, %v2653
        %v2687 = vmul.f32 %v2495, %v2655
        %2704 = vrot.lane.b32.xlu0 %v2672, 64
        %v2705 = vpop.permute.xlu0 %2704
        %2706 = vrot.lane.b32.xlu0 %v2673, 64
        %v2707 = vpop.permute.xlu0 %2706
        %2708 = vrot.lane.b32.xlu0 %v2674, 64
        %v2709 = vpop.permute.xlu0 %2708
        %2710 = vrot.lane.b32.xlu0 %v2675, 64
        %v2711 = vpop.permute.xlu0 %2710
        %2712 = vrot.lane.b32.xlu0 %v2676, 64
        %v2713 = vpop.permute.xlu0 %2712
        %2714 = vrot.lane.b32.xlu0 %v2677, 64
        %v2715 = vpop.permute.xlu0 %2714
        %2716 = vrot.lane.b32.xlu0 %v2678, 64
        %v2717 = vpop.permute.xlu0 %2716
        %2718 = vrot.lane.b32.xlu0 %v2679, 64
        %v2719 = vpop.permute.xlu0 %2718
        %2720 = vrot.lane.b32.xlu0 %v2680, 64
        %v2721 = vpop.permute.xlu0 %2720
        %2722 = vrot.lane.b32.xlu0 %v2681, 64
        %v2723 = vpop.permute.xlu0 %2722
        %2724 = vrot.lane.b32.xlu0 %v2682, 64
        %v2725 = vpop.permute.xlu0 %2724
        %2726 = vrot.lane.b32.xlu0 %v2683, 64
        %v2727 = vpop.permute.xlu0 %2726
        %2728 = vrot.lane.b32.xlu0 %v2684, 64
        %v2729 = vpop.permute.xlu0 %2728
        %2730 = vrot.lane.b32.xlu0 %v2685, 64
        %v2731 = vpop.permute.xlu0 %2730
        %2732 = vrot.lane.b32.xlu0 %v2686, 64
        %v2733 = vpop.permute.xlu0 %2732
        %2734 = vrot.lane.b32.xlu0 %v2687, 64
        %v2735 = vpop.permute.xlu0 %2734
        %v2752 = vadd.f32 %v2576, %v2705
        %v2753 = vadd.f32 %v2577, %v2707
        %v2754 = vadd.f32 %v2578, %v2709
        %v2755 = vadd.f32 %v2579, %v2711
        %v2756 = vadd.f32 %v2580, %v2713
        %v2757 = vadd.f32 %v2581, %v2715
        %v2758 = vadd.f32 %v2582, %v2717
        %v2759 = vadd.f32 %v2583, %v2719
        %v2760 = vadd.f32 %v2584, %v2721
        %v2761 = vadd.f32 %v2585, %v2723
        %v2762 = vadd.f32 %v2586, %v2725
        %v2763 = vadd.f32 %v2587, %v2727
        %v2764 = vadd.f32 %v2588, %v2729
        %v2765 = vadd.f32 %v2589, %v2731
        %v2766 = vadd.f32 %v2590, %v2733
        %v2767 = vadd.f32 %v2591, %v2735
        %v2768 = vmul.f32 %v2480, %v2480
        %v2769 = vmul.f32 %v2481, %v2481
        %v2770 = vmul.f32 %v2482, %v2482
        %v2771 = vmul.f32 %v2483, %v2483
        %v2772 = vmul.f32 %v2484, %v2484
        %v2773 = vmul.f32 %v2485, %v2485
        %v2774 = vmul.f32 %v2486, %v2486
        %v2775 = vmul.f32 %v2487, %v2487
        %v2776 = vmul.f32 %v2488, %v2488
        %v2777 = vmul.f32 %v2489, %v2489
        %v2778 = vmul.f32 %v2490, %v2490
        %v2779 = vmul.f32 %v2491, %v2491
        %v2780 = vmul.f32 %v2492, %v2492
        %v2781 = vmul.f32 %v2493, %v2493
        %v2782 = vmul.f32 %v2494, %v2494
        %v2783 = vmul.f32 %v2495, %v2495
        %2800 = vrot.lane.b32.xlu0 %v2768, 96
        %v2801 = vpop.permute.xlu0 %2800
        %2802 = vrot.lane.b32.xlu0 %v2769, 96
        %v2803 = vpop.permute.xlu0 %2802
        %2804 = vrot.lane.b32.xlu0 %v2770, 96
        %v2805 = vpop.permute.xlu0 %2804
        %2806 = vrot.lane.b32.xlu0 %v2771, 96
        %v2807 = vpop.permute.xlu0 %2806
        %2808 = vrot.lane.b32.xlu0 %v2772, 96
        %v2809 = vpop.permute.xlu0 %2808
        %2810 = vrot.lane.b32.xlu0 %v2773, 96
        %v2811 = vpop.permute.xlu0 %2810
        %2812 = vrot.lane.b32.xlu0 %v2774, 96
        %v2813 = vpop.permute.xlu0 %2812
        %2814 = vrot.lane.b32.xlu0 %v2775, 96
        %v2815 = vpop.permute.xlu0 %2814
        %2816 = vrot.lane.b32.xlu0 %v2776, 96
        %v2817 = vpop.permute.xlu0 %2816
        %2818 = vrot.lane.b32.xlu0 %v2777, 96
        %v2819 = vpop.permute.xlu0 %2818
        %2820 = vrot.lane.b32.xlu0 %v2778, 96
        %v2821 = vpop.permute.xlu0 %2820
        %2822 = vrot.lane.b32.xlu0 %v2779, 96
        %v2823 = vpop.permute.xlu0 %2822
        %2824 = vrot.lane.b32.xlu0 %v2780, 96
        %v2825 = vpop.permute.xlu0 %2824
        %2826 = vrot.lane.b32.xlu0 %v2781, 96
        %v2827 = vpop.permute.xlu0 %2826
        %2828 = vrot.lane.b32.xlu0 %v2782, 96
        %v2829 = vpop.permute.xlu0 %2828
        %2830 = vrot.lane.b32.xlu0 %v2783, 96
        %v2831 = vpop.permute.xlu0 %2830
        %v2848 = vsel %vm1454, %v2801, 0.0
        %2849 = vadd.xlane.f32.xlu0 %v2848
        %v2850 = vpop.xlane.xlu0 %2849
        %v2851 = vsel %vm1454, %v2803, 0.0
        %2852 = vadd.xlane.f32.xlu0 %v2851
        %v2853 = vpop.xlane.xlu0 %2852
        %v2854 = vsel %vm1454, %v2805, 0.0
        %2855 = vadd.xlane.f32.xlu0 %v2854
        %v2856 = vpop.xlane.xlu0 %2855
        %v2857 = vsel %vm1454, %v2807, 0.0
        %2858 = vadd.xlane.f32.xlu0 %v2857
        %v2859 = vpop.xlane.xlu0 %2858
        %v2860 = vsel %vm1454, %v2809, 0.0
        %2861 = vadd.xlane.f32.xlu0 %v2860
        %v2862 = vpop.xlane.xlu0 %2861
        %v2863 = vsel %vm1454, %v2811, 0.0
        %2864 = vadd.xlane.f32.xlu0 %v2863
        %v2865 = vpop.xlane.xlu0 %2864
        %v2866 = vsel %vm1454, %v2813, 0.0
        %2867 = vadd.xlane.f32.xlu0 %v2866
        %v2868 = vpop.xlane.xlu0 %2867
        %v2869 = vsel %vm1454, %v2815, 0.0
        %2870 = vadd.xlane.f32.xlu0 %v2869
        %v2871 = vpop.xlane.xlu0 %2870
        %v2872 = vsel %vm1454, %v2817, 0.0
        %2873 = vadd.xlane.f32.xlu0 %v2872
        %v2874 = vpop.xlane.xlu0 %2873
        %v2875 = vsel %vm1454, %v2819, 0.0
        %2876 = vadd.xlane.f32.xlu0 %v2875
        %v2877 = vpop.xlane.xlu0 %2876
        %v2878 = vsel %vm1454, %v2821, 0.0
        %2879 = vadd.xlane.f32.xlu0 %v2878
        %v2880 = vpop.xlane.xlu0 %2879
        %v2881 = vsel %vm1454, %v2823, 0.0
        %2882 = vadd.xlane.f32.xlu0 %v2881
        %v2883 = vpop.xlane.xlu0 %2882
        %v2884 = vsel %vm1454, %v2825, 0.0
        %2885 = vadd.xlane.f32.xlu0 %v2884
        %v2886 = vpop.xlane.xlu0 %2885
        %v2887 = vsel %vm1454, %v2827, 0.0
        %2888 = vadd.xlane.f32.xlu0 %v2887
        %v2889 = vpop.xlane.xlu0 %2888
        %v2890 = vsel %vm1454, %v2829, 0.0
        %2891 = vadd.xlane.f32.xlu0 %v2890
        %v2892 = vpop.xlane.xlu0 %2891
        %v2893 = vsel %vm1454, %v2831, 0.0
        %2894 = vadd.xlane.f32.xlu0 %v2893
        %v2895 = vpop.xlane.xlu0 %2894
        %v2896 = vmul.f32 %v2850, %v1479
        %v2897 = vmul.f32 %v2853, %v1479
        %v2898 = vmul.f32 %v2856, %v1479
        %v2899 = vmul.f32 %v2859, %v1479
        %v2900 = vmul.f32 %v2862, %v1479
        %v2901 = vmul.f32 %v2865, %v1479
        %v2902 = vmul.f32 %v2868, %v1479
        %v2903 = vmul.f32 %v2871, %v1479
        %v2904 = vmul.f32 %v2874, %v1479
        %v2905 = vmul.f32 %v2877, %v1479
        %v2906 = vmul.f32 %v2880, %v1479
        %v2907 = vmul.f32 %v2883, %v1479
        %v2908 = vmul.f32 %v2886, %v1479
        %v2909 = vmul.f32 %v2889, %v1479
        %v2910 = vmul.f32 %v2892, %v1479
        %v2911 = vmul.f32 %v2895, %v1479
        %v2912 = vadd.f32 %v2896, 1.1920929e-07
        %v2913 = vadd.f32 %v2897, 1.1920929e-07
        %v2914 = vadd.f32 %v2898, 1.1920929e-07
        %v2915 = vadd.f32 %v2899, 1.1920929e-07
        %v2916 = vadd.f32 %v2900, 1.1920929e-07
        %v2917 = vadd.f32 %v2901, 1.1920929e-07
        %v2918 = vadd.f32 %v2902, 1.1920929e-07
        %v2919 = vadd.f32 %v2903, 1.1920929e-07
        %v2920 = vadd.f32 %v2904, 1.1920929e-07
        %v2921 = vadd.f32 %v2905, 1.1920929e-07
        %v2922 = vadd.f32 %v2906, 1.1920929e-07
        %v2923 = vadd.f32 %v2907, 1.1920929e-07
        %v2924 = vadd.f32 %v2908, 1.1920929e-07
        %v2925 = vadd.f32 %v2909, 1.1920929e-07
        %v2926 = vadd.f32 %v2910, 1.1920929e-07
        %v2927 = vadd.f32 %v2911, 1.1920929e-07
        %v2928 = vrsqrt.pop %v2912
        %v2929 = vrsqrt.pop %v2913
        %v2930 = vrsqrt.pop %v2914
        %v2931 = vrsqrt.pop %v2915
        %v2932 = vrsqrt.pop %v2916
        %v2933 = vrsqrt.pop %v2917
        %v2934 = vrsqrt.pop %v2918
        %v2935 = vrsqrt.pop %v2919
        %v2936 = vrsqrt.pop %v2920
        %v2937 = vrsqrt.pop %v2921
        %v2938 = vrsqrt.pop %v2922
        %v2939 = vrsqrt.pop %v2923
        %v2940 = vrsqrt.pop %v2924
        %v2941 = vrsqrt.pop %v2925
        %v2942 = vrsqrt.pop %v2926
        %v2943 = vrsqrt.pop %v2927
        %v2944 = vmul.f32 %v2752, %v2928
        %v2945 = vmul.f32 %v2753, %v2929
        %v2946 = vmul.f32 %v2754, %v2930
        %v2947 = vmul.f32 %v2755, %v2931
        %v2948 = vmul.f32 %v2756, %v2932
        %v2949 = vmul.f32 %v2757, %v2933
        %v2950 = vmul.f32 %v2758, %v2934
        %v2951 = vmul.f32 %v2759, %v2935
        %v2952 = vmul.f32 %v2760, %v2936
        %v2953 = vmul.f32 %v2761, %v2937
        %v2954 = vmul.f32 %v2762, %v2938
        %v2955 = vmul.f32 %v2763, %v2939
        %v2956 = vmul.f32 %v2764, %v2940
        %v2957 = vmul.f32 %v2765, %v2941
        %v2958 = vmul.f32 %v2766, %v2942
        %v2959 = vmul.f32 %v2767, %v2943
        %v2960 = vld [vmem:[#allocation2 + $0x8] sm:$0xff]
        %v2961 = vld [vmem:[#allocation2 + $0x18] sm:$0xff]
        %v2962 = vld [vmem:[#allocation2 + $0x28] sm:$0xff]
        %v2963 = vld [vmem:[#allocation2 + $0x38] sm:$0xff]
        %v2964 = vld [vmem:[#allocation2 + $0x48] sm:$0xff]
        %v2965 = vld [vmem:[#allocation2 + $0x58] sm:$0xff]
        %v2966 = vld [vmem:[#allocation2 + $0x68] sm:$0xff]
        %v2967 = vld [vmem:[#allocation2 + $0x78] sm:$0xff]
        %v2968 = vld [vmem:[#allocation2 + $0x88] sm:$0xff]
        %v2969 = vld [vmem:[#allocation2 + $0x98] sm:$0xff]
        %v2970 = vld [vmem:[#allocation2 + $0xa8] sm:$0xff]
        %v2971 = vld [vmem:[#allocation2 + $0xb8] sm:$0xff]
        %v2972 = vld [vmem:[#allocation2 + $0xc8] sm:$0xff]
        %v2973 = vld [vmem:[#allocation2 + $0xd8] sm:$0xff]
        %v2974 = vld [vmem:[#allocation2 + $0xe8] sm:$0xff]
        %v2975 = vld [vmem:[#allocation2 + $0xf8] sm:$0xff]
        %v2976 = vmul.f32 %v1888, %v2960
        %v2977 = vmul.f32 %v1888, %v2961
        %v2978 = vmul.f32 %v1888, %v2962
        %v2979 = vmul.f32 %v1888, %v2963
        %v2980 = vmul.f32 %v1888, %v2964
        %v2981 = vmul.f32 %v1888, %v2965
        %v2982 = vmul.f32 %v1888, %v2966
        %v2983 = vmul.f32 %v1888, %v2967
        %v2984 = vmul.f32 %v1888, %v2968
        %v2985 = vmul.f32 %v1888, %v2969
        %v2986 = vmul.f32 %v1888, %v2970
        %v2987 = vmul.f32 %v1888, %v2971
        %v2988 = vmul.f32 %v1888, %v2972
        %v2989 = vmul.f32 %v1888, %v2973
        %v2990 = vmul.f32 %v1888, %v2974
        %v2991 = vmul.f32 %v1888, %v2975
        %v2992 = vld [vmem:[%s4] sm:$0xff]
        %v2993 = vld [vmem:[%s4 + $0x8] sm:$0xff]
        %v2994 = vld [vmem:[%s4 + $0x10] sm:$0xff]
        %v2995 = vld [vmem:[%s4 + $0x18] sm:$0xff]
        %v2996 = vld [vmem:[%s4 + $0x20] sm:$0xff]
        %v2997 = vld [vmem:[%s4 + $0x28] sm:$0xff]
        %v2998 = vld [vmem:[%s4 + $0x30] sm:$0xff]
        %v2999 = vld [vmem:[%s4 + $0x38] sm:$0xff]
        %v3000 = vld [vmem:[%s4 + $0x40] sm:$0xff]
        %v3001 = vld [vmem:[%s4 + $0x48] sm:$0xff]
        %v3002 = vld [vmem:[%s4 + $0x50] sm:$0xff]
        %v3003 = vld [vmem:[%s4 + $0x58] sm:$0xff]
        %v3004 = vld [vmem:[%s4 + $0x60] sm:$0xff]
        %v3005 = vld [vmem:[%s4 + $0x68] sm:$0xff]
        %v3006 = vld [vmem:[%s4 + $0x70] sm:$0xff]
        %v3007 = vld [vmem:[%s4 + $0x78] sm:$0xff]
        %v3008 = vmul.f32 %v1921, %v2992
        %v3009 = vmul.f32 %v1921, %v2993
        %v3010 = vmul.f32 %v1921, %v2994
        %v3011 = vmul.f32 %v1921, %v2995
        %v3012 = vmul.f32 %v1921, %v2996
        %v3013 = vmul.f32 %v1921, %v2997
        %v3014 = vmul.f32 %v1921, %v2998
        %v3015 = vmul.f32 %v1921, %v2999
        %v3016 = vmul.f32 %v1921, %v3000
        %v3017 = vmul.f32 %v1921, %v3001
        %v3018 = vmul.f32 %v1921, %v3002
        %v3019 = vmul.f32 %v1921, %v3003
        %v3020 = vmul.f32 %v1921, %v3004
        %v3021 = vmul.f32 %v1921, %v3005
        %v3022 = vmul.f32 %v1921, %v3006
        %v3023 = vmul.f32 %v1921, %v3007
        %v3024 = vadd.f32 %v2976, %v3008
        %v3025 = vadd.f32 %v2977, %v3009
        %v3026 = vadd.f32 %v2978, %v3010
        %v3027 = vadd.f32 %v2979, %v3011
        %v3028 = vadd.f32 %v2980, %v3012
        %v3029 = vadd.f32 %v2981, %v3013
        %v3030 = vadd.f32 %v2982, %v3014
        %v3031 = vadd.f32 %v2983, %v3015
        %v3032 = vadd.f32 %v2984, %v3016
        %v3033 = vadd.f32 %v2985, %v3017
        %v3034 = vadd.f32 %v2986, %v3018
        %v3035 = vadd.f32 %v2987, %v3019
        %v3036 = vadd.f32 %v2988, %v3020
        %v3037 = vadd.f32 %v2989, %v3021
        %v3038 = vadd.f32 %v2990, %v3022
        %v3039 = vadd.f32 %v2991, %v3023
        %v3040 = vpack.c.bf16 %v2473, %v2472
        %v3041 = vpack.c.bf16 %v2475, %v2474
        %v3042 = vpack.c.bf16 %v2477, %v2476
        %v3043 = vpack.c.bf16 %v2479, %v2478
        %v3044 = vpack.c.bf16 %v2945, %v2944
        %v3045 = vpack.c.bf16 %v2947, %v2946
        %v3046 = vpack.c.bf16 %v2949, %v2948
        %v3047 = vpack.c.bf16 %v2951, %v2950
        %v3048 = vpack.c.bf16 %v2953, %v2952
        %v3049 = vpack.c.bf16 %v2955, %v2954
        %v3050 = vpack.c.bf16 %v2957, %v2956
        %v3051 = vpack.c.bf16 %v2959, %v2958
        %v3052 = vld [vmem:[%s659] sm:$0xff]
        %v3053 = vld [vmem:[%s659 + $0x8] sm:$0xff]
        %v3054 = vld [vmem:[%s659 + $0x10] sm:$0xff]
        %v3055 = vld [vmem:[%s659 + $0x18] sm:$0xff]
        %v3056 = vld [vmem:[%s659 + $0x20] sm:$0xff]
        %v3057 = vld [vmem:[%s659 + $0x28] sm:$0xff]
        %v3058 = vld [vmem:[%s659 + $0x30] sm:$0xff]
        %v3059 = vld [vmem:[%s659 + $0x38] sm:$0xff]
        %3064 = vrot.lane.b32.xlu0 %v3040, 96
        %v3065 = vpop.permute.xlu0 %3064
        %3066 = vrot.lane.b32.xlu0 %v3041, 96
        %v3067 = vpop.permute.xlu0 %3066
        %3068 = vrot.lane.b32.xlu0 %v3042, 96
        %v3069 = vpop.permute.xlu0 %3068
        %3070 = vrot.lane.b32.xlu0 %v3043, 96
        %v3071 = vpop.permute.xlu0 %3070
        %3080 = vrot.lane.b32.xlu0 %v3044, 96
        %v3081 = vpop.permute.xlu0 %3080
        %3082 = vrot.lane.b32.xlu0 %v3045, 96
        %v3083 = vpop.permute.xlu0 %3082
        %3084 = vrot.lane.b32.xlu0 %v3046, 96
        %v3085 = vpop.permute.xlu0 %3084
        %3086 = vrot.lane.b32.xlu0 %v3047, 96
        %v3087 = vpop.permute.xlu0 %3086
        %3088 = vrot.lane.b32.xlu0 %v3048, 96
        %v3089 = vpop.permute.xlu0 %3088
        %3090 = vrot.lane.b32.xlu0 %v3049, 96
        %v3091 = vpop.permute.xlu0 %3090
        %3092 = vrot.lane.b32.xlu0 %v3050, 96
        %v3093 = vpop.permute.xlu0 %3092
        %3094 = vrot.lane.b32.xlu0 %v3051, 96
        %v3095 = vpop.permute.xlu0 %3094
        %v3097 = vsel %vm1454, %v3065, 0
        %v3100 = vsel %vm1454, %v3067, 0
        %v3103 = vsel %vm1454, %v3069, 0
        %v3106 = vsel %vm1454, %v3071, 0
        %v3109 = vsel %vm1454, %v3081, 0
        %v3112 = vsel %vm1454, %v3083, 0
        %v3115 = vsel %vm1454, %v3085, 0
        %v3118 = vsel %vm1454, %v3087, 0
        %v3121 = vsel %vm1454, %v3089, 0
        %v3124 = vsel %vm1454, %v3091, 0
        %v3127 = vsel %vm1454, %v3093, 0
        %v3130 = vsel %vm1454, %v3095, 0
        %3132 = vmatprep.subr.bf16.mxu0 0
        %3133 = vmatpush1.bf16.xpose.msra.mxu0 %v3130
        %3134 = vmatprep.subr.bf16.mxu0 0
        %3135 = vmatpush1.bf16.xpose.msra.mxu0 %v3127
        %3136 = vmatprep.subr.bf16.mxu0 0
        %3137 = vmatpush1.bf16.xpose.msra.mxu0 %v3124
        %3138 = vmatprep.subr.bf16.mxu0 0
        %3139 = vmatpush1.bf16.xpose.msra.mxu0 %v3121
        %3140 = vmatprep.subr.bf16.mxu0 0
        %3141 = vmatpush1.bf16.xpose.msra.mxu0 %v3118
        %3142 = vmatprep.subr.bf16.mxu0 0
        %3143 = vmatpush1.bf16.xpose.msra.mxu0 %v3115
        %3144 = vmatprep.subr.bf16.mxu0 0
        %3145 = vmatpush1.bf16.xpose.msra.mxu0 %v3112
        %3146 = vmatprep.subr.bf16.mxu0 0
        %3147 = vmatpush1.bf16.xpose.msra.mxu0 %v3109
        %3148 = vmatprep.subr.bf16.mxu0 0
        %3149 = vmatpush2.bf16.xpose.msra.mxu0 0
        %3150 = vmatprep.subr.bf16.mxu0 0
        %3151 = vmatpush2.bf16.xpose.msra.mxu0 0
        %3152 = vmatprep.subr.bf16.mxu0 0
        %3153 = vmatpush2.bf16.xpose.msra.mxu0 0
        %3154 = vmatprep.subr.bf16.mxu0 0
        %3155 = vmatpush2.bf16.xpose.msra.mxu0 0
        %3156 = vmatprep.subr.bf16.mxu0 0
        %3157 = vmatpush2.bf16.xpose.msra.mxu0 0
        %3158 = vmatprep.subr.bf16.mxu0 0
        %3159 = vmatpush2.bf16.xpose.msra.mxu0 0
        %3160 = vmatprep.subr.bf16.mxu0 0
        %3161 = vmatpush2.bf16.xpose.msra.mxu0 0
        %3162 = vmatprep.subr.bf16.mxu0 0
        %3163 = vmatpush2.bf16.xpose.msra.mxu0 0
        %3164 = vmatprep.mubr.bf16.mxu0 0
        %3165 = vmatmul.mubr.bf16.gmra.mxu0 %v3097
        %v3166 = vpop.f32.mrf.mxu0
        %v3167 = vadd.f32 %v3052, %v3166
        %v3168 = vpop.f32.mrf.mxu0
        %v3169 = vpop.f32.mrf.mxu0
        %v3170 = vadd.f32 %v3053, %v3169
        %v3171 = vpop.f32.mrf.mxu0
        %3172 = vmatprep.mubr.bf16.mxu0 0
        %3173 = vmatmul.mubr.bf16.gmra.mxu0 %v3100
        %v3174 = vpop.f32.mrf.mxu0
        %v3175 = vadd.f32 %v3054, %v3174
        %v3176 = vpop.f32.mrf.mxu0
        %v3177 = vpop.f32.mrf.mxu0
        %v3178 = vadd.f32 %v3055, %v3177
        %v3179 = vpop.f32.mrf.mxu0
        %3180 = vmatprep.mubr.bf16.mxu0 0
        %3181 = vmatmul.mubr.bf16.gmra.mxu0 %v3103
        %v3182 = vpop.f32.mrf.mxu0
        %v3183 = vadd.f32 %v3056, %v3182
        %v3184 = vpop.f32.mrf.mxu0
        %v3185 = vpop.f32.mrf.mxu0
        %v3186 = vadd.f32 %v3057, %v3185
        %v3187 = vpop.f32.mrf.mxu0
        %3188 = vmatprep.mubr.bf16.mxu0 0
        %3189 = vmatmul.mubr.bf16.gmra.mxu0 %v3106
        %v3190 = vpop.f32.mrf.mxu0
        %v3191 = vadd.f32 %v3058, %v3190
        %v3192 = vpop.f32.mrf.mxu0
        %v3193 = vpop.f32.mrf.mxu0
        %v3194 = vadd.f32 %v3059, %v3193
        %v3195 = vpop.f32.mrf.mxu0
        %3196 = vdwg.mxu0
        %3197 = vmax.xlane.f32.xlu0 %v3167
        %v3198 = vpop.xlane.xlu0 %3197
        %3199 = vmax.xlane.f32.xlu0 %v3170
        %v3200 = vpop.xlane.xlu0 %3199
        %3201 = vmax.xlane.f32.xlu0 %v3175
        %v3202 = vpop.xlane.xlu0 %3201
        %3203 = vmax.xlane.f32.xlu0 %v3178
        %v3204 = vpop.xlane.xlu0 %3203
        %3205 = vmax.xlane.f32.xlu0 %v3183
        %v3206 = vpop.xlane.xlu0 %3205
        %3207 = vmax.xlane.f32.xlu0 %v3186
        %v3208 = vpop.xlane.xlu0 %3207
        %3209 = vmax.xlane.f32.xlu0 %v3191
        %v3210 = vpop.xlane.xlu0 %3209
        %3211 = vmax.xlane.f32.xlu0 %v3194
        %v3212 = vpop.xlane.xlu0 %3211
        %v3213 = vsub.f32 %v3167, %v3198
        %v3214 = vsub.f32 %v3170, %v3200
        %v3215 = vsub.f32 %v3175, %v3202
        %v3216 = vsub.f32 %v3178, %v3204
        %v3217 = vsub.f32 %v3183, %v3206
        %v3218 = vsub.f32 %v3186, %v3208
        %v3219 = vsub.f32 %v3191, %v3210
        %v3220 = vsub.f32 %v3194, %v3212
        %v3221 = vmul.f32 %v3213, 1.442695
        %v3222 = vpow.pop %v3221
        %v3223 = vmul.f32 %v3214, 1.442695
        %v3224 = vpow.pop %v3223
        %v3225 = vmul.f32 %v3215, 1.442695
        %v3226 = vpow.pop %v3225
        %v3227 = vmul.f32 %v3216, 1.442695
        %v3228 = vpow.pop %v3227
        %v3229 = vmul.f32 %v3217, 1.442695
        %v3230 = vpow.pop %v3229
        %v3231 = vmul.f32 %v3218, 1.442695
        %v3232 = vpow.pop %v3231
        %v3233 = vmul.f32 %v3219, 1.442695
        %v3234 = vpow.pop %v3233
        %v3235 = vmul.f32 %v3220, 1.442695
        %v3236 = vpow.pop %v3235
        %3237 = vadd.xlane.f32.xlu0 %v3222
        %v3238 = vpop.xlane.xlu0 %3237
        %3239 = vadd.xlane.f32.xlu0 %v3224
        %v3240 = vpop.xlane.xlu0 %3239
        %3241 = vadd.xlane.f32.xlu0 %v3226
        %v3242 = vpop.xlane.xlu0 %3241
        %3243 = vadd.xlane.f32.xlu0 %v3228
        %v3244 = vpop.xlane.xlu0 %3243
        %3245 = vadd.xlane.f32.xlu0 %v3230
        %v3246 = vpop.xlane.xlu0 %3245
        %3247 = vadd.xlane.f32.xlu0 %v3232
        %v3248 = vpop.xlane.xlu0 %3247
        %3249 = vadd.xlane.f32.xlu0 %v3234
        %v3250 = vpop.xlane.xlu0 %3249
        %3251 = vadd.xlane.f32.xlu0 %v3236
        %v3252 = vpop.xlane.xlu0 %3251
        %v3253 = vpack.c.bf16 %v3224, %v3222
        %v3254 = vpack.c.bf16 %v3228, %v3226
        %v3255 = vpack.c.bf16 %v3232, %v3230
        %v3256 = vpack.c.bf16 %v3236, %v3234
        %v3257 = vpack.c.bf16 %v3025, %v3024
        %v3258 = vpack.c.bf16 %v3027, %v3026
        %v3259 = vpack.c.bf16 %v3029, %v3028
        %v3260 = vpack.c.bf16 %v3031, %v3030
        %v3261 = vpack.c.bf16 %v3033, %v3032
        %v3262 = vpack.c.bf16 %v3035, %v3034
        %v3263 = vpack.c.bf16 %v3037, %v3036
        %v3264 = vpack.c.bf16 %v3039, %v3038
        %3273 = vrot.lane.b32.xlu0 %v3257, 96
        %v3274 = vpop.permute.xlu0 %3273
        %3275 = vrot.lane.b32.xlu0 %v3258, 96
        %v3276 = vpop.permute.xlu0 %3275
        %3277 = vrot.lane.b32.xlu0 %v3259, 96
        %v3278 = vpop.permute.xlu0 %3277
        %3279 = vrot.lane.b32.xlu0 %v3260, 96
        %v3280 = vpop.permute.xlu0 %3279
        %3281 = vrot.lane.b32.xlu0 %v3261, 96
        %v3282 = vpop.permute.xlu0 %3281
        %3283 = vrot.lane.b32.xlu0 %v3262, 96
        %v3284 = vpop.permute.xlu0 %3283
        %3285 = vrot.lane.b32.xlu0 %v3263, 96
        %v3286 = vpop.permute.xlu0 %3285
        %3287 = vrot.lane.b32.xlu0 %v3264, 96
        %v3288 = vpop.permute.xlu0 %3287
        %3297 = vmatprep.subr.bf16.mxu0 0
        %3298 = vmatpush1.bf16.msra.mxu0 %v3288
        %3299 = vmatprep.subr.bf16.mxu0 0
        %3300 = vmatpush1.bf16.msra.mxu0 %v3286
        %3301 = vmatprep.subr.bf16.mxu0 0
        %3302 = vmatpush1.bf16.msra.mxu0 %v3284
        %3303 = vmatprep.subr.bf16.mxu0 0
        %3304 = vmatpush1.bf16.msra.mxu0 %v3282
        %3305 = vmatprep.subr.bf16.mxu0 0
        %3306 = vmatpush1.bf16.msra.mxu0 %v3280
        %3307 = vmatprep.subr.bf16.mxu0 0
        %3308 = vmatpush1.bf16.msra.mxu0 %v3278
        %3309 = vmatprep.subr.bf16.mxu0 0
        %3310 = vmatpush1.bf16.msra.mxu0 %v3276
        %3311 = vmatprep.subr.bf16.mxu0 0
        %3312 = vmatpush1.bf16.msra.mxu0 %v3274
        %3313 = vmatprep.subr.bf16.mxu0 0
        %3314 = vmatpush2.bf16.msra.mxu0 0
        %3315 = vmatprep.subr.bf16.mxu0 0
        %3316 = vmatpush2.bf16.msra.mxu0 0
        %3317 = vmatprep.subr.bf16.mxu0 0
        %3318 = vmatpush2.bf16.msra.mxu0 0
        %3319 = vmatprep.subr.bf16.mxu0 0
        %3320 = vmatpush2.bf16.msra.mxu0 0
        %3321 = vmatprep.subr.bf16.mxu0 0
        %3322 = vmatpush2.bf16.msra.mxu0 0
        %3323 = vmatprep.subr.bf16.mxu0 0
        %3324 = vmatpush2.bf16.msra.mxu0 0
        %3325 = vmatprep.subr.bf16.mxu0 0
        %3326 = vmatpush2.bf16.msra.mxu0 0
        %3327 = vmatprep.subr.bf16.mxu0 0
        %3328 = vmatpush2.bf16.msra.mxu0 0
        %3329 = vmatprep.mubr.bf16.mxu0 0
        %3330 = vmatmul.mubr.bf16.gmra.mxu0 %v3253
        %v3331 = vpop.f32.mrf.mxu0
        %v3332 = vadd.f32 0.0, %v3331
        %v3333 = vpop.f32.mrf.mxu0
        %v3334 = vpop.f32.mrf.mxu0
        %v3335 = vadd.f32 0.0, %v3334
        %v3336 = vpop.f32.mrf.mxu0
        %3337 = vmatprep.mubr.bf16.mxu0 0
        %3338 = vmatmul.mubr.bf16.gmra.mxu0 %v3254
        %v3339 = vpop.f32.mrf.mxu0
        %v3340 = vadd.f32 0.0, %v3339
        %v3341 = vpop.f32.mrf.mxu0
        %v3342 = vpop.f32.mrf.mxu0
        %v3343 = vadd.f32 0.0, %v3342
        %v3344 = vpop.f32.mrf.mxu0
        %3345 = vmatprep.mubr.bf16.mxu0 0
        %3346 = vmatmul.mubr.bf16.gmra.mxu0 %v3255
        %v3347 = vpop.f32.mrf.mxu0
        %v3348 = vadd.f32 0.0, %v3347
        %v3349 = vpop.f32.mrf.mxu0
        %v3350 = vpop.f32.mrf.mxu0
        %v3351 = vadd.f32 0.0, %v3350
        %v3352 = vpop.f32.mrf.mxu0
        %3353 = vmatprep.mubr.bf16.mxu0 0
        %3354 = vmatmul.mubr.bf16.gmra.mxu0 %v3256
        %v3355 = vpop.f32.mrf.mxu0
        %v3356 = vadd.f32 0.0, %v3355
        %v3357 = vpop.f32.mrf.mxu0
        %v3358 = vpop.f32.mrf.mxu0
        %v3359 = vadd.f32 0.0, %v3358
        %v3360 = vpop.f32.mrf.mxu0
        %3361 = vdwg.mxu0
        %v3362 = vrcp.pop %v3238
        %v3363 = vrcp.pop %v3240
        %v3364 = vrcp.pop %v3242
        %v3365 = vrcp.pop %v3244
        %v3366 = vrcp.pop %v3246
        %v3367 = vrcp.pop %v3248
        %v3368 = vrcp.pop %v3250
        %v3369 = vrcp.pop %v3252
        %v3370 = vmul.f32 %v3332, %v3362
        %v3371 = vmul.f32 %v3335, %v3363
        %v3372 = vmul.f32 %v3340, %v3364
        %v3373 = vmul.f32 %v3343, %v3365
        %v3374 = vmul.f32 %v3348, %v3366
        %v3375 = vmul.f32 %v3351, %v3367
        %v3376 = vmul.f32 %v3356, %v3368
        %v3377 = vmul.f32 %v3359, %v3369
        %3386 = vrot.lane.b32.xlu0 %v3370, 32
        %v3387 = vpop.permute.xlu0 %3386
        %3388 = vrot.lane.b32.xlu0 %v3371, 32
        %v3389 = vpop.permute.xlu0 %3388
        %3390 = vrot.lane.b32.xlu0 %v3372, 32
        %v3391 = vpop.permute.xlu0 %3390
        %3392 = vrot.lane.b32.xlu0 %v3373, 32
        %v3393 = vpop.permute.xlu0 %3392
        %3394 = vrot.lane.b32.xlu0 %v3374, 32
        %v3395 = vpop.permute.xlu0 %3394
        %3396 = vrot.lane.b32.xlu0 %v3375, 32
        %v3397 = vpop.permute.xlu0 %3396
        %3398 = vrot.lane.b32.xlu0 %v3376, 32
        %v3399 = vpop.permute.xlu0 %3398
        %3400 = vrot.lane.b32.xlu0 %v3377, 32
        %v3401 = vpop.permute.xlu0 %3400
        %vm3410 = vcmask 523520
        %3411 = vst.msk [vmem:[#allocation4] sm:$0xff] %vm3410, %v3387
        %3412 = vst.msk [vmem:[#allocation4 + $0x8] sm:$0xff] %vm3410, %v3389
        %3413 = vst.msk [vmem:[#allocation4 + $0x10] sm:$0xff] %vm3410, %v3391
        %3414 = vst.msk [vmem:[#allocation4 + $0x18] sm:$0xff] %vm3410, %v3393
        %3415 = vst.msk [vmem:[#allocation4 + $0x20] sm:$0xff] %vm3410, %v3395
        %3416 = vst.msk [vmem:[#allocation4 + $0x28] sm:$0xff] %vm3410, %v3397
        %3417 = vst.msk [vmem:[#allocation4 + $0x30] sm:$0xff] %vm3410, %v3399
        %3418 = vst.msk [vmem:[#allocation4 + $0x38] sm:$0xff] %vm3410, %v3401
        %v3419 = vld [vmem:[#allocation4] sm:$0xff]
        %v3420 = vld [vmem:[#allocation4 + $0x8] sm:$0xff]
        %v3421 = vld [vmem:[#allocation4 + $0x10] sm:$0xff]
        %v3422 = vld [vmem:[#allocation4 + $0x18] sm:$0xff]
        %v3423 = vld [vmem:[#allocation4 + $0x20] sm:$0xff]
        %v3424 = vld [vmem:[#allocation4 + $0x28] sm:$0xff]
        %v3425 = vld [vmem:[#allocation4 + $0x30] sm:$0xff]
        %v3426 = vld [vmem:[#allocation4 + $0x38] sm:$0xff]
        %v3427 = vpack.c.bf16 %v3420, %v3419
        %v3428 = vpack.c.bf16 %v3422, %v3421
        %v3429 = vpack.c.bf16 %v3424, %v3423
        %v3430 = vpack.c.bf16 %v3426, %v3425
        %v3431 = vld [vmem:[%s14] sm:$0xf]
        %v3432 = vld [vmem:[%s14 + $0x4] sm:$0xf]
        %v3433 = vld [vmem:[%s14 + $0x8] sm:$0xf]
        %v3434 = vld [vmem:[%s14 + $0xc] sm:$0xf]
        %v3435 = vld [vmem:[%s14 + $0x10] sm:$0xf]
        %v3436 = vld [vmem:[%s14 + $0x14] sm:$0xf]
        %v3437 = vld [vmem:[%s14 + $0x18] sm:$0xf]
        %v3438 = vld [vmem:[%s14 + $0x1c] sm:$0xf]
        %v3447 = vunpack.c.l.b16 %v3431
        %v3448 = vunpack.c.l.b16 %v3432
        %v3449 = vunpack.c.l.b16 %v3433
        %v3450 = vunpack.c.l.b16 %v3434
        %v3451 = vunpack.c.l.b16 %v3435
        %v3452 = vunpack.c.l.b16 %v3436
        %v3453 = vunpack.c.l.b16 %v3437
        %v3454 = vunpack.c.l.b16 %v3438
        %v3455 = vpack.c.b16 %v3448, %v3447
        %v3456 = vpack.c.b16 %v3450, %v3449
        %v3457 = vpack.c.b16 %v3452, %v3451
        %v3458 = vpack.c.b16 %v3454, %v3453
        %v3464 = vsel %vm770, %v3427, 0
        %v3467 = vsel %vm770, %v3428, 0
        %v3470 = vsel %vm770, %v3429, 0
        %v3473 = vsel %vm770, %v3430, 0
        %3475 = vmatprep.subr.bf16.mxu0 0
        %3476 = vmatpush1.bf16.msra.mxu0 0
        %3477 = vmatprep.subr.bf16.mxu0 0
        %3478 = vmatpush1.bf16.msra.mxu0 0
        %3479 = vmatprep.subr.bf16.mxu0 0
        %3480 = vmatpush1.bf16.msra.mxu0 0
        %3481 = vmatprep.subr.bf16.mxu0 0
        %3482 = vmatpush1.bf16.msra.mxu0 0
        %3483 = vmatprep.subr.bf16.mxu0 0
        %3484 = vmatpush1.bf16.msra.mxu0 %v3458
        %3485 = vmatprep.subr.bf16.mxu0 0
        %3486 = vmatpush1.bf16.msra.mxu0 %v3457
        %3487 = vmatprep.subr.bf16.mxu0 0
        %3488 = vmatpush1.bf16.msra.mxu0 %v3456
        %3489 = vmatprep.subr.bf16.mxu0 0
        %3490 = vmatpush1.bf16.msra.mxu0 %v3455
        %3491 = vmatprep.subr.bf16.mxu0 0
        %3492 = vmatpush2.bf16.msra.mxu0 0
        %3493 = vmatprep.subr.bf16.mxu0 0
        %3494 = vmatpush2.bf16.msra.mxu0 0
        %3495 = vmatprep.subr.bf16.mxu0 0
        %3496 = vmatpush2.bf16.msra.mxu0 0
        %3497 = vmatprep.subr.bf16.mxu0 0
        %3498 = vmatpush2.bf16.msra.mxu0 0
        %3499 = vmatprep.subr.bf16.mxu0 0
        %3500 = vmatpush2.bf16.msra.mxu0 0
        %3501 = vmatprep.subr.bf16.mxu0 0
        %3502 = vmatpush2.bf16.msra.mxu0 0
        %3503 = vmatprep.subr.bf16.mxu0 0
        %3504 = vmatpush2.bf16.msra.mxu0 0
        %3505 = vmatprep.subr.bf16.mxu0 0
        %3506 = vmatpush2.bf16.msra.mxu0 0
        %3507 = vmatprep.mubr.bf16.mxu0 0
        %3508 = vmatmul.mubr.bf16.gmra.mxu0 %v3464
        %v3509 = vpop.f32.mrf.mxu0
        %v3510 = vadd.f32 0.0, %v3509
        %v3511 = vpop.f32.mrf.mxu0
        %v3512 = vpop.f32.mrf.mxu0
        %v3513 = vadd.f32 0.0, %v3512
        %v3514 = vpop.f32.mrf.mxu0
        %3515 = vmatprep.mubr.bf16.mxu0 0
        %3516 = vmatmul.mubr.bf16.gmra.mxu0 %v3467
        %v3517 = vpop.f32.mrf.mxu0
        %v3518 = vadd.f32 0.0, %v3517
        %v3519 = vpop.f32.mrf.mxu0
        %v3520 = vpop.f32.mrf.mxu0
        %v3521 = vadd.f32 0.0, %v3520
        %v3522 = vpop.f32.mrf.mxu0
        %3523 = vmatprep.mubr.bf16.mxu0 0
        %3524 = vmatmul.mubr.bf16.gmra.mxu0 %v3470
        %v3525 = vpop.f32.mrf.mxu0
        %v3526 = vadd.f32 0.0, %v3525
        %v3527 = vpop.f32.mrf.mxu0
        %v3528 = vpop.f32.mrf.mxu0
        %v3529 = vadd.f32 0.0, %v3528
        %v3530 = vpop.f32.mrf.mxu0
        %3531 = vmatprep.mubr.bf16.mxu0 0
        %3532 = vmatmul.mubr.bf16.gmra.mxu0 %v3473
        %v3533 = vpop.f32.mrf.mxu0
        %v3534 = vadd.f32 0.0, %v3533
        %v3535 = vpop.f32.mrf.mxu0
        %v3536 = vpop.f32.mrf.mxu0
        %v3537 = vadd.f32 0.0, %v3536
        %v3538 = vpop.f32.mrf.mxu0
        %3539 = vdwg.mxu0
        %v3540 = vld [vmem:[%s635] sm:$0xff]
        %v3541 = vld [vmem:[%s635 + $0x8] sm:$0xff]
        %v3542 = vld [vmem:[%s635 + $0x10] sm:$0xff]
        %v3543 = vld [vmem:[%s635 + $0x18] sm:$0xff]
        %v3544 = vld [vmem:[%s635 + $0x20] sm:$0xff]
        %v3545 = vld [vmem:[%s635 + $0x28] sm:$0xff]
        %v3546 = vld [vmem:[%s635 + $0x30] sm:$0xff]
        %v3547 = vld [vmem:[%s635 + $0x38] sm:$0xff]
        %v3548 = vmul.f32 %v688, %v3540
        %v3549 = vmul.f32 %v688, %v3541
        %v3550 = vmul.f32 %v688, %v3542
        %v3551 = vmul.f32 %v688, %v3543
        %v3552 = vmul.f32 %v688, %v3544
        %v3553 = vmul.f32 %v688, %v3545
        %v3554 = vmul.f32 %v688, %v3546
        %v3555 = vmul.f32 %v688, %v3547
        %v3556 = vld [vmem:[%s641] sm:$0xff]
        %v3557 = vld [vmem:[%s641 + $0x8] sm:$0xff]
        %v3558 = vld [vmem:[%s641 + $0x10] sm:$0xff]
        %v3559 = vld [vmem:[%s641 + $0x18] sm:$0xff]
        %v3560 = vld [vmem:[%s641 + $0x20] sm:$0xff]
        %v3561 = vld [vmem:[%s641 + $0x28] sm:$0xff]
        %v3562 = vld [vmem:[%s641 + $0x30] sm:$0xff]
        %v3563 = vld [vmem:[%s641 + $0x38] sm:$0xff]
        %v3564 = vmul.f32 %v721, %v3556
        %v3565 = vmul.f32 %v721, %v3557
        %v3566 = vmul.f32 %v721, %v3558
        %v3567 = vmul.f32 %v721, %v3559
        %v3568 = vmul.f32 %v721, %v3560
        %v3569 = vmul.f32 %v721, %v3561
        %v3570 = vmul.f32 %v721, %v3562
        %v3571 = vmul.f32 %v721, %v3563
        %v3572 = vadd.f32 %v3548, %v3564
        %v3573 = vadd.f32 %v3549, %v3565
        %v3574 = vadd.f32 %v3550, %v3566
        %v3575 = vadd.f32 %v3551, %v3567
        %v3576 = vadd.f32 %v3552, %v3568
        %v3577 = vadd.f32 %v3553, %v3569
        %v3578 = vadd.f32 %v3554, %v3570
        %v3579 = vadd.f32 %v3555, %v3571
        %v3580 = vadd.f32 %v3572, %v3510
        %v3581 = vadd.f32 %v3573, %v3513
        %v3582 = vadd.f32 %v3574, %v3518
        %v3583 = vadd.f32 %v3575, %v3521
        %v3584 = vadd.f32 %v3576, %v3526
        %v3585 = vadd.f32 %v3577, %v3529
        %v3586 = vadd.f32 %v3578, %v3534
        %v3587 = vadd.f32 %v3579, %v3537
        %v3588 = vmul.f32 %v3580, %v3580
        %v3589 = vmul.f32 %v3581, %v3581
        %v3590 = vmul.f32 %v3582, %v3582
        %v3591 = vmul.f32 %v3583, %v3583
        %v3592 = vmul.f32 %v3584, %v3584
        %v3593 = vmul.f32 %v3585, %v3585
        %v3594 = vmul.f32 %v3586, %v3586
        %v3595 = vmul.f32 %v3587, %v3587
        %v3596 = vsel %vm770, %v3588, 0.0
        %3597 = vadd.xlane.f32.xlu0 %v3596
        %v3598 = vpop.xlane.xlu0 %3597
        %v3599 = vsel %vm770, %v3589, 0.0
        %3600 = vadd.xlane.f32.xlu0 %v3599
        %v3601 = vpop.xlane.xlu0 %3600
        %v3602 = vsel %vm770, %v3590, 0.0
        %3603 = vadd.xlane.f32.xlu0 %v3602
        %v3604 = vpop.xlane.xlu0 %3603
        %v3605 = vsel %vm770, %v3591, 0.0
        %3606 = vadd.xlane.f32.xlu0 %v3605
        %v3607 = vpop.xlane.xlu0 %3606
        %v3608 = vsel %vm770, %v3592, 0.0
        %3609 = vadd.xlane.f32.xlu0 %v3608
        %v3610 = vpop.xlane.xlu0 %3609
        %v3611 = vsel %vm770, %v3593, 0.0
        %3612 = vadd.xlane.f32.xlu0 %v3611
        %v3613 = vpop.xlane.xlu0 %3612
        %v3614 = vsel %vm770, %v3594, 0.0
        %3615 = vadd.xlane.f32.xlu0 %v3614
        %v3616 = vpop.xlane.xlu0 %3615
        %v3617 = vsel %vm770, %v3595, 0.0
        %3618 = vadd.xlane.f32.xlu0 %v3617
        %v3619 = vpop.xlane.xlu0 %3618
        %v3620 = vmul.f32 %v3598, %v819
        %v3621 = vmul.f32 %v3601, %v819
        %v3622 = vmul.f32 %v3604, %v819
        %v3623 = vmul.f32 %v3607, %v819
        %v3624 = vmul.f32 %v3610, %v819
        %v3625 = vmul.f32 %v3613, %v819
        %v3626 = vmul.f32 %v3616, %v819
        %v3627 = vmul.f32 %v3619, %v819
        %v3628 = vadd.f32 %v3620, 1.1920929e-07
        %v3629 = vadd.f32 %v3621, 1.1920929e-07
        %v3630 = vadd.f32 %v3622, 1.1920929e-07
        %v3631 = vadd.f32 %v3623, 1.1920929e-07
        %v3632 = vadd.f32 %v3624, 1.1920929e-07
        %v3633 = vadd.f32 %v3625, 1.1920929e-07
        %v3634 = vadd.f32 %v3626, 1.1920929e-07
        %v3635 = vadd.f32 %v3627, 1.1920929e-07
        %v3636 = vrsqrt.pop %v3628
        %v3637 = vrsqrt.pop %v3629
        %v3638 = vrsqrt.pop %v3630
        %v3639 = vrsqrt.pop %v3631
        %v3640 = vrsqrt.pop %v3632
        %v3641 = vrsqrt.pop %v3633
        %v3642 = vrsqrt.pop %v3634
        %v3643 = vrsqrt.pop %v3635
        %v3644 = vmul.f32 %v3580, %v3636
        %v3645 = vmul.f32 %v3581, %v3637
        %v3646 = vmul.f32 %v3582, %v3638
        %v3647 = vmul.f32 %v3583, %v3639
        %v3648 = vmul.f32 %v3584, %v3640
        %v3649 = vmul.f32 %v3585, %v3641
        %v3650 = vmul.f32 %v3586, %v3642
        %v3651 = vmul.f32 %v3587, %v3643
        %v3652 = vpack.c.bf16 %v3645, %v3644
        %v3653 = vpack.c.bf16 %v3647, %v3646
        %v3654 = vpack.c.bf16 %v3649, %v3648
        %v3655 = vpack.c.bf16 %v3651, %v3650
        %v3656 = vld [vmem:[%s15] sm:$0xff]
        %v3657 = vld [vmem:[%s15 + $0x8] sm:$0xff]
        %v3658 = vld [vmem:[%s15 + $0x10] sm:$0xff]
        %v3659 = vld [vmem:[%s15 + $0x18] sm:$0xff]
        %v3660 = vld [vmem:[%s15 + $0x20] sm:$0xff]
        %v3661 = vld [vmem:[%s15 + $0x28] sm:$0xff]
        %v3662 = vld [vmem:[%s15 + $0x30] sm:$0xff]
        %v3663 = vld [vmem:[%s15 + $0x38] sm:$0xff]
        %v3672 = vunpack.c.l.b16 %v3656
        %v3673 = vunpack.c.h.b16 %v3656
        %v3674 = vunpack.c.l.b16 %v3657
        %v3675 = vunpack.c.h.b16 %v3657
        %v3676 = vunpack.c.l.b16 %v3658
        %v3677 = vunpack.c.h.b16 %v3658
        %v3678 = vunpack.c.l.b16 %v3659
        %v3679 = vunpack.c.h.b16 %v3659
        %v3680 = vunpack.c.l.b16 %v3660
        %v3681 = vunpack.c.h.b16 %v3660
        %v3682 = vunpack.c.l.b16 %v3661
        %v3683 = vunpack.c.h.b16 %v3661
        %v3684 = vunpack.c.l.b16 %v3662
        %v3685 = vunpack.c.h.b16 %v3662
        %v3686 = vunpack.c.l.b16 %v3663
        %v3687 = vunpack.c.h.b16 %v3663
        %v3688 = vpack.c.b16 %v3674, %v3672
        %v3689 = vpack.c.b16 %v3675, %v3673
        %v3690 = vpack.c.b16 %v3678, %v3676
        %v3691 = vpack.c.b16 %v3679, %v3677
        %v3692 = vpack.c.b16 %v3682, %v3680
        %v3693 = vpack.c.b16 %v3683, %v3681
        %v3694 = vpack.c.b16 %v3686, %v3684
        %v3695 = vpack.c.b16 %v3687, %v3685
        %v3705 = vsel %vm770, %v3652, 0
        %v3708 = vsel %vm770, %v3653, 0
        %v3711 = vsel %vm770, %v3654, 0
        %v3714 = vsel %vm770, %v3655, 0
        %3716 = vmatprep.subr.bf16.mxu0 0
        %3717 = vmatpush1.bf16.msra.mxu0 0
        %3718 = vmatprep.subr.bf16.mxu0 0
        %3719 = vmatpush1.bf16.msra.mxu0 0
        %3720 = vmatprep.subr.bf16.mxu0 0
        %3721 = vmatpush1.bf16.msra.mxu0 0
        %3722 = vmatprep.subr.bf16.mxu0 0
        %3723 = vmatpush1.bf16.msra.mxu0 0
        %3724 = vmatprep.subr.bf16.mxu0 %v3695
        %3725 = vmatpush1.bf16.msra.mxu0 %v3694
        %3726 = vmatprep.subr.bf16.mxu0 %v3693
        %3727 = vmatpush1.bf16.msra.mxu0 %v3692
        %3728 = vmatprep.subr.bf16.mxu0 %v3691
        %3729 = vmatpush1.bf16.msra.mxu0 %v3690
        %3730 = vmatprep.subr.bf16.mxu0 %v3689
        %3731 = vmatpush1.bf16.msra.mxu0 %v3688
        %3732 = vmatprep.subr.bf16.mxu0 0
        %3733 = vmatpush2.bf16.msra.mxu0 0
        %3734 = vmatprep.subr.bf16.mxu0 0
        %3735 = vmatpush2.bf16.msra.mxu0 0
        %3736 = vmatprep.subr.bf16.mxu0 0
        %3737 = vmatpush2.bf16.msra.mxu0 0
        %3738 = vmatprep.subr.bf16.mxu0 0
        %3739 = vmatpush2.bf16.msra.mxu0 0
        %3740 = vmatprep.subr.bf16.mxu0 0
        %3741 = vmatpush2.bf16.msra.mxu0 0
        %3742 = vmatprep.subr.bf16.mxu0 0
        %3743 = vmatpush2.bf16.msra.mxu0 0
        %3744 = vmatprep.subr.bf16.mxu0 0
        %3745 = vmatpush2.bf16.msra.mxu0 0
        %3746 = vmatprep.subr.bf16.mxu0 0
        %3747 = vmatpush2.bf16.msra.mxu0 0
        %3748 = vmatprep.mubr.bf16.mxu0 0
        %3749 = vmatmul.mubr.bf16.gmra.mxu0 %v3705
        %v3750 = vpop.f32.mrf.mxu0
        %v3751 = vadd.f32 0.0, %v3750
        %v3752 = vpop.f32.mrf.mxu0
        %v3753 = vadd.f32 0.0, %v3752
        %v3754 = vpop.f32.mrf.mxu0
        %v3755 = vadd.f32 0.0, %v3754
        %v3756 = vpop.f32.mrf.mxu0
        %v3757 = vadd.f32 0.0, %v3756
        %3758 = vmatprep.mubr.bf16.mxu0 0
        %3759 = vmatmul.mubr.bf16.gmra.mxu0 %v3708
        %v3760 = vpop.f32.mrf.mxu0
        %v3761 = vadd.f32 0.0, %v3760
        %v3762 = vpop.f32.mrf.mxu0
        %v3763 = vadd.f32 0.0, %v3762
        %v3764 = vpop.f32.mrf.mxu0
        %v3765 = vadd.f32 0.0, %v3764
        %v3766 = vpop.f32.mrf.mxu0
        %v3767 = vadd.f32 0.0, %v3766
        %3768 = vmatprep.mubr.bf16.mxu0 0
        %3769 = vmatmul.mubr.bf16.gmra.mxu0 %v3711
        %v3770 = vpop.f32.mrf.mxu0
        %v3771 = vadd.f32 0.0, %v3770
        %v3772 = vpop.f32.mrf.mxu0
        %v3773 = vadd.f32 0.0, %v3772
        %v3774 = vpop.f32.mrf.mxu0
        %v3775 = vadd.f32 0.0, %v3774
        %v3776 = vpop.f32.mrf.mxu0
        %v3777 = vadd.f32 0.0, %v3776
        %3778 = vmatprep.mubr.bf16.mxu0 0
        %3779 = vmatmul.mubr.bf16.gmra.mxu0 %v3714
        %v3780 = vpop.f32.mrf.mxu0
        %v3781 = vadd.f32 0.0, %v3780
        %v3782 = vpop.f32.mrf.mxu0
        %v3783 = vadd.f32 0.0, %v3782
        %v3784 = vpop.f32.mrf.mxu0
        %v3785 = vadd.f32 0.0, %v3784
        %v3786 = vpop.f32.mrf.mxu0
        %v3787 = vadd.f32 0.0, %v3786
        %3788 = vdwg.mxu0
        %v3789 = vmax.f32 %v3751, 0.0
        %v3790 = vmax.f32 %v3753, 0.0
        %v3791 = vmax.f32 %v3755, 0.0
        %v3792 = vmax.f32 %v3757, 0.0
        %v3793 = vmax.f32 %v3761, 0.0
        %v3794 = vmax.f32 %v3763, 0.0
        %v3795 = vmax.f32 %v3765, 0.0
        %v3796 = vmax.f32 %v3767, 0.0
        %v3797 = vmax.f32 %v3771, 0.0
        %v3798 = vmax.f32 %v3773, 0.0
        %v3799 = vmax.f32 %v3775, 0.0
        %v3800 = vmax.f32 %v3777, 0.0
        %v3801 = vmax.f32 %v3781, 0.0
        %v3802 = vmax.f32 %v3783, 0.0
        %v3803 = vmax.f32 %v3785, 0.0
        %v3804 = vmax.f32 %v3787, 0.0
        %v3805 = vpack.c.bf16 %v3791, %v3789
        %v3806 = vpack.c.bf16 %v3792, %v3790
        %v3807 = vpack.c.bf16 %v3795, %v3793
        %v3808 = vpack.c.bf16 %v3796, %v3794
        %v3809 = vpack.c.bf16 %v3799, %v3797
        %v3810 = vpack.c.bf16 %v3800, %v3798
        %v3811 = vpack.c.bf16 %v3803, %v3801
        %v3812 = vpack.c.bf16 %v3804, %v3802
        %v3813 = vmul.bf16 %v3805, %v3805
        %v3814 = vmul.bf16 %v3806, %v3806
        %v3815 = vmul.bf16 %v3807, %v3807
        %v3816 = vmul.bf16 %v3808, %v3808
        %v3817 = vmul.bf16 %v3809, %v3809
        %v3818 = vmul.bf16 %v3810, %v3810
        %v3819 = vmul.bf16 %v3811, %v3811
        %v3820 = vmul.bf16 %v3812, %v3812
        %v3821 = vld [vmem:[%s16] sm:$0xf]
        %v3822 = vld [vmem:[%s16 + $0x4] sm:$0xf]
        %v3823 = vld [vmem:[%s16 + $0x8] sm:$0xf]
        %v3824 = vld [vmem:[%s16 + $0xc] sm:$0xf]
        %v3825 = vld [vmem:[%s16 + $0x10] sm:$0xf]
        %v3826 = vld [vmem:[%s16 + $0x14] sm:$0xf]
        %v3827 = vld [vmem:[%s16 + $0x18] sm:$0xf]
        %v3828 = vld [vmem:[%s16 + $0x1c] sm:$0xf]
        %v3829 = vld [vmem:[%s16 + $0x20] sm:$0xf]
        %v3830 = vld [vmem:[%s16 + $0x24] sm:$0xf]
        %v3831 = vld [vmem:[%s16 + $0x28] sm:$0xf]
        %v3832 = vld [vmem:[%s16 + $0x2c] sm:$0xf]
        %v3833 = vld [vmem:[%s16 + $0x30] sm:$0xf]
        %v3834 = vld [vmem:[%s16 + $0x34] sm:$0xf]
        %v3835 = vld [vmem:[%s16 + $0x38] sm:$0xf]
        %v3836 = vld [vmem:[%s16 + $0x3c] sm:$0xf]
        %v3837 = vld [vmem:[%s16 + $0x40] sm:$0xf]
        %v3838 = vld [vmem:[%s16 + $0x44] sm:$0xf]
        %v3839 = vld [vmem:[%s16 + $0x48] sm:$0xf]
        %v3840 = vld [vmem:[%s16 + $0x4c] sm:$0xf]
        %v3841 = vld [vmem:[%s16 + $0x50] sm:$0xf]
        %v3842 = vld [vmem:[%s16 + $0x54] sm:$0xf]
        %v3843 = vld [vmem:[%s16 + $0x58] sm:$0xf]
        %v3844 = vld [vmem:[%s16 + $0x5c] sm:$0xf]
        %v3845 = vld [vmem:[%s16 + $0x60] sm:$0xf]
        %v3846 = vld [vmem:[%s16 + $0x64] sm:$0xf]
        %v3847 = vld [vmem:[%s16 + $0x68] sm:$0xf]
        %v3848 = vld [vmem:[%s16 + $0x6c] sm:$0xf]
        %v3849 = vld [vmem:[%s16 + $0x70] sm:$0xf]
        %v3850 = vld [vmem:[%s16 + $0x74] sm:$0xf]
        %v3851 = vld [vmem:[%s16 + $0x78] sm:$0xf]
        %v3852 = vld [vmem:[%s16 + $0x7c] sm:$0xf]
        %v3885 = vunpack.c.l.b16 %v3821
        %v3886 = vunpack.c.l.b16 %v3822
        %v3887 = vunpack.c.l.b16 %v3823
        %v3888 = vunpack.c.l.b16 %v3824
        %v3889 = vunpack.c.l.b16 %v3825
        %v3890 = vunpack.c.l.b16 %v3826
        %v3891 = vunpack.c.l.b16 %v3827
        %v3892 = vunpack.c.l.b16 %v3828
        %v3893 = vunpack.c.l.b16 %v3829
        %v3894 = vunpack.c.l.b16 %v3830
        %v3895 = vunpack.c.l.b16 %v3831
        %v3896 = vunpack.c.l.b16 %v3832
        %v3897 = vunpack.c.l.b16 %v3833
        %v3898 = vunpack.c.l.b16 %v3834
        %v3899 = vunpack.c.l.b16 %v3835
        %v3900 = vunpack.c.l.b16 %v3836
        %v3901 = vunpack.c.l.b16 %v3837
        %v3902 = vunpack.c.l.b16 %v3838
        %v3903 = vunpack.c.l.b16 %v3839
        %v3904 = vunpack.c.l.b16 %v3840
        %v3905 = vunpack.c.l.b16 %v3841
        %v3906 = vunpack.c.l.b16 %v3842
        %v3907 = vunpack.c.l.b16 %v3843
        %v3908 = vunpack.c.l.b16 %v3844
        %v3909 = vunpack.c.l.b16 %v3845
        %v3910 = vunpack.c.l.b16 %v3846
        %v3911 = vunpack.c.l.b16 %v3847
        %v3912 = vunpack.c.l.b16 %v3848
        %v3913 = vunpack.c.l.b16 %v3849
        %v3914 = vunpack.c.l.b16 %v3850
        %v3915 = vunpack.c.l.b16 %v3851
        %v3916 = vunpack.c.l.b16 %v3852
        %v3917 = vpack.c.b16 %v3886, %v3885
        %v3918 = vpack.c.b16 %v3888, %v3887
        %v3919 = vpack.c.b16 %v3890, %v3889
        %v3920 = vpack.c.b16 %v3892, %v3891
        %v3921 = vpack.c.b16 %v3894, %v3893
        %v3922 = vpack.c.b16 %v3896, %v3895
        %v3923 = vpack.c.b16 %v3898, %v3897
        %v3924 = vpack.c.b16 %v3900, %v3899
        %v3925 = vpack.c.b16 %v3902, %v3901
        %v3926 = vpack.c.b16 %v3904, %v3903
        %v3927 = vpack.c.b16 %v3906, %v3905
        %v3928 = vpack.c.b16 %v3908, %v3907
        %v3929 = vpack.c.b16 %v3910, %v3909
        %v3930 = vpack.c.b16 %v3912, %v3911
        %v3931 = vpack.c.b16 %v3914, %v3913
        %v3932 = vpack.c.b16 %v3916, %v3915
        %3949 = vmatprep.subr.bf16.mxu0 0
        %3950 = vmatpush1.bf16.msra.mxu0 %v3924
        %3951 = vmatprep.subr.bf16.mxu0 0
        %3952 = vmatpush1.bf16.msra.mxu0 %v3923
        %3953 = vmatprep.subr.bf16.mxu0 0
        %3954 = vmatpush1.bf16.msra.mxu0 %v3922
        %3955 = vmatprep.subr.bf16.mxu0 0
        %3956 = vmatpush1.bf16.msra.mxu0 %v3921
        %3957 = vmatprep.subr.bf16.mxu0 0
        %3958 = vmatpush1.bf16.msra.mxu0 %v3920
        %3959 = vmatprep.subr.bf16.mxu0 0
        %3960 = vmatpush1.bf16.msra.mxu0 %v3919
        %3961 = vmatprep.subr.bf16.mxu0 0
        %3962 = vmatpush1.bf16.msra.mxu0 %v3918
        %3963 = vmatprep.subr.bf16.mxu0 0
        %3964 = vmatpush1.bf16.msra.mxu0 %v3917
        %3965 = vmatprep.subr.bf16.mxu0 0
        %3966 = vmatpush2.bf16.msra.mxu0 %v3932
        %3967 = vmatprep.subr.bf16.mxu0 0
        %3968 = vmatpush2.bf16.msra.mxu0 %v3931
        %3969 = vmatprep.subr.bf16.mxu0 0
        %3970 = vmatpush2.bf16.msra.mxu0 %v3930
        %3971 = vmatprep.subr.bf16.mxu0 0
        %3972 = vmatpush2.bf16.msra.mxu0 %v3929
        %3973 = vmatprep.subr.bf16.mxu0 0
        %3974 = vmatpush2.bf16.msra.mxu0 %v3928
        %3975 = vmatprep.subr.bf16.mxu0 0
        %3976 = vmatpush2.bf16.msra.mxu0 %v3927
        %3977 = vmatprep.subr.bf16.mxu0 0
        %3978 = vmatpush2.bf16.msra.mxu0 %v3926
        %3979 = vmatprep.subr.bf16.mxu0 0
        %3980 = vmatpush2.bf16.msra.mxu0 %v3925
        %3981 = vmatprep.mubr.bf16.mxu0 %v3814
        %3982 = vmatmul.mubr.bf16.gmra.mxu0 %v3813
        %v3983 = vpop.f32.mrf.mxu0
        %v3984 = vadd.f32 0.0, %v3983
        %v3985 = vpop.f32.mrf.mxu0
        %v3986 = vpop.f32.mrf.mxu0
        %v3987 = vadd.f32 0.0, %v3986
        %v3988 = vpop.f32.mrf.mxu0
        %3989 = vmatprep.mubr.bf16.mxu0 %v3816
        %3990 = vmatmul.mubr.bf16.gmra.mxu0 %v3815
        %v3991 = vpop.f32.mrf.mxu0
        %v3992 = vadd.f32 0.0, %v3991
        %v3993 = vpop.f32.mrf.mxu0
        %v3994 = vpop.f32.mrf.mxu0
        %v3995 = vadd.f32 0.0, %v3994
        %v3996 = vpop.f32.mrf.mxu0
        %3997 = vmatprep.mubr.bf16.mxu0 %v3818
        %3998 = vmatmul.mubr.bf16.gmra.mxu0 %v3817
        %v3999 = vpop.f32.mrf.mxu0
        %v4000 = vadd.f32 0.0, %v3999
        %v4001 = vpop.f32.mrf.mxu0
        %v4002 = vpop.f32.mrf.mxu0
        %v4003 = vadd.f32 0.0, %v4002
        %v4004 = vpop.f32.mrf.mxu0
        %4005 = vmatprep.mubr.bf16.mxu0 %v3820
        %4006 = vmatmul.mubr.bf16.gmra.mxu0 %v3819
        %v4007 = vpop.f32.mrf.mxu0
        %v4008 = vadd.f32 0.0, %v4007
        %v4009 = vpop.f32.mrf.mxu0
        %v4010 = vpop.f32.mrf.mxu0
        %v4011 = vadd.f32 0.0, %v4010
        %v4012 = vpop.f32.mrf.mxu0
        %4013 = vdwg.mxu0
        %v4014 = vadd.f32 %v3580, %v3984
        %v4015 = vadd.f32 %v3581, %v3987
        %v4016 = vadd.f32 %v3582, %v3992
        %v4017 = vadd.f32 %v3583, %v3995
        %v4018 = vadd.f32 %v3584, %v4000
        %v4019 = vadd.f32 %v3585, %v4003
        %v4020 = vadd.f32 %v3586, %v4008
        %v4021 = vadd.f32 %v3587, %v4011
        %4022 = vst.msk [vmem:[%s665] sm:$0xff] %vm770, %v4014
        %4023 = vst.msk [vmem:[%s665 + $0x8] sm:$0xff] %vm770, %v4015
        %4024 = vst.msk [vmem:[%s665 + $0x10] sm:$0xff] %vm770, %v4016
        %4025 = vst.msk [vmem:[%s665 + $0x18] sm:$0xff] %vm770, %v4017
        %4026 = vst.msk [vmem:[%s665 + $0x20] sm:$0xff] %vm770, %v4018
        %4027 = vst.msk [vmem:[%s665 + $0x28] sm:$0xff] %vm770, %v4019
        %4028 = vst.msk [vmem:[%s665 + $0x30] sm:$0xff] %vm770, %v4020
        %4029 = vst.msk [vmem:[%s665 + $0x38] sm:$0xff] %vm770, %v4021
        %s4030 = smul.u32 8, %s30
        %p4031 = scmp.lt.s32.totalorder %s4030, 15
        %s4032 = scalar_select %p4031, %s4030, 15
        %s4033 = smul.addr %s4032, 8
        %s4034 = scalar_lea.vmem %s17, %s4033
        // Predicated region
        $region97: #{block_forward.1} parent=87 // pred_check
          %p4035 = pneg %p430
        $region98: #{block_forward.1} parent=87 // pred_check_branch
          %4037 = sbr.rel (%p4035) target = $region100
        $region99: #{block_forward.1} parent=87 // pred_region
          %s4038 = smul.u32 8, %s30
        $region100: #{block_forward.1} parent=87 // pred_fallthru
          _
      $region88: #{block_forward.1} parent=5 // pred_fallthru
        _
      %p4039 = scmp.le.s32.totalorder 2, %s25
      // Predicated region
      $region101: #{block_forward.1} parent=5 // pred_check
        %p4040 = pneg %p4039
      $region102: #{block_forward.1} parent=5 // pred_check_branch
        %4042 = sbr.rel (%p4040) target = $region104
      $region103: #{block_forward.1} parent=5 // pred_region
        %s4043 = ssub.s32 %s25, 2
        // Predicated region
        $region105: #{block_forward.1} parent=103 // pred_check
          %p4044 = pneg %p436
        $region106: #{block_forward.1} parent=103 // pred_check_branch
          %4046 = sbr.rel (%p4044) target = $region108
        $region107: #{block_forward.1} parent=103 // pred_region
          %s4047 = smul.u32 8, %s31
          %p4048 = scmp.lt.s32.totalorder %s4047, 15
          %s4049 = scalar_select %p4048, %s4047, 15
          %s4050 = smul.addr %s4049, 8
          %s4051 = scalar_lea.vmem %s17, %s4050
        $region108: #{block_forward.1} parent=103 // pred_fallthru
          _
      $region104: #{block_forward.1} parent=5 // pred_fallthru
        _
    $region6: #{block_forward.1} parent=1 // loop_footer
      %s29 = sadd.s32 1, %s25
    $region7: #{block_forward.1} parent=1 // loop_footer_branch
      %24 = sbr.rel target = $region3
    $region8: #{block_forward.1} parent=1 // loop_exit
      _
    %4052 = vsyncpa [#allocation6], 1
    %s4053 = scalar_lea.sflag [#allocation6], 1
    %4054 = vsyncpa %s4053, 1
    %4055 = vsyncpa [#allocation8], 1

</llo_original>
